<compile_context>
chip_gen: v7x
topology: tpu7x:2x2x1
jax: 0.10.0
libtpu: 0.0.40
codegen_flags: <defaults>
</compile_context>

<pallas_src>
import functools
import math

import numpy as np

import jax
import jax.numpy as jnp
from jax import lax
from jax.experimental import pallas as pl
from jax.experimental.pallas import tpu as pltpu

C1 = 16    # encoder conv1 output channels
C2 = 32    # encoder conv2 output channels (bottleneck channels)
C1D = 16   # decoder deconv1 output channels
K = 3      # all (transposed) convs are 3x3


# ---------------------------------------------------------------------------
# Fused forward kernel: one grid step == one batch sample.
# ---------------------------------------------------------------------------
def _cae_kernel(x_ref, wb1_ref, b1s_ref, wb2_ref, b2s_ref,
                wfe_ref, bfe_ref, wfd_ref, bfd_ref,
                wd1_ref, bd1s_ref, wd2_ref, bd2s_ref,
                rec_ref, enc_ref, zs_ref, *, H, W):
    f32 = jnp.float32
    H1, W1 = H // 2, W // 2          # after pool1
    oh, ow = H1 // 2, W1 // 2        # after pool2
    rb = ow * C2                     # flattened-bottleneck row block (lane) width

    def mm(a, b):
        return jnp.dot(a, b, preferred_element_type=f32)

    def sel(nr, nc, fn):
        # Tiny 0/1 selection / shift / interleave matrices (built with 2-D iota and
        # consumed by the MXU) -- avoids strided vector slices and relayouts.
        r = lax.broadcasted_iota(jnp.int32, (nr, nc), 0)
        c = lax.broadcasted_iota(jnp.int32, (nr, nc), 1)
        return jnp.where(fn(r, c), 1.0, 0.0)

    # ---------------- encoder ----------------
    xp = x_ref[0]                                             # (H+2, W+2) zero-padded input
    # conv1: 3 banded matmuls (one per vertical tap); horizontal taps, padding and
    # the even/odd-x split for the 2x2 pool are folded into wb1.
    t = mm(xp[0:H, :], wb1_ref[0])
    t = t + mm(xp[1:H + 1, :], wb1_ref[1])
    t = t + mm(xp[2:H + 2, :], wb1_ref[2])                    # (H, 2*W1*C1)
    hmax = jnp.maximum(t[:, :W1 * C1], t[:, W1 * C1:])        # horizontal 2-max
    se = sel(H1, H, lambda r, c: c == 2 * r)
    so = sel(H1, H, lambda r, c: c == 2 * r + 1)
    p1 = jnp.maximum(mm(se, hmax), mm(so, hmax))              # vertical 2-max  (H1, W1*C1)
    p1 = jnp.maximum(p1 + b1s_ref[...], 0.0)                  # bias + ReLU (commute w/ max)

    # conv2: banded matmuls; vertical taps applied with shift matrices (padding folded).
    u0, u1, u2 = mm(p1, wb2_ref[0]), mm(p1, wb2_ref[1]), mm(p1, wb2_ref[2])
    dn = sel(H1, H1, lambda r, c: r == c + 1)                 # row y <- y-1 (zero row 0)
    up = sel(H1, H1, lambda r, c: c == r + 1)                 # row y <- y+1 (zero last)
    t2 = mm(dn, u0) + u1 + mm(up, u2)                         # (H1, 2*ow*C2)
    hmax2 = jnp.maximum(t2[:, :ow * C2], t2[:, ow * C2:])
    se2 = sel(oh, H1, lambda r, c: c == 2 * r)
    so2 = sel(oh, H1, lambda r, c: c == 2 * r + 1)
    p2 = jnp.maximum(mm(se2, hmax2), mm(so2, hmax2))          # (oh, ow*C2)
    p2 = jnp.maximum(p2 + b2s_ref[...], 0.0)

    # encoder FC (NCHW-flatten permutation folded into wfe at init time).
    enc = bfe_ref[...]                                        # (1, latent)
    for y in range(oh):
        enc = enc + mm(p2[y:y + 1, :], wfe_ref[y * rb:(y + 1) * rb, :])
    enc_ref[0] = enc

    # ---------------- decoder ----------------
    zfull = mm(enc, wfd_ref[...]) + bfd_ref[...]              # (1, flat), slab (y,x,c) order
    zs_ref[oh:oh + 1, :] = jnp.zeros((1, rb), f32)            # zero row for out-of-range tap
    for y in range(oh):
        zs_ref[y:y + 1, :] = zfull[:, y * rb:(y + 1) * rb]
    z = zs_ref[0:oh, :]                                       # (oh, ow*C2)
    ztop = zs_ref[1:oh + 1, :]                                # rows shifted up by one

    # deconv1: sub-pixel phase decomposition (even / odd output rows), no zero-stuffing.
    d1e = jnp.maximum(mm(z, wd1_ref[0]) + bd1s_ref[...], 0.0)
    d1o = jnp.maximum(mm(ztop, wd1_ref[1]) + mm(z, wd1_ref[2]) + bd1s_ref[...], 0.0)
    pe = sel(H1, oh, lambda r, c: r == 2 * c)
    po = sel(H1, oh, lambda r, c: r == 2 * c + 1)
    d1 = mm(pe, d1e) + mm(po, d1o)                            # interleave -> (H1, W1*C1D)
    d1top = mm(sel(H1, H1, lambda r, c: c == r + 1), d1)      # rows shifted up by one

    # deconv2 (final layer: no activation).
    d2e = mm(d1, wd2_ref[0]) + bd2s_ref[...]                  # even output rows (H1, W)
    d2o = mm(d1top, wd2_ref[1]) + mm(d1, wd2_ref[2]) + bd2s_ref[...]
    pe2 = sel(H, H1, lambda r, c: r == 2 * c)
    po2 = sel(H, H1, lambda r, c: r == 2 * c + 1)
    rec_ref[0] = mm(pe2, d2e) + mm(po2, d2o)                  # (H, W)


# ---------------------------------------------------------------------------
# Parameter generation + packing into kernel layout.
# ---------------------------------------------------------------------------
def _pack_params(raw, input_shape, latent_dim):
    H, W = input_shape
    H1, W1 = H // 2, W // 2
    oh, ow = H1 // 2, W1 // 2
    flat = C2 * oh * ow

    w1, b1 = raw["w1"], raw["b1"]
    w2, b2 = raw["w2"], raw["b2"]
    wt1, bt1 = raw["wt1"], raw["bt1"]
    wt2, bt2 = raw["wt2"], raw["bt2"]

    # conv1: banded matrices over the zero-padded (W+2)-wide, 1-channel input rows.
    # Output columns [0 : W1*C1) = even x, [W1*C1 : 2*W1*C1) = odd x.
    wb1 = np.zeros((K, W + 2, 2 * W1 * C1), np.float32)
    for ky in range(K):
        for kx in range(K):
            for u in range(W1):
                wb1[ky, 2 * u + kx, u * C1:(u + 1) * C1] += w1[:, 0, ky, kx]
                wb1[ky, 2 * u + 1 + kx,
                    W1 * C1 + u * C1:W1 * C1 + (u + 1) * C1] += w1[:, 0, ky, kx]

    # conv2: banded matrices over the unpadded (W1*C1)-wide pooled rows
    # (zero padding folded in by dropping out-of-range taps).
    wb2 = np.zeros((K, W1 * C1, 2 * ow * C2), np.float32)
    for ky in range(K):
        for kx in range(K):
            for u in range(ow):
                xe = 2 * u + kx - 1
                if 0 <= xe < W1:
                    wb2[ky, xe * C1:(xe + 1) * C1,
                        u * C2:(u + 1) * C2] += w2[:, :, ky, kx].T
                xo = 2 * u + kx
                if 0 <= xo < W1:
                    wb2[ky, xo * C1:(xo + 1) * C1,
                        ow * C2 + u * C2:ow * C2 + (u + 1) * C2] += w2[:, :, ky, kx].T

    # deconvs (sub-pixel phase decomposition).  Index 0 -> vertical tap ky=1 (even
    # output rows), 1 -> ky=0 (odd rows, input row m+1), 2 -> ky=2 (odd rows, row m).
    def deconv_banded(wt, cin, cout, w_in, w_out):
        m = np.zeros((3, w_in * cin, w_out * cout), np.float32)
        for j, ky in enumerate((1, 0, 2)):
            for kx in range(K):
                for ix in range(w_in):
                    ox = 2 * ix + kx - 1
                    if 0 <= ox < w_out:
                        m[j, ix * cin:(ix + 1) * cin,
                          ox * cout:(ox + 1) * cout] += wt[:, :, ky, kx]
        return m

    wd1 = deconv_banded(wt1, C2, C1D, ow, W1)
    wd2 = deconv_banded(wt2, C1D, 1, W1, W)

    # FC weights with the PyTorch NCHW flatten / unflatten permutation folded in
    # (our bottleneck slab order is (y, x, c)).
    wfe = raw["wfe"].reshape(latent_dim, C2, oh, ow).transpose(2, 3, 1, 0).reshape(flat, latent_dim)
    wfd = raw["wfd"].reshape(C2, oh, ow, latent_dim).transpose(3, 1, 2, 0).reshape(latent_dim, flat)
    bfd = raw["bfd"].reshape(C2, oh, ow).transpose(1, 2, 0).reshape(flat)

    as32 = lambda a: jnp.asarray(np.asarray(a, np.float32))
    return {
        "wb1": as32(wb1), "b1s": as32(np.tile(b1, W1)[None, :]),
        "wb2": as32(wb2), "b2s": as32(np.tile(b2, ow)[None, :]),
        "wfe": as32(wfe), "bfe": as32(raw["bfe"][None, :]),
        "wfd": as32(wfd), "bfd": as32(bfd[None, :]),
        "wd1": as32(wd1), "bd1s": as32(np.tile(bt1, W1)[None, :]),
        "wd2": as32(wd2), "bd2s": as32(np.tile(bt2, W)[None, :]),
    }


def init_params(key, input_shape=(16, 16), latent_dim=256):
    """Deterministic synthetic params.  Returns (raw PyTorch-shaped, packed kernel-layout)."""
    H, W = input_shape
    assert H % 4 == 0 and W % 4 == 0, "kernel assumes exact 2x2 pools"
    # TODO(synk): MaxPool2d ceil_mode extra-window path for odd H/W is not implemented.
    flat = C2 * (H // 4) * (W // 4)

    ks = jax.random.split(key, 12)

    def nrm(k, shape, fan_in):
        return np.asarray(jax.random.normal(k, shape, jnp.float32)) / math.sqrt(fan_in)

    raw = {
        "w1": nrm(ks[0], (C1, 1, K, K), 9),           # Conv2d(1, 16, 3, padding=1)
        "b1": nrm(ks[1], (C1,), 9),
        "w2": nrm(ks[2], (C2, C1, K, K), 9 * C1),     # Conv2d(16, 32, 3, padding=1)
        "b2": nrm(ks[3], (C2,), 9 * C1),
        "wfe": nrm(ks[4], (latent_dim, flat), flat),  # Linear(flat, latent)
        "bfe": nrm(ks[5], (latent_dim,), flat),
        "wfd": nrm(ks[6], (flat, latent_dim), latent_dim),  # Linear(latent, flat)
        "bfd": nrm(ks[7], (flat,), latent_dim),
        "wt1": nrm(ks[8], (C2, C1D, K, K), 9 * C2),   # ConvTranspose2d(32,16,3,s=2,p=1,op=1)
        "bt1": nrm(ks[9], (C1D,), 9 * C2),
        "wt2": nrm(ks[10], (C1D, 1, K, K), 9 * C1D),  # ConvTranspose2d(16,1,3,s=2,p=1,op=1)
        "bt2": nrm(ks[11], (1,), 9 * C1D),
    }
    return raw, _pack_params(raw, input_shape, latent_dim)


# ---------------------------------------------------------------------------
# Forward wrapper (single pallas_call; XLA only does the trivial pad / reshape tail).
# ---------------------------------------------------------------------------
def make_cae_forward(input_shape=(16, 16), latent_dim=256):
    H, W = input_shape
    assert H % 4 == 0 and W % 4 == 0
    H1, W1 = H // 2, W // 2
    oh, ow = H1 // 2, W1 // 2

    kernel = functools.partial(_cae_kernel, H=H, W=W)

    def full_spec(a):
        zeros = (0,) * a.ndim
        return pl.BlockSpec(a.shape, lambda b: zeros)

    def fwd(x_nchw, params):
        B = x_nchw.shape[0]
        # NCHW (Cin=1) -> per-sample zero-padded (H+2, W+2) slab.
        xpad = jnp.pad(x_nchw[:, 0, :, :], ((0, 0), (1, 1), (1, 1)))

        grid_spec = pltpu.PrefetchScalarGridSpec(
            num_scalar_prefetch=0,
            grid=(B,),
            in_specs=[
                pl.BlockSpec((1, H + 2, W + 2), lambda b: (b, 0, 0)),
                full_spec(params["wb1"]), full_spec(params["b1s"]),
                full_spec(params["wb2"]), full_spec(params["b2s"]),
                full_spec(params["wfe"]), full_spec(params["bfe"]),
                full_spec(params["wfd"]), full_spec(params["bfd"]),
                full_spec(params["wd1"]), full_spec(params["bd1s"]),
                full_spec(params["wd2"]), full_spec(params["bd2s"]),
            ],
            out_specs=[
                pl.BlockSpec((1, H, W), lambda b: (b, 0, 0)),
                pl.BlockSpec((1, 1, latent_dim), lambda b: (b, 0, 0)),
            ],
            scratch_shapes=[pltpu.VMEM((oh + 1, ow * C2), jnp.float32)],
        )
        rec, enc = pl.pallas_call(
            kernel,
            out_shape=(jax.ShapeDtypeStruct((B, H, W), jnp.float32),
                       jax.ShapeDtypeStruct((B, 1, latent_dim), jnp.float32)),
            grid_spec=grid_spec,
            compiler_params=pltpu.CompilerParams(
                dimension_semantics=("parallel",)),   # v7x: one sample per TensorCore
        )(xpad, params["wb1"], params["b1s"], params["wb2"], params["b2s"],
          params["wfe"], params["bfe"], params["wfd"], params["bfd"],
          params["wd1"], params["bd1s"], params["wd2"], params["bd2s"])

        recon = rec[:, None, :, :]
        encoded = enc[:, 0, :]
        # PyTorch tail: crop / zero-pad to the requested input shape (no-op here).
        th, tw = input_shape
        h_out, w_out = recon.shape[2], recon.shape[3]
        if h_out > th or w_out > tw:
            recon = recon[:, :, :th, :tw]
        elif h_out < th or w_out < tw:
            recon = jnp.pad(recon, ((0, 0), (0, 0), (0, th - h_out), (0, tw - w_out)))
        return recon, encoded

    return jax.jit(fwd)


# ---------------------------------------------------------------------------
# Pure-JAX (XLA) reference implementation of CAE.forward, for the self-check.
# ---------------------------------------------------------------------------
def cae_reference(x_nchw, raw, input_shape):
    H, W = input_shape
    B = x_nchw.shape[0]
    hp = lax.Precision.HIGHEST

    def conv(x, w, b):
        y = lax.conv_general_dilated(
            x, jnp.asarray(w), (1, 1), ((1, 1), (1, 1)),
            dimension_numbers=("NCHW", "OIHW", "NCHW"), precision=hp)
        return y + jnp.asarray(b).reshape(1, -1, 1, 1)

    def pool(x):  # MaxPool2d(2, ceil_mode=True); exact for even spatial dims
        return lax.reduce_window(x, -jnp.inf, lax.max,
                                 (1, 1, 2, 2), (1, 1, 2, 2), "VALID")

    def deconv(x, wt, b):  # ConvTranspose2d(k=3, s=2, p=1, output_padding=1)
        w = jnp.flip(jnp.asarray(wt), (2, 3)).transpose(1, 0, 2, 3)
        y = lax.conv_general_dilated(
            x, w, (1, 1), ((1, 2), (1, 2)), lhs_dilation=(2, 2),
            dimension_numbers=("NCHW", "OIHW", "NCHW"), precision=hp)
        return y + jnp.asarray(b).reshape(1, -1, 1, 1)

    h = jax.nn.relu(conv(x_nchw, raw["w1"], raw["b1"]))
    h = pool(h)
    h = jax.nn.relu(conv(h, raw["w2"], raw["b2"]))
    h = pool(h)
    hf = h.reshape(B, -1)                                   # NCHW flatten (C, H, W) order
    enc = jnp.dot(hf, jnp.asarray(raw["wfe"]).T, precision=hp) + jnp.asarray(raw["bfe"])
    z = jnp.dot(enc, jnp.asarray(raw["wfd"]).T, precision=hp) + jnp.asarray(raw["bfd"])
    z = z.reshape(B, C2, H // 4, W // 4)
    d = jax.nn.relu(deconv(z, raw["wt1"], raw["bt1"]))
    d = deconv(d, raw["wt2"], raw["bt2"])
    return d, enc


if __name__ == "__main__":
    INPUT_SHAPE = (16, 16)
    LATENT = 256
    B = 2

    x = jax.random.normal(jax.random.PRNGKey(0), (B, 1, *INPUT_SHAPE), jnp.float32)
    raw, params = init_params(jax.random.PRNGKey(42), INPUT_SHAPE, LATENT)

    fwd = make_cae_forward(INPUT_SHAPE, LATENT)
    recon, encoded = fwd(x, params)
    jax.block_until_ready((recon, encoded))

    assert recon.shape == (B, 1, *INPUT_SHAPE), recon.shape
    assert encoded.shape == (B, LATENT), encoded.shape
    assert bool(jnp.all(jnp.isfinite(recon))) and bool(jnp.all(jnp.isfinite(encoded)))

    # Full-forward reference comparison (covers conv taps, pooling, flatten order,
    # transposed-conv phase decomposition and the FC permutation folding).
    rec_ref, enc_ref = cae_reference(x, raw, INPUT_SHAPE)
    enc_err = float(jnp.max(jnp.abs(encoded - enc_ref)))
    rec_err = float(jnp.max(jnp.abs(recon - rec_ref)))
    assert enc_err < 3e-2, f"encoded mismatch: max|diff|={enc_err}"
    assert rec_err < 3e-2, f"recon mismatch: max|diff|={rec_err}"

    print("KERNEL_OK")
</pallas_src>

<mosaic_0001>
module attributes {stable_mosaic.version = 11 : i64} {
  func.func @_cae_kernel(%arg0: i32, %arg1: memref<1x18x18xf32, #tpu.memory_space<vmem>>, %arg2: memref<3x18x256xf32, #tpu.memory_space<vmem>>, %arg3: memref<1x128xf32, #tpu.memory_space<vmem>>, %arg4: memref<3x128x256xf32, #tpu.memory_space<vmem>>, %arg5: memref<1x128xf32, #tpu.memory_space<vmem>>, %arg6: memref<512x256xf32, #tpu.memory_space<vmem>>, %arg7: memref<1x256xf32, #tpu.memory_space<vmem>>, %arg8: memref<256x512xf32, #tpu.memory_space<vmem>>, %arg9: memref<1x512xf32, #tpu.memory_space<vmem>>, %arg10: memref<3x128x128xf32, #tpu.memory_space<vmem>>, %arg11: memref<1x128xf32, #tpu.memory_space<vmem>>, %arg12: memref<3x128x16xf32, #tpu.memory_space<vmem>>, %arg13: memref<1x16xf32, #tpu.memory_space<vmem>>, %arg14: memref<1x16x16xf32, #tpu.memory_space<vmem>>, %arg15: memref<1x1x256xf32, #tpu.memory_space<vmem>>, %arg16: memref<5x128xf32, #tpu.memory_space<vmem>>) attributes {dimension_semantics = [#tpu.dimension_semantics<parallel>], iteration_bounds = array<i64: 2>, scalar_prefetch = 0 : i64, scratch_operands = 1 : i64, tpu.core_type = #tpu.core_type<tc>, window_params = [{transform_indices = @transform_0, window_bounds = array<i64: 1, 18, 18>}, {pipeline_mode = #tpu.pipeline_mode<synchronous>, transform_indices = @transform_1, window_bounds = array<i64: 3, 18, 256>}, {pipeline_mode = #tpu.pipeline_mode<synchronous>, transform_indices = @transform_2, window_bounds = array<i64: 1, 128>}, {pipeline_mode = #tpu.pipeline_mode<synchronous>, transform_indices = @transform_3, window_bounds = array<i64: 3, 128, 256>}, {pipeline_mode = #tpu.pipeline_mode<synchronous>, transform_indices = @transform_4, window_bounds = array<i64: 1, 128>}, {pipeline_mode = #tpu.pipeline_mode<synchronous>, transform_indices = @transform_5, window_bounds = array<i64: 512, 256>}, {pipeline_mode = #tpu.pipeline_mode<synchronous>, transform_indices = @transform_6, window_bounds = array<i64: 1, 256>}, {pipeline_mode = #tpu.pipeline_mode<synchronous>, transform_indices = @transform_7, window_bounds = array<i64: 256, 512>}, {pipeline_mode = #tpu.pipeline_mode<synchronous>, transform_indices = @transform_8, window_bounds = array<i64: 1, 512>}, {pipeline_mode = #tpu.pipeline_mode<synchronous>, transform_indices = @transform_9, window_bounds = array<i64: 3, 128, 128>}, {pipeline_mode = #tpu.pipeline_mode<synchronous>, transform_indices = @transform_10, window_bounds = array<i64: 1, 128>}, {pipeline_mode = #tpu.pipeline_mode<synchronous>, transform_indices = @transform_11, window_bounds = array<i64: 3, 128, 16>}, {pipeline_mode = #tpu.pipeline_mode<synchronous>, transform_indices = @transform_12, window_bounds = array<i64: 1, 16>}, {transform_indices = @transform_13, window_bounds = array<i64: 1, 16, 16>}, {transform_indices = @transform_14, window_bounds = array<i64: 1, 1, 256>}]} {
    %c0 = arith.constant 0 : index
    %c0_0 = arith.constant 0 : index
    %c0_1 = arith.constant 0 : index
    %0 = vector.load %arg1[%c0, %c0_0, %c0_1] : memref<1x18x18xf32, #tpu.memory_space<vmem>>, vector<1x18x18xf32>
    %1 = vector.shape_cast %0 : vector<1x18x18xf32> to vector<18x18xf32>
    %2 = vector.extract_strided_slice %1 {offsets = [0, 0], sizes = [16, 18], strides = [1, 1]} : vector<18x18xf32> to vector<16x18xf32>
    %c0_2 = arith.constant 0 : index
    %c0_3 = arith.constant 0 : index
    %c0_4 = arith.constant 0 : index
    %3 = vector.load %arg2[%c0_2, %c0_3, %c0_4] : memref<3x18x256xf32, #tpu.memory_space<vmem>>, vector<1x18x256xf32>
    %4 = vector.shape_cast %3 : vector<1x18x256xf32> to vector<18x256xf32>
    %cst = arith.constant dense<0.000000e+00> : vector<16x256xf32>
    %5 = tpu.matmul %2, %4, %cst {dimension_numbers = #tpu.dot_dimension_numbers<[1], [0], [0], [1], [0, 0, 1, 1], [], []>} : vector<16x18xf32>, vector<18x256xf32>, vector<16x256xf32> -> vector<16x256xf32>
    %6 = vector.extract_strided_slice %1 {offsets = [1, 0], sizes = [16, 18], strides = [1, 1]} : vector<18x18xf32> to vector<16x18xf32>
    %c1 = arith.constant 1 : index
    %c0_5 = arith.constant 0 : index
    %c0_6 = arith.constant 0 : index
    %7 = vector.load %arg2[%c1, %c0_5, %c0_6] : memref<3x18x256xf32, #tpu.memory_space<vmem>>, vector<1x18x256xf32>
    %8 = vector.shape_cast %7 : vector<1x18x256xf32> to vector<18x256xf32>
    %cst_7 = arith.constant dense<0.000000e+00> : vector<16x256xf32>
    %9 = tpu.matmul %6, %8, %cst_7 {dimension_numbers = #tpu.dot_dimension_numbers<[1], [0], [0], [1], [0, 0, 1, 1], [], []>} : vector<16x18xf32>, vector<18x256xf32>, vector<16x256xf32> -> vector<16x256xf32>
    %10 = arith.addf %5, %9 : vector<16x256xf32>
    %11 = vector.extract_strided_slice %1 {offsets = [2, 0], sizes = [16, 18], strides = [1, 1]} : vector<18x18xf32> to vector<16x18xf32>
    %c2 = arith.constant 2 : index
    %c0_8 = arith.constant 0 : index
    %c0_9 = arith.constant 0 : index
    %12 = vector.load %arg2[%c2, %c0_8, %c0_9] : memref<3x18x256xf32, #tpu.memory_space<vmem>>, vector<1x18x256xf32>
    %13 = vector.shape_cast %12 : vector<1x18x256xf32> to vector<18x256xf32>
    %cst_10 = arith.constant dense<0.000000e+00> : vector<16x256xf32>
    %14 = tpu.matmul %11, %13, %cst_10 {dimension_numbers = #tpu.dot_dimension_numbers<[1], [0], [0], [1], [0, 0, 1, 1], [], []>} : vector<16x18xf32>, vector<18x256xf32>, vector<16x256xf32> -> vector<16x256xf32>
    %15 = arith.addf %10, %14 : vector<16x256xf32>
    %16 = vector.extract_strided_slice %15 {offsets = [0, 0], sizes = [16, 128], strides = [1, 1]} : vector<16x256xf32> to vector<16x128xf32>
    %17 = vector.extract_strided_slice %15 {offsets = [0, 128], sizes = [16, 128], strides = [1, 1]} : vector<16x256xf32> to vector<16x128xf32>
    %18 = arith.maximumf %16, %17 : vector<16x128xf32>
    %19 = tpu.iota {dimensions = array<i32: 0>} : vector<8x16xi32>
    %20 = tpu.iota {dimensions = array<i32: 1>} : vector<8x16xi32>
    %c2_i32 = arith.constant 2 : i32
    %21 = vector.broadcast %c2_i32 : i32 to vector<8x16xi32>
    %22 = arith.muli %21, %19 : vector<8x16xi32>
    %23 = arith.cmpi eq, %20, %22 : vector<8x16xi32>
    %cst_11 = arith.constant 1.000000e+00 : f32
    %cst_12 = arith.constant 0.000000e+00 : f32
    %24 = vector.broadcast %cst_11 : f32 to vector<8x16xf32>
    %25 = vector.broadcast %cst_12 : f32 to vector<8x16xf32>
    %26 = arith.select %23, %24, %25 : vector<8x16xi1>, vector<8x16xf32>
    %27 = tpu.iota {dimensions = array<i32: 0>} : vector<8x16xi32>
    %28 = tpu.iota {dimensions = array<i32: 1>} : vector<8x16xi32>
    %c2_i32_13 = arith.constant 2 : i32
    %29 = vector.broadcast %c2_i32_13 : i32 to vector<8x16xi32>
    %30 = arith.muli %29, %27 : vector<8x16xi32>
    %c1_i32 = arith.constant 1 : i32
    %31 = vector.broadcast %c1_i32 : i32 to vector<8x16xi32>
    %32 = arith.addi %30, %31 : vector<8x16xi32>
    %33 = arith.cmpi eq, %28, %32 : vector<8x16xi32>
    %cst_14 = arith.constant 1.000000e+00 : f32
    %cst_15 = arith.constant 0.000000e+00 : f32
    %34 = vector.broadcast %cst_14 : f32 to vector<8x16xf32>
    %35 = vector.broadcast %cst_15 : f32 to vector<8x16xf32>
    %36 = arith.select %33, %34, %35 : vector<8x16xi1>, vector<8x16xf32>
    %cst_16 = arith.constant dense<0.000000e+00> : vector<8x128xf32>
    %37 = tpu.matmul %26, %18, %cst_16 {dimension_numbers = #tpu.dot_dimension_numbers<[1], [0], [0], [1], [0, 0, 1, 1], [], []>} : vector<8x16xf32>, vector<16x128xf32>, vector<8x128xf32> -> vector<8x128xf32>
    %cst_17 = arith.constant dense<0.000000e+00> : vector<8x128xf32>
    %38 = tpu.matmul %36, %18, %cst_17 {dimension_numbers = #tpu.dot_dimension_numbers<[1], [0], [0], [1], [0, 0, 1, 1], [], []>} : vector<8x16xf32>, vector<16x128xf32>, vector<8x128xf32> -> vector<8x128xf32>
    %39 = arith.maximumf %37, %38 : vector<8x128xf32>
    %c0_18 = arith.constant 0 : index
    %c0_19 = arith.constant 0 : index
    %40 = vector.load %arg3[%c0_18, %c0_19] : memref<1x128xf32, #tpu.memory_space<vmem>>, vector<1x128xf32>
    %41 = vector.broadcast %40 : vector<1x128xf32> to vector<8x128xf32>
    %42 = arith.addf %39, %41 : vector<8x128xf32>
    %cst_20 = arith.constant 0.000000e+00 : f32
    %43 = vector.broadcast %cst_20 : f32 to vector<8x128xf32>
    %44 = arith.maximumf %42, %43 : vector<8x128xf32>
    %c0_21 = arith.constant 0 : index
    %c0_22 = arith.constant 0 : index
    %c0_23 = arith.constant 0 : index
    %45 = vector.load %arg4[%c0_21, %c0_22, %c0_23] : memref<3x128x256xf32, #tpu.memory_space<vmem>>, vector<1x128x256xf32>
    %46 = vector.shape_cast %45 : vector<1x128x256xf32> to vector<128x256xf32>
    %cst_24 = arith.constant dense<0.000000e+00> : vector<8x256xf32>
    %47 = tpu.matmul %44, %46, %cst_24 {dimension_numbers = #tpu.dot_dimension_numbers<[1], [0], [0], [1], [0, 0, 1, 1], [], []>} : vector<8x128xf32>, vector<128x256xf32>, vector<8x256xf32> -> vector<8x256xf32>
    %c1_25 = arith.constant 1 : index
    %c0_26 = arith.constant 0 : index
    %c0_27 = arith.constant 0 : index
    %48 = vector.load %arg4[%c1_25, %c0_26, %c0_27] : memref<3x128x256xf32, #tpu.memory_space<vmem>>, vector<1x128x256xf32>
    %49 = vector.shape_cast %48 : vector<1x128x256xf32> to vector<128x256xf32>
    %cst_28 = arith.constant dense<0.000000e+00> : vector<8x256xf32>
    %50 = tpu.matmul %44, %49, %cst_28 {dimension_numbers = #tpu.dot_dimension_numbers<[1], [0], [0], [1], [0, 0, 1, 1], [], []>} : vector<8x128xf32>, vector<128x256xf32>, vector<8x256xf32> -> vector<8x256xf32>
    %c2_29 = arith.constant 2 : index
    %c0_30 = arith.constant 0 : index
    %c0_31 = arith.constant 0 : index
    %51 = vector.load %arg4[%c2_29, %c0_30, %c0_31] : memref<3x128x256xf32, #tpu.memory_space<vmem>>, vector<1x128x256xf32>
    %52 = vector.shape_cast %51 : vector<1x128x256xf32> to vector<128x256xf32>
    %cst_32 = arith.constant dense<0.000000e+00> : vector<8x256xf32>
    %53 = tpu.matmul %44, %52, %cst_32 {dimension_numbers = #tpu.dot_dimension_numbers<[1], [0], [0], [1], [0, 0, 1, 1], [], []>} : vector<8x128xf32>, vector<128x256xf32>, vector<8x256xf32> -> vector<8x256xf32>
    %54 = tpu.iota {dimensions = array<i32: 0>} : vector<8x8xi32>
    %55 = tpu.iota {dimensions = array<i32: 1>} : vector<8x8xi32>
    %c1_i32_33 = arith.constant 1 : i32
    %56 = vector.broadcast %c1_i32_33 : i32 to vector<8x8xi32>
    %57 = arith.addi %55, %56 : vector<8x8xi32>
    %58 = arith.cmpi eq, %54, %57 : vector<8x8xi32>
    %cst_34 = arith.constant 1.000000e+00 : f32
    %cst_35 = arith.constant 0.000000e+00 : f32
    %59 = vector.broadcast %cst_34 : f32 to vector<8x8xf32>
    %60 = vector.broadcast %cst_35 : f32 to vector<8x8xf32>
    %61 = arith.select %58, %59, %60 : vector<8x8xi1>, vector<8x8xf32>
    %62 = tpu.iota {dimensions = array<i32: 0>} : vector<8x8xi32>
    %63 = tpu.iota {dimensions = array<i32: 1>} : vector<8x8xi32>
    %c1_i32_36 = arith.constant 1 : i32
    %64 = vector.broadcast %c1_i32_36 : i32 to vector<8x8xi32>
    %65 = arith.addi %62, %64 : vector<8x8xi32>
    %66 = arith.cmpi eq, %63, %65 : vector<8x8xi32>
    %cst_37 = arith.constant 1.000000e+00 : f32
    %cst_38 = arith.constant 0.000000e+00 : f32
    %67 = vector.broadcast %cst_37 : f32 to vector<8x8xf32>
    %68 = vector.broadcast %cst_38 : f32 to vector<8x8xf32>
    %69 = arith.select %66, %67, %68 : vector<8x8xi1>, vector<8x8xf32>
    %cst_39 = arith.constant dense<0.000000e+00> : vector<8x256xf32>
    %70 = tpu.matmul %61, %47, %cst_39 {dimension_numbers = #tpu.dot_dimension_numbers<[1], [0], [0], [1], [0, 0, 1, 1], [], []>} : vector<8x8xf32>, vector<8x256xf32>, vector<8x256xf32> -> vector<8x256xf32>
    %71 = arith.addf %70, %50 : vector<8x256xf32>
    %cst_40 = arith.constant dense<0.000000e+00> : vector<8x256xf32>
    %72 = tpu.matmul %69, %53, %cst_40 {dimension_numbers = #tpu.dot_dimension_numbers<[1], [0], [0], [1], [0, 0, 1, 1], [], []>} : vector<8x8xf32>, vector<8x256xf32>, vector<8x256xf32> -> vector<8x256xf32>
    %73 = arith.addf %71, %72 : vector<8x256xf32>
    %74 = vector.extract_strided_slice %73 {offsets = [0, 0], sizes = [8, 128], strides = [1, 1]} : vector<8x256xf32> to vector<8x128xf32>
    %75 = vector.extract_strided_slice %73 {offsets = [0, 128], sizes = [8, 128], strides = [1, 1]} : vector<8x256xf32> to vector<8x128xf32>
    %76 = arith.maximumf %74, %75 : vector<8x128xf32>
    %77 = tpu.iota {dimensions = array<i32: 0>} : vector<4x8xi32>
    %78 = tpu.iota {dimensions = array<i32: 1>} : vector<4x8xi32>
    %c2_i32_41 = arith.constant 2 : i32
    %79 = vector.broadcast %c2_i32_41 : i32 to vector<4x8xi32>
    %80 = arith.muli %79, %77 : vector<4x8xi32>
    %81 = arith.cmpi eq, %78, %80 : vector<4x8xi32>
    %cst_42 = arith.constant 1.000000e+00 : f32
    %cst_43 = arith.constant 0.000000e+00 : f32
    %82 = vector.broadcast %cst_42 : f32 to vector<4x8xf32>
    %83 = vector.broadcast %cst_43 : f32 to vector<4x8xf32>
    %84 = arith.select %81, %82, %83 : vector<4x8xi1>, vector<4x8xf32>
    %85 = tpu.iota {dimensions = array<i32: 0>} : vector<4x8xi32>
    %86 = tpu.iota {dimensions = array<i32: 1>} : vector<4x8xi32>
    %c2_i32_44 = arith.constant 2 : i32
    %87 = vector.broadcast %c2_i32_44 : i32 to vector<4x8xi32>
    %88 = arith.muli %87, %85 : vector<4x8xi32>
    %c1_i32_45 = arith.constant 1 : i32
    %89 = vector.broadcast %c1_i32_45 : i32 to vector<4x8xi32>
    %90 = arith.addi %88, %89 : vector<4x8xi32>
    %91 = arith.cmpi eq, %86, %90 : vector<4x8xi32>
    %cst_46 = arith.constant 1.000000e+00 : f32
    %cst_47 = arith.constant 0.000000e+00 : f32
    %92 = vector.broadcast %cst_46 : f32 to vector<4x8xf32>
    %93 = vector.broadcast %cst_47 : f32 to vector<4x8xf32>
    %94 = arith.select %91, %92, %93 : vector<4x8xi1>, vector<4x8xf32>
    %cst_48 = arith.constant dense<0.000000e+00> : vector<4x128xf32>
    %95 = tpu.matmul %84, %76, %cst_48 {dimension_numbers = #tpu.dot_dimension_numbers<[1], [0], [0], [1], [0, 0, 1, 1], [], []>} : vector<4x8xf32>, vector<8x128xf32>, vector<4x128xf32> -> vector<4x128xf32>
    %cst_49 = arith.constant dense<0.000000e+00> : vector<4x128xf32>
    %96 = tpu.matmul %94, %76, %cst_49 {dimension_numbers = #tpu.dot_dimension_numbers<[1], [0], [0], [1], [0, 0, 1, 1], [], []>} : vector<4x8xf32>, vector<8x128xf32>, vector<4x128xf32> -> vector<4x128xf32>
    %97 = arith.maximumf %95, %96 : vector<4x128xf32>
    %c0_50 = arith.constant 0 : index
    %c0_51 = arith.constant 0 : index
    %98 = vector.load %arg5[%c0_50, %c0_51] : memref<1x128xf32, #tpu.memory_space<vmem>>, vector<1x128xf32>
    %99 = vector.broadcast %98 : vector<1x128xf32> to vector<4x128xf32>
    %100 = arith.addf %97, %99 : vector<4x128xf32>
    %cst_52 = arith.constant 0.000000e+00 : f32
    %101 = vector.broadcast %cst_52 : f32 to vector<4x128xf32>
    %102 = arith.maximumf %100, %101 : vector<4x128xf32>
    %c0_53 = arith.constant 0 : index
    %c0_54 = arith.constant 0 : index
    %103 = vector.load %arg7[%c0_53, %c0_54] : memref<1x256xf32, #tpu.memory_space<vmem>>, vector<1x256xf32>
    %104 = vector.extract_strided_slice %102 {offsets = [0, 0], sizes = [1, 128], strides = [1, 1]} : vector<4x128xf32> to vector<1x128xf32>
    %c0_55 = arith.constant 0 : index
    %c0_56 = arith.constant 0 : index
    %105 = vector.load %arg6[%c0_55, %c0_56] : memref<512x256xf32, #tpu.memory_space<vmem>>, vector<128x256xf32>
    %cst_57 = arith.constant dense<0.000000e+00> : vector<1x256xf32>
    %106 = tpu.matmul %104, %105, %cst_57 {dimension_numbers = #tpu.dot_dimension_numbers<[1], [0], [0], [1], [0, 0, 1, 1], [], []>} : vector<1x128xf32>, vector<128x256xf32>, vector<1x256xf32> -> vector<1x256xf32>
    %107 = arith.addf %103, %106 : vector<1x256xf32>
    %108 = vector.extract_strided_slice %102 {offsets = [1, 0], sizes = [1, 128], strides = [1, 1]} : vector<4x128xf32> to vector<1x128xf32>
    %c128 = arith.constant 128 : index
    %c0_58 = arith.constant 0 : index
    %109 = vector.load %arg6[%c128, %c0_58] : memref<512x256xf32, #tpu.memory_space<vmem>>, vector<128x256xf32>
    %cst_59 = arith.constant dense<0.000000e+00> : vector<1x256xf32>
    %110 = tpu.matmul %108, %109, %cst_59 {dimension_numbers = #tpu.dot_dimension_numbers<[1], [0], [0], [1], [0, 0, 1, 1], [], []>} : vector<1x128xf32>, vector<128x256xf32>, vector<1x256xf32> -> vector<1x256xf32>
    %111 = arith.addf %107, %110 : vector<1x256xf32>
    %112 = vector.extract_strided_slice %102 {offsets = [2, 0], sizes = [1, 128], strides = [1, 1]} : vector<4x128xf32> to vector<1x128xf32>
    %c256 = arith.constant 256 : index
    %c0_60 = arith.constant 0 : index
    %113 = vector.load %arg6[%c256, %c0_60] : memref<512x256xf32, #tpu.memory_space<vmem>>, vector<128x256xf32>
    %cst_61 = arith.constant dense<0.000000e+00> : vector<1x256xf32>
    %114 = tpu.matmul %112, %113, %cst_61 {dimension_numbers = #tpu.dot_dimension_numbers<[1], [0], [0], [1], [0, 0, 1, 1], [], []>} : vector<1x128xf32>, vector<128x256xf32>, vector<1x256xf32> -> vector<1x256xf32>
    %115 = arith.addf %111, %114 : vector<1x256xf32>
    %116 = vector.extract_strided_slice %102 {offsets = [3, 0], sizes = [1, 128], strides = [1, 1]} : vector<4x128xf32> to vector<1x128xf32>
    %c384 = arith.constant 384 : index
    %c0_62 = arith.constant 0 : index
    %117 = vector.load %arg6[%c384, %c0_62] : memref<512x256xf32, #tpu.memory_space<vmem>>, vector<128x256xf32>
    %cst_63 = arith.constant dense<0.000000e+00> : vector<1x256xf32>
    %118 = tpu.matmul %116, %117, %cst_63 {dimension_numbers = #tpu.dot_dimension_numbers<[1], [0], [0], [1], [0, 0, 1, 1], [], []>} : vector<1x128xf32>, vector<128x256xf32>, vector<1x256xf32> -> vector<1x256xf32>
    %119 = arith.addf %115, %118 : vector<1x256xf32>
    %c0_64 = arith.constant 0 : index
    %c0_65 = arith.constant 0 : index
    %c0_66 = arith.constant 0 : index
    %120 = vector.load %arg15[%c0_64, %c0_65, %c0_66] : memref<1x1x256xf32, #tpu.memory_space<vmem>>, vector<1x1x256xf32>
    %121 = vector.shape_cast %120 : vector<1x1x256xf32> to vector<1x256xf32>
    %122 = vector.shape_cast %119 : vector<1x256xf32> to vector<1x1x256xf32>
    tpu.vector_store %arg15[%c0_64, %c0_65, %c0_66], %122 {strides = array<i32>} : memref<1x1x256xf32, #tpu.memory_space<vmem>>, vector<1x1x256xf32>,
    %c0_67 = arith.constant 0 : index
    %c0_68 = arith.constant 0 : index
    %123 = vector.load %arg8[%c0_67, %c0_68] : memref<256x512xf32, #tpu.memory_space<vmem>>, vector<256x512xf32>
    %cst_69 = arith.constant dense<0.000000e+00> : vector<1x512xf32>
    %124 = tpu.matmul %119, %123, %cst_69 {dimension_numbers = #tpu.dot_dimension_numbers<[1], [0], [0], [1], [0, 0, 1, 1], [], []>} : vector<1x256xf32>, vector<256x512xf32>, vector<1x512xf32> -> vector<1x512xf32>
    %c0_70 = arith.constant 0 : index
    %c0_71 = arith.constant 0 : index
    %125 = vector.load %arg9[%c0_70, %c0_71] : memref<1x512xf32, #tpu.memory_space<vmem>>, vector<1x512xf32>
    %126 = arith.addf %124, %125 : vector<1x512xf32>
    %cst_72 = arith.constant 0.000000e+00 : f32
    %127 = vector.broadcast %cst_72 : f32 to vector<1x128xf32>
    %c4 = arith.constant 4 : index
    %c0_73 = arith.constant 0 : index
    %128 = vector.load %arg16[%c4, %c0_73] : memref<5x128xf32, #tpu.memory_space<vmem>>, vector<1x128xf32>
    tpu.vector_store %arg16[%c4, %c0_73], %127 {strides = array<i32>} : memref<5x128xf32, #tpu.memory_space<vmem>>, vector<1x128xf32>,
    %129 = vector.extract_strided_slice %126 {offsets = [0, 0], sizes = [1, 128], strides = [1, 1]} : vector<1x512xf32> to vector<1x128xf32>
    %c0_74 = arith.constant 0 : index
    %c0_75 = arith.constant 0 : index
    %130 = vector.load %arg16[%c0_74, %c0_75] : memref<5x128xf32, #tpu.memory_space<vmem>>, vector<1x128xf32>
    tpu.vector_store %arg16[%c0_74, %c0_75], %129 {strides = array<i32>} : memref<5x128xf32, #tpu.memory_space<vmem>>, vector<1x128xf32>,
    %131 = vector.extract_strided_slice %126 {offsets = [0, 128], sizes = [1, 128], strides = [1, 1]} : vector<1x512xf32> to vector<1x128xf32>
    %c1_76 = arith.constant 1 : index
    %c0_77 = arith.constant 0 : index
    %132 = vector.load %arg16[%c1_76, %c0_77] : memref<5x128xf32, #tpu.memory_space<vmem>>, vector<1x128xf32>
    tpu.vector_store %arg16[%c1_76, %c0_77], %131 {strides = array<i32>} : memref<5x128xf32, #tpu.memory_space<vmem>>, vector<1x128xf32>,
    %133 = vector.extract_strided_slice %126 {offsets = [0, 256], sizes = [1, 128], strides = [1, 1]} : vector<1x512xf32> to vector<1x128xf32>
    %c2_78 = arith.constant 2 : index
    %c0_79 = arith.constant 0 : index
    %134 = vector.load %arg16[%c2_78, %c0_79] : memref<5x128xf32, #tpu.memory_space<vmem>>, vector<1x128xf32>
    tpu.vector_store %arg16[%c2_78, %c0_79], %133 {strides = array<i32>} : memref<5x128xf32, #tpu.memory_space<vmem>>, vector<1x128xf32>,
    %135 = vector.extract_strided_slice %126 {offsets = [0, 384], sizes = [1, 128], strides = [1, 1]} : vector<1x512xf32> to vector<1x128xf32>
    %c3 = arith.constant 3 : index
    %c0_80 = arith.constant 0 : index
    %136 = vector.load %arg16[%c3, %c0_80] : memref<5x128xf32, #tpu.memory_space<vmem>>, vector<1x128xf32>
    tpu.vector_store %arg16[%c3, %c0_80], %135 {strides = array<i32>} : memref<5x128xf32, #tpu.memory_space<vmem>>, vector<1x128xf32>,
    %c0_81 = arith.constant 0 : index
    %c0_82 = arith.constant 0 : index
    %137 = vector.load %arg16[%c0_81, %c0_82] : memref<5x128xf32, #tpu.memory_space<vmem>>, vector<4x128xf32>
    %c1_83 = arith.constant 1 : index
    %c0_84 = arith.constant 0 : index
    %138 = vector.load %arg16[%c1_83, %c0_84] : memref<5x128xf32, #tpu.memory_space<vmem>>, vector<4x128xf32>
    %c0_85 = arith.constant 0 : index
    %c0_86 = arith.constant 0 : index
    %c0_87 = arith.constant 0 : index
    %139 = vector.load %arg10[%c0_85, %c0_86, %c0_87] : memref<3x128x128xf32, #tpu.memory_space<vmem>>, vector<1x128x128xf32>
    %140 = vector.shape_cast %139 : vector<1x128x128xf32> to vector<128x128xf32>
    %cst_88 = arith.constant dense<0.000000e+00> : vector<4x128xf32>
    %141 = tpu.matmul %137, %140, %cst_88 {dimension_numbers = #tpu.dot_dimension_numbers<[1], [0], [0], [1], [0, 0, 1, 1], [], []>} : vector<4x128xf32>, vector<128x128xf32>, vector<4x128xf32> -> vector<4x128xf32>
    %c0_89 = arith.constant 0 : index
    %c0_90 = arith.constant 0 : index
    %142 = vector.load %arg11[%c0_89, %c0_90] : memref<1x128xf32, #tpu.memory_space<vmem>>, vector<1x128xf32>
    %143 = vector.broadcast %142 : vector<1x128xf32> to vector<4x128xf32>
    %144 = arith.addf %141, %143 : vector<4x128xf32>
    %cst_91 = arith.constant 0.000000e+00 : f32
    %145 = vector.broadcast %cst_91 : f32 to vector<4x128xf32>
    %146 = arith.maximumf %144, %145 : vector<4x128xf32>
    %c1_92 = arith.constant 1 : index
    %c0_93 = arith.constant 0 : index
    %c0_94 = arith.constant 0 : index
    %147 = vector.load %arg10[%c1_92, %c0_93, %c0_94] : memref<3x128x128xf32, #tpu.memory_space<vmem>>, vector<1x128x128xf32>
    %148 = vector.shape_cast %147 : vector<1x128x128xf32> to vector<128x128xf32>
    %cst_95 = arith.constant dense<0.000000e+00> : vector<4x128xf32>
    %149 = tpu.matmul %138, %148, %cst_95 {dimension_numbers = #tpu.dot_dimension_numbers<[1], [0], [0], [1], [0, 0, 1, 1], [], []>} : vector<4x128xf32>, vector<128x128xf32>, vector<4x128xf32> -> vector<4x128xf32>
    %c2_96 = arith.constant 2 : index
    %c0_97 = arith.constant 0 : index
    %c0_98 = arith.constant 0 : index
    %150 = vector.load %arg10[%c2_96, %c0_97, %c0_98] : memref<3x128x128xf32, #tpu.memory_space<vmem>>, vector<1x128x128xf32>
    %151 = vector.shape_cast %150 : vector<1x128x128xf32> to vector<128x128xf32>
    %cst_99 = arith.constant dense<0.000000e+00> : vector<4x128xf32>
    %152 = tpu.matmul %137, %151, %cst_99 {dimension_numbers = #tpu.dot_dimension_numbers<[1], [0], [0], [1], [0, 0, 1, 1], [], []>} : vector<4x128xf32>, vector<128x128xf32>, vector<4x128xf32> -> vector<4x128xf32>
    %153 = arith.addf %149, %152 : vector<4x128xf32>
    %c0_100 = arith.constant 0 : index
    %c0_101 = arith.constant 0 : index
    %154 = vector.load %arg11[%c0_100, %c0_101] : memref<1x128xf32, #tpu.memory_space<vmem>>, vector<1x128xf32>
    %155 = vector.broadcast %154 : vector<1x128xf32> to vector<4x128xf32>
    %156 = arith.addf %153, %155 : vector<4x128xf32>
    %cst_102 = arith.constant 0.000000e+00 : f32
    %157 = vector.broadcast %cst_102 : f32 to vector<4x128xf32>
    %158 = arith.maximumf %156, %157 : vector<4x128xf32>
    %159 = tpu.iota {dimensions = array<i32: 0>} : vector<8x4xi32>
    %160 = tpu.iota {dimensions = array<i32: 1>} : vector<8x4xi32>
    %c2_i32_103 = arith.constant 2 : i32
    %161 = vector.broadcast %c2_i32_103 : i32 to vector<8x4xi32>
    %162 = arith.muli %161, %160 : vector<8x4xi32>
    %163 = arith.cmpi eq, %159, %162 : vector<8x4xi32>
    %cst_104 = arith.constant 1.000000e+00 : f32
    %cst_105 = arith.constant 0.000000e+00 : f32
    %164 = vector.broadcast %cst_104 : f32 to vector<8x4xf32>
    %165 = vector.broadcast %cst_105 : f32 to vector<8x4xf32>
    %166 = arith.select %163, %164, %165 : vector<8x4xi1>, vector<8x4xf32>
    %167 = tpu.iota {dimensions = array<i32: 0>} : vector<8x4xi32>
    %168 = tpu.iota {dimensions = array<i32: 1>} : vector<8x4xi32>
    %c2_i32_106 = arith.constant 2 : i32
    %169 = vector.broadcast %c2_i32_106 : i32 to vector<8x4xi32>
    %170 = arith.muli %169, %168 : vector<8x4xi32>
    %c1_i32_107 = arith.constant 1 : i32
    %171 = vector.broadcast %c1_i32_107 : i32 to vector<8x4xi32>
    %172 = arith.addi %170, %171 : vector<8x4xi32>
    %173 = arith.cmpi eq, %167, %172 : vector<8x4xi32>
    %cst_108 = arith.constant 1.000000e+00 : f32
    %cst_109 = arith.constant 0.000000e+00 : f32
    %174 = vector.broadcast %cst_108 : f32 to vector<8x4xf32>
    %175 = vector.broadcast %cst_109 : f32 to vector<8x4xf32>
    %176 = arith.select %173, %174, %175 : vector<8x4xi1>, vector<8x4xf32>
    %cst_110 = arith.constant dense<0.000000e+00> : vector<8x128xf32>
    %177 = tpu.matmul %166, %146, %cst_110 {dimension_numbers = #tpu.dot_dimension_numbers<[1], [0], [0], [1], [0, 0, 1, 1], [], []>} : vector<8x4xf32>, vector<4x128xf32>, vector<8x128xf32> -> vector<8x128xf32>
    %cst_111 = arith.constant dense<0.000000e+00> : vector<8x128xf32>
    %178 = tpu.matmul %176, %158, %cst_111 {dimension_numbers = #tpu.dot_dimension_numbers<[1], [0], [0], [1], [0, 0, 1, 1], [], []>} : vector<8x4xf32>, vector<4x128xf32>, vector<8x128xf32> -> vector<8x128xf32>
    %179 = arith.addf %177, %178 : vector<8x128xf32>
    %180 = tpu.iota {dimensions = array<i32: 0>} : vector<8x8xi32>
    %181 = tpu.iota {dimensions = array<i32: 1>} : vector<8x8xi32>
    %c1_i32_112 = arith.constant 1 : i32
    %182 = vector.broadcast %c1_i32_112 : i32 to vector<8x8xi32>
    %183 = arith.addi %180, %182 : vector<8x8xi32>
    %184 = arith.cmpi eq, %181, %183 : vector<8x8xi32>
    %cst_113 = arith.constant 1.000000e+00 : f32
    %cst_114 = arith.constant 0.000000e+00 : f32
    %185 = vector.broadcast %cst_113 : f32 to vector<8x8xf32>
    %186 = vector.broadcast %cst_114 : f32 to vector<8x8xf32>
    %187 = arith.select %184, %185, %186 : vector<8x8xi1>, vector<8x8xf32>
    %cst_115 = arith.constant dense<0.000000e+00> : vector<8x128xf32>
    %188 = tpu.matmul %187, %179, %cst_115 {dimension_numbers = #tpu.dot_dimension_numbers<[1], [0], [0], [1], [0, 0, 1, 1], [], []>} : vector<8x8xf32>, vector<8x128xf32>, vector<8x128xf32> -> vector<8x128xf32>
    %c0_116 = arith.constant 0 : index
    %c0_117 = arith.constant 0 : index
    %c0_118 = arith.constant 0 : index
    %189 = vector.load %arg12[%c0_116, %c0_117, %c0_118] : memref<3x128x16xf32, #tpu.memory_space<vmem>>, vector<1x128x16xf32>
    %190 = vector.shape_cast %189 : vector<1x128x16xf32> to vector<128x16xf32>
    %cst_119 = arith.constant dense<0.000000e+00> : vector<8x16xf32>
    %191 = tpu.matmul %179, %190, %cst_119 {dimension_numbers = #tpu.dot_dimension_numbers<[1], [0], [0], [1], [0, 0, 1, 1], [], []>} : vector<8x128xf32>, vector<128x16xf32>, vector<8x16xf32> -> vector<8x16xf32>
    %c0_120 = arith.constant 0 : index
    %c0_121 = arith.constant 0 : index
    %192 = vector.load %arg13[%c0_120, %c0_121] : memref<1x16xf32, #tpu.memory_space<vmem>>, vector<1x16xf32>
    %193 = vector.broadcast %192 : vector<1x16xf32> to vector<8x16xf32>
    %194 = arith.addf %191, %193 : vector<8x16xf32>
    %c1_122 = arith.constant 1 : index
    %c0_123 = arith.constant 0 : index
    %c0_124 = arith.constant 0 : index
    %195 = vector.load %arg12[%c1_122, %c0_123, %c0_124] : memref<3x128x16xf32, #tpu.memory_space<vmem>>, vector<1x128x16xf32>
    %196 = vector.shape_cast %195 : vector<1x128x16xf32> to vector<128x16xf32>
    %cst_125 = arith.constant dense<0.000000e+00> : vector<8x16xf32>
    %197 = tpu.matmul %188, %196, %cst_125 {dimension_numbers = #tpu.dot_dimension_numbers<[1], [0], [0], [1], [0, 0, 1, 1], [], []>} : vector<8x128xf32>, vector<128x16xf32>, vector<8x16xf32> -> vector<8x16xf32>
    %c2_126 = arith.constant 2 : index
    %c0_127 = arith.constant 0 : index
    %c0_128 = arith.constant 0 : index
    %198 = vector.load %arg12[%c2_126, %c0_127, %c0_128] : memref<3x128x16xf32, #tpu.memory_space<vmem>>, vector<1x128x16xf32>
    %199 = vector.shape_cast %198 : vector<1x128x16xf32> to vector<128x16xf32>
    %cst_129 = arith.constant dense<0.000000e+00> : vector<8x16xf32>
    %200 = tpu.matmul %179, %199, %cst_129 {dimension_numbers = #tpu.dot_dimension_numbers<[1], [0], [0], [1], [0, 0, 1, 1], [], []>} : vector<8x128xf32>, vector<128x16xf32>, vector<8x16xf32> -> vector<8x16xf32>
    %201 = arith.addf %197, %200 : vector<8x16xf32>
    %c0_130 = arith.constant 0 : index
    %c0_131 = arith.constant 0 : index
    %202 = vector.load %arg13[%c0_130, %c0_131] : memref<1x16xf32, #tpu.memory_space<vmem>>, vector<1x16xf32>
    %203 = vector.broadcast %202 : vector<1x16xf32> to vector<8x16xf32>
    %204 = arith.addf %201, %203 : vector<8x16xf32>
    %205 = tpu.iota {dimensions = array<i32: 0>} : vector<16x8xi32>
    %206 = tpu.iota {dimensions = array<i32: 1>} : vector<16x8xi32>
    %c2_i32_132 = arith.constant 2 : i32
    %207 = vector.broadcast %c2_i32_132 : i32 to vector<16x8xi32>
    %208 = arith.muli %207, %206 : vector<16x8xi32>
    %209 = arith.cmpi eq, %205, %208 : vector<16x8xi32>
    %cst_133 = arith.constant 1.000000e+00 : f32
    %cst_134 = arith.constant 0.000000e+00 : f32
    %210 = vector.broadcast %cst_133 : f32 to vector<16x8xf32>
    %211 = vector.broadcast %cst_134 : f32 to vector<16x8xf32>
    %212 = arith.select %209, %210, %211 : vector<16x8xi1>, vector<16x8xf32>
    %213 = tpu.iota {dimensions = array<i32: 0>} : vector<16x8xi32>
    %214 = tpu.iota {dimensions = array<i32: 1>} : vector<16x8xi32>
    %c2_i32_135 = arith.constant 2 : i32
    %215 = vector.broadcast %c2_i32_135 : i32 to vector<16x8xi32>
    %216 = arith.muli %215, %214 : vector<16x8xi32>
    %c1_i32_136 = arith.constant 1 : i32
    %217 = vector.broadcast %c1_i32_136 : i32 to vector<16x8xi32>
    %218 = arith.addi %216, %217 : vector<16x8xi32>
    %219 = arith.cmpi eq, %213, %218 : vector<16x8xi32>
    %cst_137 = arith.constant 1.000000e+00 : f32
    %cst_138 = arith.constant 0.000000e+00 : f32
    %220 = vector.broadcast %cst_137 : f32 to vector<16x8xf32>
    %221 = vector.broadcast %cst_138 : f32 to vector<16x8xf32>
    %222 = arith.select %219, %220, %221 : vector<16x8xi1>, vector<16x8xf32>
    %cst_139 = arith.constant dense<0.000000e+00> : vector<16x16xf32>
    %223 = tpu.matmul %212, %194, %cst_139 {dimension_numbers = #tpu.dot_dimension_numbers<[1], [0], [0], [1], [0, 0, 1, 1], [], []>} : vector<16x8xf32>, vector<8x16xf32>, vector<16x16xf32> -> vector<16x16xf32>
    %cst_140 = arith.constant dense<0.000000e+00> : vector<16x16xf32>
    %224 = tpu.matmul %222, %204, %cst_140 {dimension_numbers = #tpu.dot_dimension_numbers<[1], [0], [0], [1], [0, 0, 1, 1], [], []>} : vector<16x8xf32>, vector<8x16xf32>, vector<16x16xf32> -> vector<16x16xf32>
    %225 = arith.addf %223, %224 : vector<16x16xf32>
    %c0_141 = arith.constant 0 : index
    %c0_142 = arith.constant 0 : index
    %c0_143 = arith.constant 0 : index
    %226 = vector.load %arg14[%c0_141, %c0_142, %c0_143] : memref<1x16x16xf32, #tpu.memory_space<vmem>>, vector<1x16x16xf32>
    %227 = vector.shape_cast %226 : vector<1x16x16xf32> to vector<16x16xf32>
    %228 = vector.shape_cast %225 : vector<16x16xf32> to vector<1x16x16xf32>
    tpu.vector_store %arg14[%c0_141, %c0_142, %c0_143], %228 {strides = array<i32>} : memref<1x16x16xf32, #tpu.memory_space<vmem>>, vector<1x16x16xf32>,
    return
  }
  func.func @transform_0(%arg0: i32) -> (i32, i32, i32) {
    %c0_i32 = arith.constant 0 : i32
    %c0_i32_0 = arith.constant 0 : i32
    %c0_i32_1 = arith.constant 0 : i32
    return %arg0, %c0_i32, %c0_i32_0 : i32, i32, i32
  }
  func.func @transform_1(%arg0: i32) -> (i32, i32, i32) {
    %c0_i32 = arith.constant 0 : i32
    %c0_i32_0 = arith.constant 0 : i32
    %c0_i32_1 = arith.constant 0 : i32
    %c0_i32_2 = arith.constant 0 : i32
    return %c0_i32, %c0_i32_0, %c0_i32_1 : i32, i32, i32
  }
  func.func @transform_2(%arg0: i32) -> (i32, i32) {
    %c0_i32 = arith.constant 0 : i32
    %c0_i32_0 = arith.constant 0 : i32
    %c0_i32_1 = arith.constant 0 : i32
    return %c0_i32, %c0_i32_0 : i32, i32
  }
  func.func @transform_3(%arg0: i32) -> (i32, i32, i32) {
    %c0_i32 = arith.constant 0 : i32
    %c0_i32_0 = arith.constant 0 : i32
    %c0_i32_1 = arith.constant 0 : i32
    %c0_i32_2 = arith.constant 0 : i32
    return %c0_i32, %c0_i32_0, %c0_i32_1 : i32, i32, i32
  }
  func.func @transform_4(%arg0: i32) -> (i32, i32) {
    %c0_i32 = arith.constant 0 : i32
    %c0_i32_0 = arith.constant 0 : i32
    %c0_i32_1 = arith.constant 0 : i32
    return %c0_i32, %c0_i32_0 : i32, i32
  }
  func.func @transform_5(%arg0: i32) -> (i32, i32) {
    %c0_i32 = arith.constant 0 : i32
    %c0_i32_0 = arith.constant 0 : i32
    %c0_i32_1 = arith.constant 0 : i32
    return %c0_i32, %c0_i32_0 : i32, i32
  }
  func.func @transform_6(%arg0: i32) -> (i32, i32) {
    %c0_i32 = arith.constant 0 : i32
    %c0_i32_0 = arith.constant 0 : i32
    %c0_i32_1 = arith.constant 0 : i32
    return %c0_i32, %c0_i32_0 : i32, i32
  }
  func.func @transform_7(%arg0: i32) -> (i32, i32) {
    %c0_i32 = arith.constant 0 : i32
    %c0_i32_0 = arith.constant 0 : i32
    %c0_i32_1 = arith.constant 0 : i32
    return %c0_i32, %c0_i32_0 : i32, i32
  }
  func.func @transform_8(%arg0: i32) -> (i32, i32) {
    %c0_i32 = arith.constant 0 : i32
    %c0_i32_0 = arith.constant 0 : i32
    %c0_i32_1 = arith.constant 0 : i32
    return %c0_i32, %c0_i32_0 : i32, i32
  }
  func.func @transform_9(%arg0: i32) -> (i32, i32, i32) {
    %c0_i32 = arith.constant 0 : i32
    %c0_i32_0 = arith.constant 0 : i32
    %c0_i32_1 = arith.constant 0 : i32
    %c0_i32_2 = arith.constant 0 : i32
    return %c0_i32, %c0_i32_0, %c0_i32_1 : i32, i32, i32
  }
  func.func @transform_10(%arg0: i32) -> (i32, i32) {
    %c0_i32 = arith.constant 0 : i32
    %c0_i32_0 = arith.constant 0 : i32
    %c0_i32_1 = arith.constant 0 : i32
    return %c0_i32, %c0_i32_0 : i32, i32
  }
  func.func @transform_11(%arg0: i32) -> (i32, i32, i32) {
    %c0_i32 = arith.constant 0 : i32
    %c0_i32_0 = arith.constant 0 : i32
    %c0_i32_1 = arith.constant 0 : i32
    %c0_i32_2 = arith.constant 0 : i32
    return %c0_i32, %c0_i32_0, %c0_i32_1 : i32, i32, i32
  }
  func.func @transform_12(%arg0: i32) -> (i32, i32) {
    %c0_i32 = arith.constant 0 : i32
    %c0_i32_0 = arith.constant 0 : i32
    %c0_i32_1 = arith.constant 0 : i32
    return %c0_i32, %c0_i32_0 : i32, i32
  }
  func.func @transform_13(%arg0: i32) -> (i32, i32, i32) {
    %c0_i32 = arith.constant 0 : i32
    %c0_i32_0 = arith.constant 0 : i32
    %c0_i32_1 = arith.constant 0 : i32
    return %arg0, %c0_i32, %c0_i32_0 : i32, i32, i32
  }
  func.func @transform_14(%arg0: i32) -> (i32, i32, i32) {
    %c0_i32 = arith.constant 0 : i32
    %c0_i32_0 = arith.constant 0 : i32
    %c0_i32_1 = arith.constant 0 : i32
    return %arg0, %c0_i32, %c0_i32_0 : i32, i32, i32
  }
}

</mosaic_0001>

<llo_original>
// kernel: fwd.1
$region0: #{fwd.1}
  #allocation0 [shape = 'u32[]', space=smem, size = 0x4, offset = 0x4, fixed_abs, tag = 'smem constant byte address 0x4 - core index']
  #allocation1 [shape = 'u32[144,128]{1,0:T(1,128)}', space=vmem, size = 0x12000, scoped, tag = 'internal scratch']
  #allocation2 [shape = 'f32[5,128]{1,0:T(8,128)}', space=vmem, size = 0x1000, scoped, tag = 'scratch operand']
  %s0 = inlined_call_operand.vmem [shape: f32[2,18,18], index: 0, kind: input, shape index: {}]
  %s1 = inlined_call_operand.vmem [shape: f32[3,18,256], index: 1, kind: input, shape index: {}]
  %s2 = inlined_call_operand.vmem [shape: f32[1,128], index: 2, kind: input, shape index: {}]
  %s3 = inlined_call_operand.hbm [shape: f32[3,128,256], index: 3, kind: input, shape index: {}]
  %s4 = inlined_call_operand.vmem [shape: f32[1,128], index: 4, kind: input, shape index: {}]
  %s5 = inlined_call_operand.hbm [shape: f32[512,256], index: 5, kind: input, shape index: {}]
  %s6 = inlined_call_operand.vmem [shape: f32[1,256], index: 6, kind: input, shape index: {}]
  %s7 = inlined_call_operand.hbm [shape: f32[256,512], index: 7, kind: input, shape index: {}]
  %s8 = inlined_call_operand.vmem [shape: f32[1,512], index: 8, kind: input, shape index: {}]
  %s9 = inlined_call_operand.vmem [shape: f32[3,128,128], index: 9, kind: input, shape index: {}]
  %s10 = inlined_call_operand.vmem [shape: f32[1,128], index: 10, kind: input, shape index: {}]
  %s11 = inlined_call_operand.vmem [shape: f32[3,128,16], index: 11, kind: input, shape index: {}]
  %s12 = inlined_call_operand.vmem [shape: f32[1,16], index: 12, kind: input, shape index: {}]
  %s13 = inlined_call_operand.hbm [shape: f32[2,16,16], index: 13, kind: output, shape index: {0}]
  %s14 = inlined_call_operand.vmem [shape: f32[2,1,256], index: 14, kind: output, shape index: {1}]
  %15 = xla_tuple %s13, %s14
  %s16 = sld [smem:[#allocation0]]
  $region105: #{fwd.1} parent=0
    _
  %s18 = ssub.s32 1, %s16
  %s19 = scalar_select 0, %s18, %s16
  $region1: #{fwd.1} parent=0
    #allocation3 [shape = 'u8[393216]{0}', space=vmem, size = 0x60000, scoped, tag = 'input window, operand 3, single buffered']
    #allocation4 [shape = 's32[2]{0}', space=sflag, size = 0x8, scoped, tag = 'scoped memory for fwd.1']
    #allocation5 [shape = 's32[2]{0}', space=sflag, size = 0x8, scoped, tag = 'scoped memory for fwd.1']
    #allocation6 [shape = 'u8[524288]{0}', space=vmem, size = 0x80000, scoped, tag = 'input window, operand 5, single buffered']
    #allocation7 [shape = 's32[1]{0}', space=sflag, size = 0x4, scoped, tag = 'scoped memory for fwd.1']
    #allocation8 [shape = 'u8[524288]{0}', space=vmem, size = 0x80000, scoped, tag = 'input window, operand 7, single buffered']
    #allocation9 [shape = 'u8[16384]{0}', space=vmem, size = 0x4000, scoped, tag = 'output window, operand 0']
    %20 = vsyncpa [#allocation4], 0
    %21 = vsyncpa [#allocation7], 0
    %22 = vsyncpa [#allocation5], 0
    %s23 = scalar_lea.sflag [#allocation5], 1
    %24 = vsyncpa %s23, 0
    loop: start=0, step=1, limit=4
    $region2: #{fwd.1} parent=1 // loop_pre_header
      _
    $region3: #{fwd.1} parent=1 // loop_header
      %s26 = sphi 0, %s30
      %p27 = scmp.ge.s32.totalorder %s26, 4
      %s36 = sphi 0, %s38
      %s39 = sphi 0, %s36
      %s40 = sphi 0, %s39
      %s56 = sphi 0, %s40
      %s60 = sphi 0, %s60
      %s62 = sphi 0, %s60
      %s63 = sphi 0, %s62
      %s77 = sphi 0, %s63
      %s81 = sphi 0, %s81
      %s83 = sphi 0, %s81
      %s84 = sphi 0, %s83
      %s98 = sphi 0, %s84
      %s102 = sphi 0, %s102
      %s104 = sphi 0, %s102
      %s105 = sphi 0, %s104
      %s119 = sphi 0, %s105
      %s123 = sphi 0, %s123
      %s125 = sphi 0, %s123
      %s126 = sphi 0, %s125
      %s140 = sphi 0, %s126
      %s144 = sphi 0, %s144
      %s146 = sphi 0, %s144
      %s147 = sphi 0, %s146
      %s161 = sphi 0, %s147
      %s165 = sphi 0, %s165
      %s167 = sphi 0, %s165
      %s168 = sphi 0, %s167
      %s182 = sphi 0, %s168
      %s186 = sphi 0, %s186
      %s188 = sphi 0, %s186
      %s189 = sphi 0, %s188
      %s203 = sphi 0, %s189
      %s207 = sphi 0, %s207
      %s209 = sphi 0, %s207
      %s210 = sphi 0, %s209
      %s224 = sphi 0, %s210
      %s228 = sphi 0, %s228
      %s230 = sphi 0, %s228
      %s231 = sphi 0, %s230
      %s245 = sphi 0, %s231
      %s249 = sphi 0, %s249
      %s251 = sphi 0, %s249
      %s252 = sphi 0, %s251
      %s266 = sphi 0, %s252
      %s270 = sphi 0, %s270
      %s272 = sphi 0, %s270
      %s273 = sphi 0, %s272
      %s287 = sphi 0, %s273
      %s291 = sphi 0, %s291
      %s293 = sphi 0, %s291
      %s294 = sphi 0, %s293
      %s308 = sphi 0, %s294
      %s314 = sphi 0, %s316
      %s317 = sphi 0, %s314
      %s318 = sphi 0, %s317
      %s334 = sphi 0, %s318
      %s340 = sphi 0, %s342
      %s343 = sphi 0, %s340
      %s344 = sphi 0, %s343
      %s360 = sphi 0, %s344
    $region4: #{fwd.1} parent=1 // loop_header_branch
      %29 = sbr.rel (%p27) target = $region8
    $region5: #{fwd.1} parent=1 // loop_body
      %s31 = ssub.s32 %s26, 1
      %s32 = ssub.s32 %s26, 2
      %s33 = sadd.s32 %s26, 1
      %s34 = ssub.s32 %s26, %s33
      %p35 = scmp.eq.s32.totalorder %s34, 0
      %s37 = sadd.s32 %s36, 1
      %s38 = scalar_select %p35, %s36, %s37
      %p41 = pneg %p35
      %p42 = scmp.eq.s32.totalorder %s26, 1
      %p43 = por %p41, %p42
      %p44 = scmp.ne.s32.totalorder %s36, %s39
      %p45 = scmp.eq.s32.totalorder %s26, 0
      %p46 = por %p44, %p45
      %p47 = scmp.ne.s32.totalorder %s36, %s39
      %p48 = scmp.eq.s32.totalorder %s31, 1
      %p49 = por %p47, %p48
      %p50 = scmp.ne.s32.totalorder %s39, %s40
      %p51 = scmp.eq.s32.totalorder %s31, 0
      %p52 = por %p50, %p51
      %p53 = scmp.ne.s32.totalorder %s39, %s40
      %p54 = scmp.eq.s32.totalorder %s32, 1
      %p55 = por %p53, %p54
      %p57 = scmp.ne.s32.totalorder %s40, %s56
      %p58 = scmp.eq.s32.totalorder %s32, 0
      %p59 = por %p57, %p58
      %s61 = sadd.s32 %s60, 1
      %p64 = scmp.eq.s32.totalorder %s26, 1
      %p65 = scmp.ne.s32.totalorder %s60, %s62
      %p66 = scmp.eq.s32.totalorder %s26, 0
      %p67 = por %p65, %p66
      %p68 = scmp.ne.s32.totalorder %s60, %s62
      %p69 = scmp.eq.s32.totalorder %s31, 1
      %p70 = por %p68, %p69
      %p71 = scmp.ne.s32.totalorder %s62, %s63
      %p72 = scmp.eq.s32.totalorder %s31, 0
      %p73 = por %p71, %p72
      %p74 = scmp.ne.s32.totalorder %s62, %s63
      %p75 = scmp.eq.s32.totalorder %s32, 1
      %p76 = por %p74, %p75
      %p78 = scmp.ne.s32.totalorder %s63, %s77
      %p79 = scmp.eq.s32.totalorder %s32, 0
      %p80 = por %p78, %p79
      %s82 = sadd.s32 %s81, 1
      %p85 = scmp.eq.s32.totalorder %s26, 1
      %p86 = scmp.ne.s32.totalorder %s81, %s83
      %p87 = scmp.eq.s32.totalorder %s26, 0
      %p88 = por %p86, %p87
      %p89 = scmp.ne.s32.totalorder %s81, %s83
      %p90 = scmp.eq.s32.totalorder %s31, 1
      %p91 = por %p89, %p90
      %p92 = scmp.ne.s32.totalorder %s83, %s84
      %p93 = scmp.eq.s32.totalorder %s31, 0
      %p94 = por %p92, %p93
      %p95 = scmp.ne.s32.totalorder %s83, %s84
      %p96 = scmp.eq.s32.totalorder %s32, 1
      %p97 = por %p95, %p96
      %p99 = scmp.ne.s32.totalorder %s84, %s98
      %p100 = scmp.eq.s32.totalorder %s32, 0
      %p101 = por %p99, %p100
      %s103 = sadd.s32 %s102, 1
      %p106 = scmp.eq.s32.totalorder %s26, 1
      %p107 = scmp.ne.s32.totalorder %s102, %s104
      %p108 = scmp.eq.s32.totalorder %s26, 0
      %p109 = por %p107, %p108
      %p110 = scmp.ne.s32.totalorder %s102, %s104
      %p111 = scmp.eq.s32.totalorder %s31, 1
      %p112 = por %p110, %p111
      %p113 = scmp.ne.s32.totalorder %s104, %s105
      %p114 = scmp.eq.s32.totalorder %s31, 0
      %p115 = por %p113, %p114
      %p116 = scmp.ne.s32.totalorder %s104, %s105
      %p117 = scmp.eq.s32.totalorder %s32, 1
      %p118 = por %p116, %p117
      %p120 = scmp.ne.s32.totalorder %s105, %s119
      %p121 = scmp.eq.s32.totalorder %s32, 0
      %p122 = por %p120, %p121
      %s124 = sadd.s32 %s123, 1
      %p127 = scmp.eq.s32.totalorder %s26, 1
      %p128 = scmp.ne.s32.totalorder %s123, %s125
      %p129 = scmp.eq.s32.totalorder %s26, 0
      %p130 = por %p128, %p129
      %p131 = scmp.ne.s32.totalorder %s123, %s125
      %p132 = scmp.eq.s32.totalorder %s31, 1
      %p133 = por %p131, %p132
      %p134 = scmp.ne.s32.totalorder %s125, %s126
      %p135 = scmp.eq.s32.totalorder %s31, 0
      %p136 = por %p134, %p135
      %p137 = scmp.ne.s32.totalorder %s125, %s126
      %p138 = scmp.eq.s32.totalorder %s32, 1
      %p139 = por %p137, %p138
      %p141 = scmp.ne.s32.totalorder %s126, %s140
      %p142 = scmp.eq.s32.totalorder %s32, 0
      %p143 = por %p141, %p142
      %s145 = sadd.s32 %s144, 1
      %p148 = scmp.eq.s32.totalorder %s26, 1
      %p149 = scmp.ne.s32.totalorder %s144, %s146
      %p150 = scmp.eq.s32.totalorder %s26, 0
      %p151 = por %p149, %p150
      %p152 = scmp.ne.s32.totalorder %s144, %s146
      %p153 = scmp.eq.s32.totalorder %s31, 1
      %p154 = por %p152, %p153
      %p155 = scmp.ne.s32.totalorder %s146, %s147
      %p156 = scmp.eq.s32.totalorder %s31, 0
      %p157 = por %p155, %p156
      %p158 = scmp.ne.s32.totalorder %s146, %s147
      %p159 = scmp.eq.s32.totalorder %s32, 1
      %p160 = por %p158, %p159
      %p162 = scmp.ne.s32.totalorder %s147, %s161
      %p163 = scmp.eq.s32.totalorder %s32, 0
      %p164 = por %p162, %p163
      %s166 = sadd.s32 %s165, 1
      %p169 = scmp.eq.s32.totalorder %s26, 1
      %p170 = scmp.ne.s32.totalorder %s165, %s167
      %p171 = scmp.eq.s32.totalorder %s26, 0
      %p172 = por %p170, %p171
      %p173 = scmp.ne.s32.totalorder %s165, %s167
      %p174 = scmp.eq.s32.totalorder %s31, 1
      %p175 = por %p173, %p174
      %p176 = scmp.ne.s32.totalorder %s167, %s168
      %p177 = scmp.eq.s32.totalorder %s31, 0
      %p178 = por %p176, %p177
      %p179 = scmp.ne.s32.totalorder %s167, %s168
      %p180 = scmp.eq.s32.totalorder %s32, 1
      %p181 = por %p179, %p180
      %p183 = scmp.ne.s32.totalorder %s168, %s182
      %p184 = scmp.eq.s32.totalorder %s32, 0
      %p185 = por %p183, %p184
      %s187 = sadd.s32 %s186, 1
      %p190 = scmp.eq.s32.totalorder %s26, 1
      %p191 = scmp.ne.s32.totalorder %s186, %s188
      %p192 = scmp.eq.s32.totalorder %s26, 0
      %p193 = por %p191, %p192
      %p194 = scmp.ne.s32.totalorder %s186, %s188
      %p195 = scmp.eq.s32.totalorder %s31, 1
      %p196 = por %p194, %p195
      %p197 = scmp.ne.s32.totalorder %s188, %s189
      %p198 = scmp.eq.s32.totalorder %s31, 0
      %p199 = por %p197, %p198
      %p200 = scmp.ne.s32.totalorder %s188, %s189
      %p201 = scmp.eq.s32.totalorder %s32, 1
      %p202 = por %p200, %p201
      %p204 = scmp.ne.s32.totalorder %s189, %s203
      %p205 = scmp.eq.s32.totalorder %s32, 0
      %p206 = por %p204, %p205
      %s208 = sadd.s32 %s207, 1
      %p211 = scmp.eq.s32.totalorder %s26, 1
      %p212 = scmp.ne.s32.totalorder %s207, %s209
      %p213 = scmp.eq.s32.totalorder %s26, 0
      %p214 = por %p212, %p213
      %p215 = scmp.ne.s32.totalorder %s207, %s209
      %p216 = scmp.eq.s32.totalorder %s31, 1
      %p217 = por %p215, %p216
      %p218 = scmp.ne.s32.totalorder %s209, %s210
      %p219 = scmp.eq.s32.totalorder %s31, 0
      %p220 = por %p218, %p219
      %p221 = scmp.ne.s32.totalorder %s209, %s210
      %p222 = scmp.eq.s32.totalorder %s32, 1
      %p223 = por %p221, %p222
      %p225 = scmp.ne.s32.totalorder %s210, %s224
      %p226 = scmp.eq.s32.totalorder %s32, 0
      %p227 = por %p225, %p226
      %s229 = sadd.s32 %s228, 1
      %p232 = scmp.eq.s32.totalorder %s26, 1
      %p233 = scmp.ne.s32.totalorder %s228, %s230
      %p234 = scmp.eq.s32.totalorder %s26, 0
      %p235 = por %p233, %p234
      %p236 = scmp.ne.s32.totalorder %s228, %s230
      %p237 = scmp.eq.s32.totalorder %s31, 1
      %p238 = por %p236, %p237
      %p239 = scmp.ne.s32.totalorder %s230, %s231
      %p240 = scmp.eq.s32.totalorder %s31, 0
      %p241 = por %p239, %p240
      %p242 = scmp.ne.s32.totalorder %s230, %s231
      %p243 = scmp.eq.s32.totalorder %s32, 1
      %p244 = por %p242, %p243
      %p246 = scmp.ne.s32.totalorder %s231, %s245
      %p247 = scmp.eq.s32.totalorder %s32, 0
      %p248 = por %p246, %p247
      %s250 = sadd.s32 %s249, 1
      %p253 = scmp.eq.s32.totalorder %s26, 1
      %p254 = scmp.ne.s32.totalorder %s249, %s251
      %p255 = scmp.eq.s32.totalorder %s26, 0
      %p256 = por %p254, %p255
      %p257 = scmp.ne.s32.totalorder %s249, %s251
      %p258 = scmp.eq.s32.totalorder %s31, 1
      %p259 = por %p257, %p258
      %p260 = scmp.ne.s32.totalorder %s251, %s252
      %p261 = scmp.eq.s32.totalorder %s31, 0
      %p262 = por %p260, %p261
      %p263 = scmp.ne.s32.totalorder %s251, %s252
      %p264 = scmp.eq.s32.totalorder %s32, 1
      %p265 = por %p263, %p264
      %p267 = scmp.ne.s32.totalorder %s252, %s266
      %p268 = scmp.eq.s32.totalorder %s32, 0
      %p269 = por %p267, %p268
      %s271 = sadd.s32 %s270, 1
      %p274 = scmp.eq.s32.totalorder %s26, 1
      %p275 = scmp.ne.s32.totalorder %s270, %s272
      %p276 = scmp.eq.s32.totalorder %s26, 0
      %p277 = por %p275, %p276
      %p278 = scmp.ne.s32.totalorder %s270, %s272
      %p279 = scmp.eq.s32.totalorder %s31, 1
      %p280 = por %p278, %p279
      %p281 = scmp.ne.s32.totalorder %s272, %s273
      %p282 = scmp.eq.s32.totalorder %s31, 0
      %p283 = por %p281, %p282
      %p284 = scmp.ne.s32.totalorder %s272, %s273
      %p285 = scmp.eq.s32.totalorder %s32, 1
      %p286 = por %p284, %p285
      %p288 = scmp.ne.s32.totalorder %s273, %s287
      %p289 = scmp.eq.s32.totalorder %s32, 0
      %p290 = por %p288, %p289
      %s292 = sadd.s32 %s291, 1
      %p295 = scmp.eq.s32.totalorder %s26, 1
      %p296 = scmp.ne.s32.totalorder %s291, %s293
      %p297 = scmp.eq.s32.totalorder %s26, 0
      %p298 = por %p296, %p297
      %p299 = scmp.ne.s32.totalorder %s291, %s293
      %p300 = scmp.eq.s32.totalorder %s31, 1
      %p301 = por %p299, %p300
      %p302 = scmp.ne.s32.totalorder %s293, %s294
      %p303 = scmp.eq.s32.totalorder %s31, 0
      %p304 = por %p302, %p303
      %p305 = scmp.ne.s32.totalorder %s293, %s294
      %p306 = scmp.eq.s32.totalorder %s32, 1
      %p307 = por %p305, %p306
      %p309 = scmp.ne.s32.totalorder %s294, %s308
      %p310 = scmp.eq.s32.totalorder %s32, 0
      %p311 = por %p309, %p310
      %s312 = ssub.s32 %s26, %s33
      %p313 = scmp.eq.s32.totalorder %s312, 0
      %s315 = sadd.s32 %s314, 1
      %s316 = scalar_select %p313, %s314, %s315
      %p319 = pneg %p313
      %p320 = scmp.eq.s32.totalorder %s26, 1
      %p321 = por %p319, %p320
      %p322 = scmp.ne.s32.totalorder %s314, %s317
      %p323 = scmp.eq.s32.totalorder %s26, 0
      %p324 = por %p322, %p323
      %p325 = scmp.ne.s32.totalorder %s314, %s317
      %p326 = scmp.eq.s32.totalorder %s31, 1
      %p327 = por %p325, %p326
      %p328 = scmp.ne.s32.totalorder %s317, %s318
      %p329 = scmp.eq.s32.totalorder %s31, 0
      %p330 = por %p328, %p329
      %p331 = scmp.ne.s32.totalorder %s317, %s318
      %p332 = scmp.eq.s32.totalorder %s32, 1
      %p333 = por %p331, %p332
      %p335 = scmp.ne.s32.totalorder %s318, %s334
      %p336 = scmp.eq.s32.totalorder %s32, 0
      %p337 = por %p335, %p336
      %s338 = ssub.s32 %s26, %s33
      %p339 = scmp.eq.s32.totalorder %s338, 0
      %s341 = sadd.s32 %s340, 1
      %s342 = scalar_select %p339, %s340, %s341
      %p345 = pneg %p339
      %p346 = scmp.eq.s32.totalorder %s26, 1
      %p347 = por %p345, %p346
      %p348 = scmp.ne.s32.totalorder %s340, %s343
      %p349 = scmp.eq.s32.totalorder %s26, 0
      %p350 = por %p348, %p349
      %p351 = scmp.ne.s32.totalorder %s340, %s343
      %p352 = scmp.eq.s32.totalorder %s31, 1
      %p353 = por %p351, %p352
      %p354 = scmp.ne.s32.totalorder %s343, %s344
      %p355 = scmp.eq.s32.totalorder %s31, 0
      %p356 = por %p354, %p355
      %p357 = scmp.ne.s32.totalorder %s343, %s344
      %p358 = scmp.eq.s32.totalorder %s32, 1
      %p359 = por %p357, %p358
      %p361 = scmp.ne.s32.totalorder %s344, %s360
      %p362 = scmp.eq.s32.totalorder %s32, 0
      %p363 = por %p361, %p362
      %p364 = scmp.le.s32.totalorder 1, %s26
      %p365 = scmp.lt.s32.totalorder %s26, 3
      %p366 = pnand %p364, %p365
      %p367 = pneg %p366
      // Predicated region
      $region9: #{fwd.1} parent=5 // pred_check
        _
      $region10: #{fwd.1} parent=5 // pred_check_branch
        %369 = sbr.rel (%p366) target = $region12
      $region11: #{fwd.1} parent=5 // pred_region
        %s370 = ssub.s32 %s26, 1
        // Predicated region
        $region13: #{fwd.1} parent=11 // pred_check
          %p371 = pneg %p73
        $region14: #{fwd.1} parent=11 // pred_check_branch
          %373 = sbr.rel (%p371) target = $region16
        $region15: #{fwd.1} parent=11 // pred_region
          _
        $region16: #{fwd.1} parent=11 // pred_fallthru
          _
        // Predicated region
        $region17: #{fwd.1} parent=11 // pred_check
          %p374 = pneg %p94
        $region18: #{fwd.1} parent=11 // pred_check_branch
          %376 = sbr.rel (%p374) target = $region20
        $region19: #{fwd.1} parent=11 // pred_region
          _
        $region20: #{fwd.1} parent=11 // pred_fallthru
          _
        // Predicated region
        $region21: #{fwd.1} parent=11 // pred_check
          %p377 = pneg %p115
        $region22: #{fwd.1} parent=11 // pred_check_branch
          %379 = sbr.rel (%p377) target = $region24
        $region23: #{fwd.1} parent=11 // pred_region
          %s381 = ssub.s32 12288, 12288
          %382 = vsyncadd [#allocation4], %s381
          %s383 = sshll.u32 [#allocation3], 4
          %s384 = int_to_ptr.vmem [resolvable:$true] %s383
          %389 = dma.hbm_to_vmem [thread:$0]  %s3, 12288, %s384, [#allocation4], 256, 256, 16
        $region24: #{fwd.1} parent=11 // pred_fallthru
          _
        // Predicated region
        $region25: #{fwd.1} parent=11 // pred_check
          %p390 = pneg %p136
        $region26: #{fwd.1} parent=11 // pred_check_branch
          %392 = sbr.rel (%p390) target = $region28
        $region27: #{fwd.1} parent=11 // pred_region
          _
        $region28: #{fwd.1} parent=11 // pred_fallthru
          _
        // Predicated region
        $region29: #{fwd.1} parent=11 // pred_check
          %p393 = pneg %p157
        $region30: #{fwd.1} parent=11 // pred_check_branch
          %395 = sbr.rel (%p393) target = $region32
        $region31: #{fwd.1} parent=11 // pred_region
          %s397 = ssub.s32 16384, 16384
          %398 = vsyncadd [#allocation7], %s397
          %s399 = sshll.u32 [#allocation6], 4
          %s400 = int_to_ptr.vmem [resolvable:$true] %s399
          %405 = dma.hbm_to_vmem [thread:$0]  %s5, 16384, %s400, [#allocation7], 256, 256, 16
        $region32: #{fwd.1} parent=11 // pred_fallthru
          _
        // Predicated region
        $region33: #{fwd.1} parent=11 // pred_check
          %p406 = pneg %p178
        $region34: #{fwd.1} parent=11 // pred_check_branch
          %408 = sbr.rel (%p406) target = $region36
        $region35: #{fwd.1} parent=11 // pred_region
          _
        $region36: #{fwd.1} parent=11 // pred_fallthru
          _
        // Predicated region
        $region37: #{fwd.1} parent=11 // pred_check
          %p409 = pneg %p199
        $region38: #{fwd.1} parent=11 // pred_check_branch
          %411 = sbr.rel (%p409) target = $region40
        $region39: #{fwd.1} parent=11 // pred_region
          %s413 = ssub.s32 16384, 16384
          %414 = vsyncadd [#allocation7], %s413
          %s415 = sshll.u32 [#allocation8], 4
          %s416 = int_to_ptr.vmem [resolvable:$true] %s415
          %421 = dma.hbm_to_vmem [thread:$0]  %s7, 16384, %s416, [#allocation7], 512, 512, 32
        $region40: #{fwd.1} parent=11 // pred_fallthru
          _
        // Predicated region
        $region41: #{fwd.1} parent=11 // pred_check
          %p422 = pneg %p220
        $region42: #{fwd.1} parent=11 // pred_check_branch
          %424 = sbr.rel (%p422) target = $region44
        $region43: #{fwd.1} parent=11 // pred_region
          _
        $region44: #{fwd.1} parent=11 // pred_fallthru
          _
        // Predicated region
        $region45: #{fwd.1} parent=11 // pred_check
          %p425 = pneg %p241
        $region46: #{fwd.1} parent=11 // pred_check_branch
          %427 = sbr.rel (%p425) target = $region48
        $region47: #{fwd.1} parent=11 // pred_region
          _
        $region48: #{fwd.1} parent=11 // pred_fallthru
          _
        // Predicated region
        $region49: #{fwd.1} parent=11 // pred_check
          %p428 = pneg %p262
        $region50: #{fwd.1} parent=11 // pred_check_branch
          %430 = sbr.rel (%p428) target = $region52
        $region51: #{fwd.1} parent=11 // pred_region
          _
        $region52: #{fwd.1} parent=11 // pred_fallthru
          _
        // Predicated region
        $region53: #{fwd.1} parent=11 // pred_check
          %p431 = pneg %p283
        $region54: #{fwd.1} parent=11 // pred_check_branch
          %433 = sbr.rel (%p431) target = $region56
        $region55: #{fwd.1} parent=11 // pred_region
          _
        $region56: #{fwd.1} parent=11 // pred_fallthru
          _
        // Predicated region
        $region57: #{fwd.1} parent=11 // pred_check
          %p434 = pneg %p304
        $region58: #{fwd.1} parent=11 // pred_check_branch
          %436 = sbr.rel (%p434) target = $region60
        $region59: #{fwd.1} parent=11 // pred_region
          _
        $region60: #{fwd.1} parent=11 // pred_fallthru
          _
      $region12: #{fwd.1} parent=5 // pred_fallthru
        _
      %p437 = scmp.lt.s32.totalorder %s26, 2
      // Predicated region
      $region61: #{fwd.1} parent=5 // pred_check
        %p438 = pneg %p437
      $region62: #{fwd.1} parent=5 // pred_check_branch
        %440 = sbr.rel (%p438) target = $region64
      $region63: #{fwd.1} parent=5 // pred_region
        // Predicated region
        $region65: #{fwd.1} parent=63 // pred_check
          %p441 = pneg %p46
        $region66: #{fwd.1} parent=63 // pred_check_branch
          %443 = sbr.rel (%p441) target = $region68
        $region67: #{fwd.1} parent=63 // pred_region
          %p444 = scmp.lt.s32.totalorder %s26, 1
          %s445 = scalar_select %p444, %s26, 1
          %s446 = smul.addr %s445, 3
          %s447 = smul.addr %s446, 8
          %s448 = scalar_lea.vmem %s0, %s447
        $region68: #{fwd.1} parent=63 // pred_fallthru
          _
      $region64: #{fwd.1} parent=5 // pred_fallthru
        _
      %p449 = scmp.le.s32.totalorder 1, %s26
      %p450 = scmp.lt.s32.totalorder %s26, 3
      %p451 = pnand %p449, %p450
      %p452 = pneg %p451
      // Predicated region
      $region69: #{fwd.1} parent=5 // pred_check
        _
      $region70: #{fwd.1} parent=5 // pred_check_branch
        %454 = sbr.rel (%p451) target = $region72
      $region71: #{fwd.1} parent=5 // pred_region
        %s455 = ssub.s32 %s26, 1
        // Predicated region
        $region73: #{fwd.1} parent=71 // pred_check
          %p456 = pneg %p115
        $region74: #{fwd.1} parent=71 // pred_check_branch
          %458 = sbr.rel (%p456) target = $region76
        $region75: #{fwd.1} parent=71 // pred_region
          %459 = dma.done [#allocation4], 12288
        $region76: #{fwd.1} parent=71 // pred_fallthru
          _
        // Predicated region
        $region77: #{fwd.1} parent=71 // pred_check
          %p460 = pneg %p157
        $region78: #{fwd.1} parent=71 // pred_check_branch
          %462 = sbr.rel (%p460) target = $region80
        $region79: #{fwd.1} parent=71 // pred_region
          %463 = dma.done [#allocation7], 16384
        $region80: #{fwd.1} parent=71 // pred_fallthru
          _
        // Predicated region
        $region81: #{fwd.1} parent=71 // pred_check
          %p464 = pneg %p199
        $region82: #{fwd.1} parent=71 // pred_check_branch
          %466 = sbr.rel (%p464) target = $region84
        $region83: #{fwd.1} parent=71 // pred_region
          %467 = dma.done [#allocation7], 16384
        $region84: #{fwd.1} parent=71 // pred_fallthru
          _
        %p468 = scmp.lt.s32.totalorder %s31, 1
        %s469 = scalar_select %p468, %s31, 1
        %s470 = smul.addr %s469, 3
        %s471 = smul.addr %s470, 8
        %s472 = scalar_lea.vmem %s0, %s471
        %p473 = pneg %p52
        %p474 = pneg %p49
        %p475 = pneg %p73
        %p476 = pneg %p70
        %p477 = pneg %p94
        %p478 = pneg %p91
        %p479 = pneg %p115
        %p480 = pneg %p112
        %p481 = pneg %p136
        %p482 = pneg %p133
        %p483 = pneg %p157
        %p484 = pneg %p154
        %p485 = pneg %p178
        %p486 = pneg %p175
        %p487 = pneg %p199
        %p488 = pneg %p196
        %p489 = pneg %p220
        %p490 = pneg %p217
        %p491 = pneg %p241
        %p492 = pneg %p238
        %p493 = pneg %p262
        %p494 = pneg %p259
        %p495 = pneg %p283
        %p496 = pneg %p280
        %p497 = pneg %p304
        %p498 = pneg %p301
        %p499 = pneg %p330
        %p500 = pneg %p327
        %s501 = sand.u32 %s317, 1
        %s502 = scalar_lea.sflag [#allocation5], %s501
        %s503 = sand.u32 %s317, 1
        %s504 = smul.addr %s503, 16
        %s505 = scalar_lea.vmem [#allocation9], %s504
        %p506 = pneg %p356
        %p507 = pneg %p353
        %p508 = scmp.lt.s32.totalorder %s31, 1
        %s509 = scalar_select %p508, %s31, 1
        %s510 = smul.addr %s509, 2
        %s511 = scalar_lea.vmem %s14, %s510
        %p512 = scmp.lt.s32.totalorder %s31, 1
        %s513 = scalar_select %p512, %s31, 1
        %s514 = smul.addr %s513, 3
        %s515 = smul.addr %s514, 8
        %s516 = scalar_lea.vmem %s0, %s515
        %p517 = scmp.lt.s32.totalorder %s31, 1
        %s518 = scalar_select %p517, %s31, 1
        %s519 = smul.addr %s518, 2
        %s520 = scalar_lea.vmem %s14, %s519
        %v521 = vld [vmem:[%s516] sm:$0xff]
        %v522 = vld [vmem:[%s516 + $0x8] sm:$0xff]
        %v523 = vld [vmem:[%s516 + $0x10] sm:$0x3]
        %v524 = vld [vmem:[%s1] sm:$0xff]
        %v525 = vld [vmem:[%s1 + $0x8] sm:$0xff]
        %v526 = vld [vmem:[%s1 + $0x10] sm:$0xff]
        %v527 = vld [vmem:[%s1 + $0x18] sm:$0xff]
        %v528 = vld [vmem:[%s1 + $0x20] sm:$0x3]
        %v529 = vld [vmem:[%s1 + $0x28] sm:$0x3]
        %s530 = scalar_lea.vmem %s1, 48
        %v531 = vld [vmem:[%s530] sm:$0xff]
        %v532 = vld [vmem:[%s530 + $0x8] sm:$0xff]
        %v533 = vld [vmem:[%s530 + $0x10] sm:$0xff]
        %v534 = vld [vmem:[%s530 + $0x18] sm:$0xff]
        %v535 = vld [vmem:[%s530 + $0x20] sm:$0x3]
        %v536 = vld [vmem:[%s530 + $0x28] sm:$0x3]
        %vm540 = vcmask 1046528
        %v541 = vrot.slane %v521, 1
        %v542 = vrot.slane %v522, 1
        %v543 = vsel %vm540, %v541, %v542
        %v544 = vrot.slane %v523, 1
        %v545 = vsel %vm540, %v542, %v544
        %vm546 = vcmask 146432
        %v547 = vsel %vm546, %v543, 0
        %v549 = vsel %vm546, %v545, 0
        %vm551 = vcmask 1041408
        %v553 = vsel %vm551, %v535, 0
        %v556 = vsel %vm551, %v536, 0
        %558 = vmatprep.subr.mxu0 %v532
        %559 = vmatpush1.msra.mxu0 %v531
        %560 = vmatprep.subr.mxu0 %v534
        %561 = vmatpush1.msra.mxu0 %v533
        %562 = vmatprep.subr.mxu0 %v556
        %563 = vmatpush1.msra.mxu0 %v553
        %564 = vmatprep.subr.mxu0 0.0
        %565 = vmatpush1.msra.mxu0 0.0
        %566 = vmatprep.subr.mxu0 0.0
        %567 = vmatpush1.msra.mxu0 0.0
        %568 = vmatprep.subr.mxu0 0.0
        %569 = vmatpush1.msra.mxu0 0.0
        %570 = vmatprep.subr.mxu0 0.0
        %571 = vmatpush1.msra.mxu0 0.0
        %572 = vmatprep.subr.mxu0 0.0
        %573 = vmatpush1.msra.mxu0 0.0
        %574 = vmatprep.subr.mxu0 0.0
        %575 = vmatpush1.msra.mxu0 0.0
        %576 = vmatprep.subr.mxu0 0.0
        %577 = vmatpush1.msra.mxu0 0.0
        %578 = vmatprep.subr.mxu0 0.0
        %579 = vmatpush1.msra.mxu0 0.0
        %580 = vmatprep.subr.mxu0 0.0
        %581 = vmatpush1.msra.mxu0 0.0
        %582 = vmatprep.subr.mxu0 0.0
        %583 = vmatpush1.msra.mxu0 0.0
        %584 = vmatprep.subr.mxu0 0.0
        %585 = vmatpush1.msra.mxu0 0.0
        %586 = vmatprep.subr.mxu0 0.0
        %587 = vmatpush1.msra.mxu0 0.0
        %588 = vmatprep.subr.mxu0 0.0
        %589 = vmatpush1.msra.mxu0 0.0
        %590 = vmatprep.subr.mxu0 0.0
        %591 = vmatpush1.msra.mxu0 0.0
        %592 = vmatprep.subr.mxu0 0.0
        %593 = vmatpush1.msra.mxu0 0.0
        %594 = vmatprep.subr.mxu0 0.0
        %595 = vmatpush1.msra.mxu0 0.0
        %596 = vmatprep.subr.mxu0 0.0
        %597 = vmatpush1.msra.mxu0 0.0
        %598 = vmatprep.subr.mxu0 0.0
        %599 = vmatpush1.msra.mxu0 0.0
        %600 = vmatprep.subr.mxu0 0.0
        %601 = vmatpush1.msra.mxu0 0.0
        %602 = vmatprep.subr.mxu0 0.0
        %603 = vmatpush1.msra.mxu0 0.0
        %604 = vmatprep.subr.mxu0 0.0
        %605 = vmatpush1.msra.mxu0 0.0
        %606 = vmatprep.subr.mxu0 0.0
        %607 = vmatpush1.msra.mxu0 0.0
        %608 = vmatprep.subr.mxu0 0.0
        %609 = vmatpush1.msra.mxu0 0.0
        %610 = vmatprep.subr.mxu0 0.0
        %611 = vmatpush1.msra.mxu0 0.0
        %612 = vmatprep.subr.mxu0 0.0
        %613 = vmatpush1.msra.mxu0 0.0
        %614 = vmatprep.subr.mxu0 0.0
        %615 = vmatpush1.msra.mxu0 0.0
        %616 = vmatprep.subr.mxu0 0.0
        %617 = vmatpush1.msra.mxu0 0.0
        %618 = vmatprep.subr.mxu0 0.0
        %619 = vmatpush1.msra.mxu0 0.0
        %620 = vmatprep.subr.mxu0 0.0
        %621 = vmatpush1.msra.mxu0 0.0
        %622 = vmatprep.mubr.f32.mxu0 0.0
        %623 = vmatmul.mubr.f32.gmra.mrb[0].mxu0 %v547
        %v624 = vpop.f32.mrb[0].mxu0
        %v625 = vadd.f32 0.0, %v624
        %v626 = vpop.f32.mrb[0].mxu0
        %v627 = vadd.f32 0.0, %v626
        %628 = vmatprep.mubr.f32.mxu0 0.0
        %629 = vmatmul.mubr.f32.gmra.mrb[0].mxu0 %v549
        %v630 = vpop.f32.mrb[0].mxu0
        %v631 = vadd.f32 0.0, %v630
        %v632 = vpop.f32.mrb[0].mxu0
        %v633 = vadd.f32 0.0, %v632
        %634 = vdwg.mxu0
        %v635 = vsel %vm546, %v521, 0
        %v637 = vsel %vm546, %v522, 0
        %v640 = vsel %vm551, %v528, 0
        %v643 = vsel %vm551, %v529, 0
        %645 = vmatprep.subr.mxu0 %v525
        %646 = vmatpush1.msra.mxu0 %v524
        %647 = vmatprep.subr.mxu0 %v527
        %648 = vmatpush1.msra.mxu0 %v526
        %649 = vmatprep.subr.mxu0 %v643
        %650 = vmatpush1.msra.mxu0 %v640
        %651 = vmatprep.subr.mxu0 0.0
        %652 = vmatpush1.msra.mxu0 0.0
        %653 = vmatprep.subr.mxu0 0.0
        %654 = vmatpush1.msra.mxu0 0.0
        %655 = vmatprep.subr.mxu0 0.0
        %656 = vmatpush1.msra.mxu0 0.0
        %657 = vmatprep.subr.mxu0 0.0
        %658 = vmatpush1.msra.mxu0 0.0
        %659 = vmatprep.subr.mxu0 0.0
        %660 = vmatpush1.msra.mxu0 0.0
        %661 = vmatprep.subr.mxu0 0.0
        %662 = vmatpush1.msra.mxu0 0.0
        %663 = vmatprep.subr.mxu0 0.0
        %664 = vmatpush1.msra.mxu0 0.0
        %665 = vmatprep.subr.mxu0 0.0
        %666 = vmatpush1.msra.mxu0 0.0
        %667 = vmatprep.subr.mxu0 0.0
        %668 = vmatpush1.msra.mxu0 0.0
        %669 = vmatprep.subr.mxu0 0.0
        %670 = vmatpush1.msra.mxu0 0.0
        %671 = vmatprep.subr.mxu0 0.0
        %672 = vmatpush1.msra.mxu0 0.0
        %673 = vmatprep.subr.mxu0 0.0
        %674 = vmatpush1.msra.mxu0 0.0
        %675 = vmatprep.subr.mxu0 0.0
        %676 = vmatpush1.msra.mxu0 0.0
        %677 = vmatprep.subr.mxu0 0.0
        %678 = vmatpush1.msra.mxu0 0.0
        %679 = vmatprep.subr.mxu0 0.0
        %680 = vmatpush1.msra.mxu0 0.0
        %681 = vmatprep.subr.mxu0 0.0
        %682 = vmatpush1.msra.mxu0 0.0
        %683 = vmatprep.subr.mxu0 0.0
        %684 = vmatpush1.msra.mxu0 0.0
        %685 = vmatprep.subr.mxu0 0.0
        %686 = vmatpush1.msra.mxu0 0.0
        %687 = vmatprep.subr.mxu0 0.0
        %688 = vmatpush1.msra.mxu0 0.0
        %689 = vmatprep.subr.mxu0 0.0
        %690 = vmatpush1.msra.mxu0 0.0
        %691 = vmatprep.subr.mxu0 0.0
        %692 = vmatpush1.msra.mxu0 0.0
        %693 = vmatprep.subr.mxu0 0.0
        %694 = vmatpush1.msra.mxu0 0.0
        %695 = vmatprep.subr.mxu0 0.0
        %696 = vmatpush1.msra.mxu0 0.0
        %697 = vmatprep.subr.mxu0 0.0
        %698 = vmatpush1.msra.mxu0 0.0
        %699 = vmatprep.subr.mxu0 0.0
        %700 = vmatpush1.msra.mxu0 0.0
        %701 = vmatprep.subr.mxu0 0.0
        %702 = vmatpush1.msra.mxu0 0.0
        %703 = vmatprep.subr.mxu0 0.0
        %704 = vmatpush1.msra.mxu0 0.0
        %705 = vmatprep.subr.mxu0 0.0
        %706 = vmatpush1.msra.mxu0 0.0
        %707 = vmatprep.subr.mxu0 0.0
        %708 = vmatpush1.msra.mxu0 0.0
        %709 = vmatprep.mubr.f32.mxu0 0.0
        %710 = vmatmul.mubr.f32.gmra.mrb[0].mxu0 %v635
        %v711 = vpop.f32.mrb[0].mxu0
        %v712 = vadd.f32 %v625, %v711
        %v713 = vpop.f32.mrb[0].mxu0
        %v714 = vadd.f32 %v627, %v713
        %715 = vmatprep.mubr.f32.mxu0 0.0
        %716 = vmatmul.mubr.f32.gmra.mrb[0].mxu0 %v637
        %v717 = vpop.f32.mrb[0].mxu0
        %v718 = vadd.f32 %v631, %v717
        %v719 = vpop.f32.mrb[0].mxu0
        %v720 = vadd.f32 %v633, %v719
        %721 = vdwg.mxu0
        %s722 = scalar_lea.vmem %s1, 96
        %v723 = vld [vmem:[%s722] sm:$0xff]
        %v724 = vld [vmem:[%s722 + $0x8] sm:$0xff]
        %v725 = vld [vmem:[%s722 + $0x10] sm:$0xff]
        %v726 = vld [vmem:[%s722 + $0x18] sm:$0xff]
        %v727 = vld [vmem:[%s722 + $0x20] sm:$0x3]
        %v728 = vld [vmem:[%s722 + $0x28] sm:$0x3]
        %vm729 = vcmask 1045504
        %v730 = vrot.slane %v521, 2
        %v731 = vrot.slane %v522, 2
        %v732 = vsel %vm729, %v730, %v731
        %v733 = vrot.slane %v523, 2
        %v734 = vsel %vm729, %v731, %v733
        %v735 = vsel %vm546, %v732, 0
        %v737 = vsel %vm546, %v734, 0
        %v740 = vsel %vm551, %v727, 0
        %v743 = vsel %vm551, %v728, 0
        %745 = vmatprep.subr.mxu0 %v724
        %746 = vmatpush1.msra.mxu0 %v723
        %747 = vmatprep.subr.mxu0 %v726
        %748 = vmatpush1.msra.mxu0 %v725
        %749 = vmatprep.subr.mxu0 %v743
        %750 = vmatpush1.msra.mxu0 %v740
        %751 = vmatprep.subr.mxu0 0.0
        %752 = vmatpush1.msra.mxu0 0.0
        %753 = vmatprep.subr.mxu0 0.0
        %754 = vmatpush1.msra.mxu0 0.0
        %755 = vmatprep.subr.mxu0 0.0
        %756 = vmatpush1.msra.mxu0 0.0
        %757 = vmatprep.subr.mxu0 0.0
        %758 = vmatpush1.msra.mxu0 0.0
        %759 = vmatprep.subr.mxu0 0.0
        %760 = vmatpush1.msra.mxu0 0.0
        %761 = vmatprep.subr.mxu0 0.0
        %762 = vmatpush1.msra.mxu0 0.0
        %763 = vmatprep.subr.mxu0 0.0
        %764 = vmatpush1.msra.mxu0 0.0
        %765 = vmatprep.subr.mxu0 0.0
        %766 = vmatpush1.msra.mxu0 0.0
        %767 = vmatprep.subr.mxu0 0.0
        %768 = vmatpush1.msra.mxu0 0.0
        %769 = vmatprep.subr.mxu0 0.0
        %770 = vmatpush1.msra.mxu0 0.0
        %771 = vmatprep.subr.mxu0 0.0
        %772 = vmatpush1.msra.mxu0 0.0
        %773 = vmatprep.subr.mxu0 0.0
        %774 = vmatpush1.msra.mxu0 0.0
        %775 = vmatprep.subr.mxu0 0.0
        %776 = vmatpush1.msra.mxu0 0.0
        %777 = vmatprep.subr.mxu0 0.0
        %778 = vmatpush1.msra.mxu0 0.0
        %779 = vmatprep.subr.mxu0 0.0
        %780 = vmatpush1.msra.mxu0 0.0
        %781 = vmatprep.subr.mxu0 0.0
        %782 = vmatpush1.msra.mxu0 0.0
        %783 = vmatprep.subr.mxu0 0.0
        %784 = vmatpush1.msra.mxu0 0.0
        %785 = vmatprep.subr.mxu0 0.0
        %786 = vmatpush1.msra.mxu0 0.0
        %787 = vmatprep.subr.mxu0 0.0
        %788 = vmatpush1.msra.mxu0 0.0
        %789 = vmatprep.subr.mxu0 0.0
        %790 = vmatpush1.msra.mxu0 0.0
        %791 = vmatprep.subr.mxu0 0.0
        %792 = vmatpush1.msra.mxu0 0.0
        %793 = vmatprep.subr.mxu0 0.0
        %794 = vmatpush1.msra.mxu0 0.0
        %795 = vmatprep.subr.mxu0 0.0
        %796 = vmatpush1.msra.mxu0 0.0
        %797 = vmatprep.subr.mxu0 0.0
        %798 = vmatpush1.msra.mxu0 0.0
        %799 = vmatprep.subr.mxu0 0.0
        %800 = vmatpush1.msra.mxu0 0.0
        %801 = vmatprep.subr.mxu0 0.0
        %802 = vmatpush1.msra.mxu0 0.0
        %803 = vmatprep.subr.mxu0 0.0
        %804 = vmatpush1.msra.mxu0 0.0
        %805 = vmatprep.subr.mxu0 0.0
        %806 = vmatpush1.msra.mxu0 0.0
        %807 = vmatprep.subr.mxu0 0.0
        %808 = vmatpush1.msra.mxu0 0.0
        %809 = vmatprep.mubr.f32.mxu0 0.0
        %810 = vmatmul.mubr.f32.gmra.mrb[0].mxu0 %v735
        %v811 = vpop.f32.mrb[0].mxu0
        %v812 = vadd.f32 0.0, %v811
        %v813 = vpop.f32.mrb[0].mxu0
        %v814 = vadd.f32 0.0, %v813
        %815 = vmatprep.mubr.f32.mxu0 0.0
        %816 = vmatmul.mubr.f32.gmra.mrb[0].mxu0 %v737
        %v817 = vpop.f32.mrb[0].mxu0
        %v818 = vadd.f32 0.0, %v817
        %v819 = vpop.f32.mrb[0].mxu0
        %v820 = vadd.f32 0.0, %v819
        %821 = vdwg.mxu0
        %v822 = vadd.f32 %v712, %v812
        %v823 = vadd.f32 %v714, %v814
        %v824 = vadd.f32 %v718, %v818
        %v825 = vadd.f32 %v720, %v820
        %v826 = vmax.f32 %v822, %v823
        %v827 = vmax.f32 %v824, %v825
        %v828 = vlaneseq
        %v829 = vshrl.u32 %v828, 7
        %v830 = vlaneseq
        %v831 = vand.u32 %v830, 127
        %v832 = vmul.u32 %v829, 2
        %vm833 = vcmp.eq.s32.totalorder %v831, %v832
        %v834 = vsel %vm833, 1.0, 0.0
        %v835 = vadd.s32 %v832, 1
        %vm836 = vcmp.eq.s32.totalorder %v831, %v835
        %v837 = vsel %vm836, 1.0, 0.0
        %vm838 = vcmask 130048
        %v840 = vsel %vm838, %v834, 0
        %842 = vmatprep.subr.mxu0 0.0
        %843 = vmatpush1.msra.mxu0 %v826
        %844 = vmatprep.subr.mxu0 0.0
        %845 = vmatpush1.msra.mxu0 %v827
        %846 = vmatprep.subr.mxu0 0.0
        %847 = vmatpush1.msra.mxu0 0.0
        %848 = vmatprep.subr.mxu0 0.0
        %849 = vmatpush1.msra.mxu0 0.0
        %850 = vmatprep.subr.mxu0 0.0
        %851 = vmatpush1.msra.mxu0 0.0
        %852 = vmatprep.subr.mxu0 0.0
        %853 = vmatpush1.msra.mxu0 0.0
        %854 = vmatprep.subr.mxu0 0.0
        %855 = vmatpush1.msra.mxu0 0.0
        %856 = vmatprep.subr.mxu0 0.0
        %857 = vmatpush1.msra.mxu0 0.0
        %858 = vmatprep.subr.mxu0 0.0
        %859 = vmatpush1.msra.mxu0 0.0
        %860 = vmatprep.subr.mxu0 0.0
        %861 = vmatpush1.msra.mxu0 0.0
        %862 = vmatprep.subr.mxu0 0.0
        %863 = vmatpush1.msra.mxu0 0.0
        %864 = vmatprep.subr.mxu0 0.0
        %865 = vmatpush1.msra.mxu0 0.0
        %866 = vmatprep.subr.mxu0 0.0
        %867 = vmatpush1.msra.mxu0 0.0
        %868 = vmatprep.subr.mxu0 0.0
        %869 = vmatpush1.msra.mxu0 0.0
        %870 = vmatprep.subr.mxu0 0.0
        %871 = vmatpush1.msra.mxu0 0.0
        %872 = vmatprep.subr.mxu0 0.0
        %873 = vmatpush1.msra.mxu0 0.0
        %874 = vmatprep.subr.mxu0 0.0
        %875 = vmatpush1.msra.mxu0 0.0
        %876 = vmatprep.subr.mxu0 0.0
        %877 = vmatpush1.msra.mxu0 0.0
        %878 = vmatprep.subr.mxu0 0.0
        %879 = vmatpush1.msra.mxu0 0.0
        %880 = vmatprep.subr.mxu0 0.0
        %881 = vmatpush1.msra.mxu0 0.0
        %882 = vmatprep.subr.mxu0 0.0
        %883 = vmatpush1.msra.mxu0 0.0
        %884 = vmatprep.subr.mxu0 0.0
        %885 = vmatpush1.msra.mxu0 0.0
        %886 = vmatprep.subr.mxu0 0.0
        %887 = vmatpush1.msra.mxu0 0.0
        %888 = vmatprep.subr.mxu0 0.0
        %889 = vmatpush1.msra.mxu0 0.0
        %890 = vmatprep.subr.mxu0 0.0
        %891 = vmatpush1.msra.mxu0 0.0
        %892 = vmatprep.subr.mxu0 0.0
        %893 = vmatpush1.msra.mxu0 0.0
        %894 = vmatprep.subr.mxu0 0.0
        %895 = vmatpush1.msra.mxu0 0.0
        %896 = vmatprep.subr.mxu0 0.0
        %897 = vmatpush1.msra.mxu0 0.0
        %898 = vmatprep.subr.mxu0 0.0
        %899 = vmatpush1.msra.mxu0 0.0
        %900 = vmatprep.subr.mxu0 0.0
        %901 = vmatpush1.msra.mxu0 0.0
        %902 = vmatprep.subr.mxu0 0.0
        %903 = vmatpush1.msra.mxu0 0.0
        %904 = vmatprep.subr.mxu0 0.0
        %905 = vmatpush1.msra.mxu0 0.0
        %906 = vmatprep.mubr.f32.mxu0 0.0
        %907 = vmatmul.mubr.f32.gmra.mrb[0].mxu0 %v840
        %v908 = vpop.f32.mrb[0].mxu0
        %v909 = vadd.f32 0.0, %v908
        %v910 = vpop.f32.mrb[0].mxu0
        %911 = vdwg.mxu0
        %v913 = vsel %vm838, %v837, 0
        %915 = vmatprep.subr.mxu0 0.0
        %916 = vmatpush1.msra.mxu0 %v826
        %917 = vmatprep.subr.mxu0 0.0
        %918 = vmatpush1.msra.mxu0 %v827
        %919 = vmatprep.subr.mxu0 0.0
        %920 = vmatpush1.msra.mxu0 0.0
        %921 = vmatprep.subr.mxu0 0.0
        %922 = vmatpush1.msra.mxu0 0.0
        %923 = vmatprep.subr.mxu0 0.0
        %924 = vmatpush1.msra.mxu0 0.0
        %925 = vmatprep.subr.mxu0 0.0
        %926 = vmatpush1.msra.mxu0 0.0
        %927 = vmatprep.subr.mxu0 0.0
        %928 = vmatpush1.msra.mxu0 0.0
        %929 = vmatprep.subr.mxu0 0.0
        %930 = vmatpush1.msra.mxu0 0.0
        %931 = vmatprep.subr.mxu0 0.0
        %932 = vmatpush1.msra.mxu0 0.0
        %933 = vmatprep.subr.mxu0 0.0
        %934 = vmatpush1.msra.mxu0 0.0
        %935 = vmatprep.subr.mxu0 0.0
        %936 = vmatpush1.msra.mxu0 0.0
        %937 = vmatprep.subr.mxu0 0.0
        %938 = vmatpush1.msra.mxu0 0.0
        %939 = vmatprep.subr.mxu0 0.0
        %940 = vmatpush1.msra.mxu0 0.0
        %941 = vmatprep.subr.mxu0 0.0
        %942 = vmatpush1.msra.mxu0 0.0
        %943 = vmatprep.subr.mxu0 0.0
        %944 = vmatpush1.msra.mxu0 0.0
        %945 = vmatprep.subr.mxu0 0.0
        %946 = vmatpush1.msra.mxu0 0.0
        %947 = vmatprep.subr.mxu0 0.0
        %948 = vmatpush1.msra.mxu0 0.0
        %949 = vmatprep.subr.mxu0 0.0
        %950 = vmatpush1.msra.mxu0 0.0
        %951 = vmatprep.subr.mxu0 0.0
        %952 = vmatpush1.msra.mxu0 0.0
        %953 = vmatprep.subr.mxu0 0.0
        %954 = vmatpush1.msra.mxu0 0.0
        %955 = vmatprep.subr.mxu0 0.0
        %956 = vmatpush1.msra.mxu0 0.0
        %957 = vmatprep.subr.mxu0 0.0
        %958 = vmatpush1.msra.mxu0 0.0
        %959 = vmatprep.subr.mxu0 0.0
        %960 = vmatpush1.msra.mxu0 0.0
        %961 = vmatprep.subr.mxu0 0.0
        %962 = vmatpush1.msra.mxu0 0.0
        %963 = vmatprep.subr.mxu0 0.0
        %964 = vmatpush1.msra.mxu0 0.0
        %965 = vmatprep.subr.mxu0 0.0
        %966 = vmatpush1.msra.mxu0 0.0
        %967 = vmatprep.subr.mxu0 0.0
        %968 = vmatpush1.msra.mxu0 0.0
        %969 = vmatprep.subr.mxu0 0.0
        %970 = vmatpush1.msra.mxu0 0.0
        %971 = vmatprep.subr.mxu0 0.0
        %972 = vmatpush1.msra.mxu0 0.0
        %973 = vmatprep.subr.mxu0 0.0
        %974 = vmatpush1.msra.mxu0 0.0
        %975 = vmatprep.subr.mxu0 0.0
        %976 = vmatpush1.msra.mxu0 0.0
        %977 = vmatprep.subr.mxu0 0.0
        %978 = vmatpush1.msra.mxu0 0.0
        %979 = vmatprep.mubr.f32.mxu0 0.0
        %980 = vmatmul.mubr.f32.gmra.mrb[0].mxu0 %v913
        %v981 = vpop.f32.mrb[0].mxu0
        %v982 = vadd.f32 0.0, %v981
        %v983 = vpop.f32.mrb[0].mxu0
        %984 = vdwg.mxu0
        %v985 = vmax.f32 %v909, %v982
        %v986 = vld [vmem:[%s2] sm:$0x1]
        %v988 = vlaneseq
        %v989 = vshrl.u32 %v988, 7
        %v990 = vsub.s32 0, %v989
        %v991 = vrot.slane %v986, %v990
        %v993 = vadd.f32 %v985, %v991
        %v994 = vmax.f32 %v993, 0.0
        %v995 = vld [vmem:[#allocation3] sm:$0xff]
        %v996 = vld [vmem:[#allocation3 + $0x8] sm:$0xff]
        %v997 = vld [vmem:[#allocation3 + $0x10] sm:$0xff]
        %v998 = vld [vmem:[#allocation3 + $0x18] sm:$0xff]
        %v999 = vld [vmem:[#allocation3 + $0x20] sm:$0xff]
        %v1000 = vld [vmem:[#allocation3 + $0x28] sm:$0xff]
        %v1001 = vld [vmem:[#allocation3 + $0x30] sm:$0xff]
        %v1002 = vld [vmem:[#allocation3 + $0x38] sm:$0xff]
        %v1003 = vld [vmem:[#allocation3 + $0x40] sm:$0xff]
        %v1004 = vld [vmem:[#allocation3 + $0x48] sm:$0xff]
        %v1005 = vld [vmem:[#allocation3 + $0x50] sm:$0xff]
        %v1006 = vld [vmem:[#allocation3 + $0x58] sm:$0xff]
        %v1007 = vld [vmem:[#allocation3 + $0x60] sm:$0xff]
        %v1008 = vld [vmem:[#allocation3 + $0x68] sm:$0xff]
        %v1009 = vld [vmem:[#allocation3 + $0x70] sm:$0xff]
        %v1010 = vld [vmem:[#allocation3 + $0x78] sm:$0xff]
        %v1011 = vld [vmem:[#allocation3 + $0x80] sm:$0xff]
        %v1012 = vld [vmem:[#allocation3 + $0x88] sm:$0xff]
        %v1013 = vld [vmem:[#allocation3 + $0x90] sm:$0xff]
        %v1014 = vld [vmem:[#allocation3 + $0x98] sm:$0xff]
        %v1015 = vld [vmem:[#allocation3 + $0xa0] sm:$0xff]
        %v1016 = vld [vmem:[#allocation3 + $0xa8] sm:$0xff]
        %v1017 = vld [vmem:[#allocation3 + $0xb0] sm:$0xff]
        %v1018 = vld [vmem:[#allocation3 + $0xb8] sm:$0xff]
        %v1019 = vld [vmem:[#allocation3 + $0xc0] sm:$0xff]
        %v1020 = vld [vmem:[#allocation3 + $0xc8] sm:$0xff]
        %v1021 = vld [vmem:[#allocation3 + $0xd0] sm:$0xff]
        %v1022 = vld [vmem:[#allocation3 + $0xd8] sm:$0xff]
        %v1023 = vld [vmem:[#allocation3 + $0xe0] sm:$0xff]
        %v1024 = vld [vmem:[#allocation3 + $0xe8] sm:$0xff]
        %v1025 = vld [vmem:[#allocation3 + $0xf0] sm:$0xff]
        %v1026 = vld [vmem:[#allocation3 + $0xf8] sm:$0xff]
        %1027 = vmatprep.subr.mxu0 %v996
        %1028 = vmatpush1.msra.mxu0 %v995
        %1029 = vmatprep.subr.mxu0 %v998
        %1030 = vmatpush1.msra.mxu0 %v997
        %1031 = vmatprep.subr.mxu0 %v1000
        %1032 = vmatpush1.msra.mxu0 %v999
        %1033 = vmatprep.subr.mxu0 %v1002
        %1034 = vmatpush1.msra.mxu0 %v1001
        %1035 = vmatprep.subr.mxu0 %v1004
        %1036 = vmatpush1.msra.mxu0 %v1003
        %1037 = vmatprep.subr.mxu0 %v1006
        %1038 = vmatpush1.msra.mxu0 %v1005
        %1039 = vmatprep.subr.mxu0 %v1008
        %1040 = vmatpush1.msra.mxu0 %v1007
        %1041 = vmatprep.subr.mxu0 %v1010
        %1042 = vmatpush1.msra.mxu0 %v1009
        %1043 = vmatprep.subr.mxu0 %v1012
        %1044 = vmatpush1.msra.mxu0 %v1011
        %1045 = vmatprep.subr.mxu0 %v1014
        %1046 = vmatpush1.msra.mxu0 %v1013
        %1047 = vmatprep.subr.mxu0 %v1016
        %1048 = vmatpush1.msra.mxu0 %v1015
        %1049 = vmatprep.subr.mxu0 %v1018
        %1050 = vmatpush1.msra.mxu0 %v1017
        %1051 = vmatprep.subr.mxu0 %v1020
        %1052 = vmatpush1.msra.mxu0 %v1019
        %1053 = vmatprep.subr.mxu0 %v1022
        %1054 = vmatpush1.msra.mxu0 %v1021
        %1055 = vmatprep.subr.mxu0 %v1024
        %1056 = vmatpush1.msra.mxu0 %v1023
        %1057 = vmatprep.subr.mxu0 %v1026
        %1058 = vmatpush1.msra.mxu0 %v1025
        %1059 = vmatprep.subr.mxu0 0.0
        %1060 = vmatpush1.msra.mxu0 0.0
        %1061 = vmatprep.subr.mxu0 0.0
        %1062 = vmatpush1.msra.mxu0 0.0
        %1063 = vmatprep.subr.mxu0 0.0
        %1064 = vmatpush1.msra.mxu0 0.0
        %1065 = vmatprep.subr.mxu0 0.0
        %1066 = vmatpush1.msra.mxu0 0.0
        %1067 = vmatprep.subr.mxu0 0.0
        %1068 = vmatpush1.msra.mxu0 0.0
        %1069 = vmatprep.subr.mxu0 0.0
        %1070 = vmatpush1.msra.mxu0 0.0
        %1071 = vmatprep.subr.mxu0 0.0
        %1072 = vmatpush1.msra.mxu0 0.0
        %1073 = vmatprep.subr.mxu0 0.0
        %1074 = vmatpush1.msra.mxu0 0.0
        %1075 = vmatprep.subr.mxu0 0.0
        %1076 = vmatpush1.msra.mxu0 0.0
        %1077 = vmatprep.subr.mxu0 0.0
        %1078 = vmatpush1.msra.mxu0 0.0
        %1079 = vmatprep.subr.mxu0 0.0
        %1080 = vmatpush1.msra.mxu0 0.0
        %1081 = vmatprep.subr.mxu0 0.0
        %1082 = vmatpush1.msra.mxu0 0.0
        %1083 = vmatprep.subr.mxu0 0.0
        %1084 = vmatpush1.msra.mxu0 0.0
        %1085 = vmatprep.subr.mxu0 0.0
        %1086 = vmatpush1.msra.mxu0 0.0
        %1087 = vmatprep.subr.mxu0 0.0
        %1088 = vmatpush1.msra.mxu0 0.0
        %1089 = vmatprep.subr.mxu0 0.0
        %1090 = vmatpush1.msra.mxu0 0.0
        %1091 = vmatprep.mubr.f32.mxu0 0.0
        %1092 = vmatmul.mubr.f32.gmra.mrb[0].mxu0 %v994
        %v1093 = vpop.f32.mrb[0].mxu0
        %v1094 = vadd.f32 0.0, %v1093
        %v1095 = vpop.f32.mrb[0].mxu0
        %v1096 = vadd.f32 0.0, %v1095
        %1097 = vdwg.mxu0
        %s1098 = scalar_lea.vmem [#allocation3], 256
        %v1099 = vld [vmem:[%s1098] sm:$0xff]
        %v1100 = vld [vmem:[%s1098 + $0x8] sm:$0xff]
        %v1101 = vld [vmem:[%s1098 + $0x10] sm:$0xff]
        %v1102 = vld [vmem:[%s1098 + $0x18] sm:$0xff]
        %v1103 = vld [vmem:[%s1098 + $0x20] sm:$0xff]
        %v1104 = vld [vmem:[%s1098 + $0x28] sm:$0xff]
        %v1105 = vld [vmem:[%s1098 + $0x30] sm:$0xff]
        %v1106 = vld [vmem:[%s1098 + $0x38] sm:$0xff]
        %v1107 = vld [vmem:[%s1098 + $0x40] sm:$0xff]
        %v1108 = vld [vmem:[%s1098 + $0x48] sm:$0xff]
        %v1109 = vld [vmem:[%s1098 + $0x50] sm:$0xff]
        %v1110 = vld [vmem:[%s1098 + $0x58] sm:$0xff]
        %v1111 = vld [vmem:[%s1098 + $0x60] sm:$0xff]
        %v1112 = vld [vmem:[%s1098 + $0x68] sm:$0xff]
        %v1113 = vld [vmem:[%s1098 + $0x70] sm:$0xff]
        %v1114 = vld [vmem:[%s1098 + $0x78] sm:$0xff]
        %v1115 = vld [vmem:[%s1098 + $0x80] sm:$0xff]
        %v1116 = vld [vmem:[%s1098 + $0x88] sm:$0xff]
        %v1117 = vld [vmem:[%s1098 + $0x90] sm:$0xff]
        %v1118 = vld [vmem:[%s1098 + $0x98] sm:$0xff]
        %v1119 = vld [vmem:[%s1098 + $0xa0] sm:$0xff]
        %v1120 = vld [vmem:[%s1098 + $0xa8] sm:$0xff]
        %v1121 = vld [vmem:[%s1098 + $0xb0] sm:$0xff]
        %v1122 = vld [vmem:[%s1098 + $0xb8] sm:$0xff]
        %v1123 = vld [vmem:[%s1098 + $0xc0] sm:$0xff]
        %v1124 = vld [vmem:[%s1098 + $0xc8] sm:$0xff]
        %v1125 = vld [vmem:[%s1098 + $0xd0] sm:$0xff]
        %v1126 = vld [vmem:[%s1098 + $0xd8] sm:$0xff]
        %v1127 = vld [vmem:[%s1098 + $0xe0] sm:$0xff]
        %v1128 = vld [vmem:[%s1098 + $0xe8] sm:$0xff]
        %v1129 = vld [vmem:[%s1098 + $0xf0] sm:$0xff]
        %v1130 = vld [vmem:[%s1098 + $0xf8] sm:$0xff]
        %1131 = vmatprep.subr.mxu0 %v1100
        %1132 = vmatpush1.msra.mxu0 %v1099
        %1133 = vmatprep.subr.mxu0 %v1102
        %1134 = vmatpush1.msra.mxu0 %v1101
        %1135 = vmatprep.subr.mxu0 %v1104
        %1136 = vmatpush1.msra.mxu0 %v1103
        %1137 = vmatprep.subr.mxu0 %v1106
        %1138 = vmatpush1.msra.mxu0 %v1105
        %1139 = vmatprep.subr.mxu0 %v1108
        %1140 = vmatpush1.msra.mxu0 %v1107
        %1141 = vmatprep.subr.mxu0 %v1110
        %1142 = vmatpush1.msra.mxu0 %v1109
        %1143 = vmatprep.subr.mxu0 %v1112
        %1144 = vmatpush1.msra.mxu0 %v1111
        %1145 = vmatprep.subr.mxu0 %v1114
        %1146 = vmatpush1.msra.mxu0 %v1113
        %1147 = vmatprep.subr.mxu0 %v1116
        %1148 = vmatpush1.msra.mxu0 %v1115
        %1149 = vmatprep.subr.mxu0 %v1118
        %1150 = vmatpush1.msra.mxu0 %v1117
        %1151 = vmatprep.subr.mxu0 %v1120
        %1152 = vmatpush1.msra.mxu0 %v1119
        %1153 = vmatprep.subr.mxu0 %v1122
        %1154 = vmatpush1.msra.mxu0 %v1121
        %1155 = vmatprep.subr.mxu0 %v1124
        %1156 = vmatpush1.msra.mxu0 %v1123
        %1157 = vmatprep.subr.mxu0 %v1126
        %1158 = vmatpush1.msra.mxu0 %v1125
        %1159 = vmatprep.subr.mxu0 %v1128
        %1160 = vmatpush1.msra.mxu0 %v1127
        %1161 = vmatprep.subr.mxu0 %v1130
        %1162 = vmatpush1.msra.mxu0 %v1129
        %1163 = vmatprep.subr.mxu0 0.0
        %1164 = vmatpush1.msra.mxu0 0.0
        %1165 = vmatprep.subr.mxu0 0.0
        %1166 = vmatpush1.msra.mxu0 0.0
        %1167 = vmatprep.subr.mxu0 0.0
        %1168 = vmatpush1.msra.mxu0 0.0
        %1169 = vmatprep.subr.mxu0 0.0
        %1170 = vmatpush1.msra.mxu0 0.0
        %1171 = vmatprep.subr.mxu0 0.0
        %1172 = vmatpush1.msra.mxu0 0.0
        %1173 = vmatprep.subr.mxu0 0.0
        %1174 = vmatpush1.msra.mxu0 0.0
        %1175 = vmatprep.subr.mxu0 0.0
        %1176 = vmatpush1.msra.mxu0 0.0
        %1177 = vmatprep.subr.mxu0 0.0
        %1178 = vmatpush1.msra.mxu0 0.0
        %1179 = vmatprep.subr.mxu0 0.0
        %1180 = vmatpush1.msra.mxu0 0.0
        %1181 = vmatprep.subr.mxu0 0.0
        %1182 = vmatpush1.msra.mxu0 0.0
        %1183 = vmatprep.subr.mxu0 0.0
        %1184 = vmatpush1.msra.mxu0 0.0
        %1185 = vmatprep.subr.mxu0 0.0
        %1186 = vmatpush1.msra.mxu0 0.0
        %1187 = vmatprep.subr.mxu0 0.0
        %1188 = vmatpush1.msra.mxu0 0.0
        %1189 = vmatprep.subr.mxu0 0.0
        %1190 = vmatpush1.msra.mxu0 0.0
        %1191 = vmatprep.subr.mxu0 0.0
        %1192 = vmatpush1.msra.mxu0 0.0
        %1193 = vmatprep.subr.mxu0 0.0
        %1194 = vmatpush1.msra.mxu0 0.0
        %1195 = vmatprep.mubr.f32.mxu0 0.0
        %1196 = vmatmul.mubr.f32.gmra.mrb[0].mxu0 %v994
        %v1197 = vpop.f32.mrb[0].mxu0
        %v1198 = vadd.f32 0.0, %v1197
        %v1199 = vpop.f32.mrb[0].mxu0
        %v1200 = vadd.f32 0.0, %v1199
        %1201 = vdwg.mxu0
        %s1202 = scalar_lea.vmem [#allocation3], 512
        %v1203 = vld [vmem:[%s1202] sm:$0xff]
        %v1204 = vld [vmem:[%s1202 + $0x8] sm:$0xff]
        %v1205 = vld [vmem:[%s1202 + $0x10] sm:$0xff]
        %v1206 = vld [vmem:[%s1202 + $0x18] sm:$0xff]
        %v1207 = vld [vmem:[%s1202 + $0x20] sm:$0xff]
        %v1208 = vld [vmem:[%s1202 + $0x28] sm:$0xff]
        %v1209 = vld [vmem:[%s1202 + $0x30] sm:$0xff]
        %v1210 = vld [vmem:[%s1202 + $0x38] sm:$0xff]
        %v1211 = vld [vmem:[%s1202 + $0x40] sm:$0xff]
        %v1212 = vld [vmem:[%s1202 + $0x48] sm:$0xff]
        %v1213 = vld [vmem:[%s1202 + $0x50] sm:$0xff]
        %v1214 = vld [vmem:[%s1202 + $0x58] sm:$0xff]
        %v1215 = vld [vmem:[%s1202 + $0x60] sm:$0xff]
        %v1216 = vld [vmem:[%s1202 + $0x68] sm:$0xff]
        %v1217 = vld [vmem:[%s1202 + $0x70] sm:$0xff]
        %v1218 = vld [vmem:[%s1202 + $0x78] sm:$0xff]
        %v1219 = vld [vmem:[%s1202 + $0x80] sm:$0xff]
        %v1220 = vld [vmem:[%s1202 + $0x88] sm:$0xff]
        %v1221 = vld [vmem:[%s1202 + $0x90] sm:$0xff]
        %v1222 = vld [vmem:[%s1202 + $0x98] sm:$0xff]
        %v1223 = vld [vmem:[%s1202 + $0xa0] sm:$0xff]
        %v1224 = vld [vmem:[%s1202 + $0xa8] sm:$0xff]
        %v1225 = vld [vmem:[%s1202 + $0xb0] sm:$0xff]
        %v1226 = vld [vmem:[%s1202 + $0xb8] sm:$0xff]
        %v1227 = vld [vmem:[%s1202 + $0xc0] sm:$0xff]
        %v1228 = vld [vmem:[%s1202 + $0xc8] sm:$0xff]
        %v1229 = vld [vmem:[%s1202 + $0xd0] sm:$0xff]
        %v1230 = vld [vmem:[%s1202 + $0xd8] sm:$0xff]
        %v1231 = vld [vmem:[%s1202 + $0xe0] sm:$0xff]
        %v1232 = vld [vmem:[%s1202 + $0xe8] sm:$0xff]
        %v1233 = vld [vmem:[%s1202 + $0xf0] sm:$0xff]
        %v1234 = vld [vmem:[%s1202 + $0xf8] sm:$0xff]
        %1235 = vmatprep.subr.mxu0 %v1204
        %1236 = vmatpush1.msra.mxu0 %v1203
        %1237 = vmatprep.subr.mxu0 %v1206
        %1238 = vmatpush1.msra.mxu0 %v1205
        %1239 = vmatprep.subr.mxu0 %v1208
        %1240 = vmatpush1.msra.mxu0 %v1207
        %1241 = vmatprep.subr.mxu0 %v1210
        %1242 = vmatpush1.msra.mxu0 %v1209
        %1243 = vmatprep.subr.mxu0 %v1212
        %1244 = vmatpush1.msra.mxu0 %v1211
        %1245 = vmatprep.subr.mxu0 %v1214
        %1246 = vmatpush1.msra.mxu0 %v1213
        %1247 = vmatprep.subr.mxu0 %v1216
        %1248 = vmatpush1.msra.mxu0 %v1215
        %1249 = vmatprep.subr.mxu0 %v1218
        %1250 = vmatpush1.msra.mxu0 %v1217
        %1251 = vmatprep.subr.mxu0 %v1220
        %1252 = vmatpush1.msra.mxu0 %v1219
        %1253 = vmatprep.subr.mxu0 %v1222
        %1254 = vmatpush1.msra.mxu0 %v1221
        %1255 = vmatprep.subr.mxu0 %v1224
        %1256 = vmatpush1.msra.mxu0 %v1223
        %1257 = vmatprep.subr.mxu0 %v1226
        %1258 = vmatpush1.msra.mxu0 %v1225
        %1259 = vmatprep.subr.mxu0 %v1228
        %1260 = vmatpush1.msra.mxu0 %v1227
        %1261 = vmatprep.subr.mxu0 %v1230
        %1262 = vmatpush1.msra.mxu0 %v1229
        %1263 = vmatprep.subr.mxu0 %v1232
        %1264 = vmatpush1.msra.mxu0 %v1231
        %1265 = vmatprep.subr.mxu0 %v1234
        %1266 = vmatpush1.msra.mxu0 %v1233
        %1267 = vmatprep.subr.mxu0 0.0
        %1268 = vmatpush1.msra.mxu0 0.0
        %1269 = vmatprep.subr.mxu0 0.0
        %1270 = vmatpush1.msra.mxu0 0.0
        %1271 = vmatprep.subr.mxu0 0.0
        %1272 = vmatpush1.msra.mxu0 0.0
        %1273 = vmatprep.subr.mxu0 0.0
        %1274 = vmatpush1.msra.mxu0 0.0
        %1275 = vmatprep.subr.mxu0 0.0
        %1276 = vmatpush1.msra.mxu0 0.0
        %1277 = vmatprep.subr.mxu0 0.0
        %1278 = vmatpush1.msra.mxu0 0.0
        %1279 = vmatprep.subr.mxu0 0.0
        %1280 = vmatpush1.msra.mxu0 0.0
        %1281 = vmatprep.subr.mxu0 0.0
        %1282 = vmatpush1.msra.mxu0 0.0
        %1283 = vmatprep.subr.mxu0 0.0
        %1284 = vmatpush1.msra.mxu0 0.0
        %1285 = vmatprep.subr.mxu0 0.0
        %1286 = vmatpush1.msra.mxu0 0.0
        %1287 = vmatprep.subr.mxu0 0.0
        %1288 = vmatpush1.msra.mxu0 0.0
        %1289 = vmatprep.subr.mxu0 0.0
        %1290 = vmatpush1.msra.mxu0 0.0
        %1291 = vmatprep.subr.mxu0 0.0
        %1292 = vmatpush1.msra.mxu0 0.0
        %1293 = vmatprep.subr.mxu0 0.0
        %1294 = vmatpush1.msra.mxu0 0.0
        %1295 = vmatprep.subr.mxu0 0.0
        %1296 = vmatpush1.msra.mxu0 0.0
        %1297 = vmatprep.subr.mxu0 0.0
        %1298 = vmatpush1.msra.mxu0 0.0
        %1299 = vmatprep.mubr.f32.mxu0 0.0
        %1300 = vmatmul.mubr.f32.gmra.mrb[0].mxu0 %v994
        %v1301 = vpop.f32.mrb[0].mxu0
        %v1302 = vadd.f32 0.0, %v1301
        %v1303 = vpop.f32.mrb[0].mxu0
        %v1304 = vadd.f32 0.0, %v1303
        %1305 = vdwg.mxu0
        %v1306 = vadd.s32 %v831, 1
        %vm1307 = vcmp.eq.s32.totalorder %v829, %v1306
        %v1308 = vsel %vm1307, 1.0, 0.0
        %v1309 = vadd.s32 %v829, 1
        %vm1310 = vcmp.eq.s32.totalorder %v831, %v1309
        %v1311 = vsel %vm1310, 1.0, 0.0
        %vm1312 = vcmask 64512
        %v1314 = vsel %vm1312, %v1308, 0
        %1316 = vmatprep.subr.mxu0 %v1096
        %1317 = vmatpush1.msra.mxu0 %v1094
        %1318 = vmatprep.subr.mxu0 0.0
        %1319 = vmatpush1.msra.mxu0 0.0
        %1320 = vmatprep.subr.mxu0 0.0
        %1321 = vmatpush1.msra.mxu0 0.0
        %1322 = vmatprep.subr.mxu0 0.0
        %1323 = vmatpush1.msra.mxu0 0.0
        %1324 = vmatprep.subr.mxu0 0.0
        %1325 = vmatpush1.msra.mxu0 0.0
        %1326 = vmatprep.subr.mxu0 0.0
        %1327 = vmatpush1.msra.mxu0 0.0
        %1328 = vmatprep.subr.mxu0 0.0
        %1329 = vmatpush1.msra.mxu0 0.0
        %1330 = vmatprep.subr.mxu0 0.0
        %1331 = vmatpush1.msra.mxu0 0.0
        %1332 = vmatprep.subr.mxu0 0.0
        %1333 = vmatpush1.msra.mxu0 0.0
        %1334 = vmatprep.subr.mxu0 0.0
        %1335 = vmatpush1.msra.mxu0 0.0
        %1336 = vmatprep.subr.mxu0 0.0
        %1337 = vmatpush1.msra.mxu0 0.0
        %1338 = vmatprep.subr.mxu0 0.0
        %1339 = vmatpush1.msra.mxu0 0.0
        %1340 = vmatprep.subr.mxu0 0.0
        %1341 = vmatpush1.msra.mxu0 0.0
        %1342 = vmatprep.subr.mxu0 0.0
        %1343 = vmatpush1.msra.mxu0 0.0
        %1344 = vmatprep.subr.mxu0 0.0
        %1345 = vmatpush1.msra.mxu0 0.0
        %1346 = vmatprep.subr.mxu0 0.0
        %1347 = vmatpush1.msra.mxu0 0.0
        %1348 = vmatprep.subr.mxu0 0.0
        %1349 = vmatpush1.msra.mxu0 0.0
        %1350 = vmatprep.subr.mxu0 0.0
        %1351 = vmatpush1.msra.mxu0 0.0
        %1352 = vmatprep.subr.mxu0 0.0
        %1353 = vmatpush1.msra.mxu0 0.0
        %1354 = vmatprep.subr.mxu0 0.0
        %1355 = vmatpush1.msra.mxu0 0.0
        %1356 = vmatprep.subr.mxu0 0.0
        %1357 = vmatpush1.msra.mxu0 0.0
        %1358 = vmatprep.subr.mxu0 0.0
        %1359 = vmatpush1.msra.mxu0 0.0
        %1360 = vmatprep.subr.mxu0 0.0
        %1361 = vmatpush1.msra.mxu0 0.0
        %1362 = vmatprep.subr.mxu0 0.0
        %1363 = vmatpush1.msra.mxu0 0.0
        %1364 = vmatprep.subr.mxu0 0.0
        %1365 = vmatpush1.msra.mxu0 0.0
        %1366 = vmatprep.subr.mxu0 0.0
        %1367 = vmatpush1.msra.mxu0 0.0
        %1368 = vmatprep.subr.mxu0 0.0
        %1369 = vmatpush1.msra.mxu0 0.0
        %1370 = vmatprep.subr.mxu0 0.0
        %1371 = vmatpush1.msra.mxu0 0.0
        %1372 = vmatprep.subr.mxu0 0.0
        %1373 = vmatpush1.msra.mxu0 0.0
        %1374 = vmatprep.subr.mxu0 0.0
        %1375 = vmatpush1.msra.mxu0 0.0
        %1376 = vmatprep.subr.mxu0 0.0
        %1377 = vmatpush1.msra.mxu0 0.0
        %1378 = vmatprep.subr.mxu0 0.0
        %1379 = vmatpush1.msra.mxu0 0.0
        %1380 = vmatprep.mubr.f32.mxu0 0.0
        %1381 = vmatmul.mubr.f32.gmra.mrb[0].mxu0 %v1314
        %v1382 = vpop.f32.mrb[0].mxu0
        %v1383 = vadd.f32 %v1198, %v1382
        %v1384 = vpop.f32.mrb[0].mxu0
        %v1385 = vadd.f32 %v1200, %v1384
        %1386 = vdwg.mxu0
        %v1388 = vsel %vm1312, %v1311, 0
        %1390 = vmatprep.subr.mxu0 %v1304
        %1391 = vmatpush1.msra.mxu0 %v1302
        %1392 = vmatprep.subr.mxu0 0.0
        %1393 = vmatpush1.msra.mxu0 0.0
        %1394 = vmatprep.subr.mxu0 0.0
        %1395 = vmatpush1.msra.mxu0 0.0
        %1396 = vmatprep.subr.mxu0 0.0
        %1397 = vmatpush1.msra.mxu0 0.0
        %1398 = vmatprep.subr.mxu0 0.0
        %1399 = vmatpush1.msra.mxu0 0.0
        %1400 = vmatprep.subr.mxu0 0.0
        %1401 = vmatpush1.msra.mxu0 0.0
        %1402 = vmatprep.subr.mxu0 0.0
        %1403 = vmatpush1.msra.mxu0 0.0
        %1404 = vmatprep.subr.mxu0 0.0
        %1405 = vmatpush1.msra.mxu0 0.0
        %1406 = vmatprep.subr.mxu0 0.0
        %1407 = vmatpush1.msra.mxu0 0.0
        %1408 = vmatprep.subr.mxu0 0.0
        %1409 = vmatpush1.msra.mxu0 0.0
        %1410 = vmatprep.subr.mxu0 0.0
        %1411 = vmatpush1.msra.mxu0 0.0
        %1412 = vmatprep.subr.mxu0 0.0
        %1413 = vmatpush1.msra.mxu0 0.0
        %1414 = vmatprep.subr.mxu0 0.0
        %1415 = vmatpush1.msra.mxu0 0.0
        %1416 = vmatprep.subr.mxu0 0.0
        %1417 = vmatpush1.msra.mxu0 0.0
        %1418 = vmatprep.subr.mxu0 0.0
        %1419 = vmatpush1.msra.mxu0 0.0
        %1420 = vmatprep.subr.mxu0 0.0
        %1421 = vmatpush1.msra.mxu0 0.0
        %1422 = vmatprep.subr.mxu0 0.0
        %1423 = vmatpush1.msra.mxu0 0.0
        %1424 = vmatprep.subr.mxu0 0.0
        %1425 = vmatpush1.msra.mxu0 0.0
        %1426 = vmatprep.subr.mxu0 0.0
        %1427 = vmatpush1.msra.mxu0 0.0
        %1428 = vmatprep.subr.mxu0 0.0
        %1429 = vmatpush1.msra.mxu0 0.0
        %1430 = vmatprep.subr.mxu0 0.0
        %1431 = vmatpush1.msra.mxu0 0.0
        %1432 = vmatprep.subr.mxu0 0.0
        %1433 = vmatpush1.msra.mxu0 0.0
        %1434 = vmatprep.subr.mxu0 0.0
        %1435 = vmatpush1.msra.mxu0 0.0
        %1436 = vmatprep.subr.mxu0 0.0
        %1437 = vmatpush1.msra.mxu0 0.0
        %1438 = vmatprep.subr.mxu0 0.0
        %1439 = vmatpush1.msra.mxu0 0.0
        %1440 = vmatprep.subr.mxu0 0.0
        %1441 = vmatpush1.msra.mxu0 0.0
        %1442 = vmatprep.subr.mxu0 0.0
        %1443 = vmatpush1.msra.mxu0 0.0
        %1444 = vmatprep.subr.mxu0 0.0
        %1445 = vmatpush1.msra.mxu0 0.0
        %1446 = vmatprep.subr.mxu0 0.0
        %1447 = vmatpush1.msra.mxu0 0.0
        %1448 = vmatprep.subr.mxu0 0.0
        %1449 = vmatpush1.msra.mxu0 0.0
        %1450 = vmatprep.subr.mxu0 0.0
        %1451 = vmatpush1.msra.mxu0 0.0
        %1452 = vmatprep.subr.mxu0 0.0
        %1453 = vmatpush1.msra.mxu0 0.0
        %1454 = vmatprep.mubr.f32.mxu0 0.0
        %1455 = vmatmul.mubr.f32.gmra.mrb[0].mxu0 %v1388
        %v1456 = vpop.f32.mrb[0].mxu0
        %v1457 = vadd.f32 0.0, %v1456
        %v1458 = vpop.f32.mrb[0].mxu0
        %v1459 = vadd.f32 0.0, %v1458
        %1460 = vdwg.mxu0
        %v1461 = vadd.f32 %v1383, %v1457
        %v1462 = vadd.f32 %v1385, %v1459
        %v1463 = vmax.f32 %v1461, %v1462
        %v1464 = vsel %vm1312, %v834, 0
        %1466 = vmatprep.subr.mxu0 0.0
        %1467 = vmatpush1.msra.mxu0 %v1463
        %1468 = vmatprep.subr.mxu0 0.0
        %1469 = vmatpush1.msra.mxu0 0.0
        %1470 = vmatprep.subr.mxu0 0.0
        %1471 = vmatpush1.msra.mxu0 0.0
        %1472 = vmatprep.subr.mxu0 0.0
        %1473 = vmatpush1.msra.mxu0 0.0
        %1474 = vmatprep.subr.mxu0 0.0
        %1475 = vmatpush1.msra.mxu0 0.0
        %1476 = vmatprep.subr.mxu0 0.0
        %1477 = vmatpush1.msra.mxu0 0.0
        %1478 = vmatprep.subr.mxu0 0.0
        %1479 = vmatpush1.msra.mxu0 0.0
        %1480 = vmatprep.subr.mxu0 0.0
        %1481 = vmatpush1.msra.mxu0 0.0
        %1482 = vmatprep.subr.mxu0 0.0
        %1483 = vmatpush1.msra.mxu0 0.0
        %1484 = vmatprep.subr.mxu0 0.0
        %1485 = vmatpush1.msra.mxu0 0.0
        %1486 = vmatprep.subr.mxu0 0.0
        %1487 = vmatpush1.msra.mxu0 0.0
        %1488 = vmatprep.subr.mxu0 0.0
        %1489 = vmatpush1.msra.mxu0 0.0
        %1490 = vmatprep.subr.mxu0 0.0
        %1491 = vmatpush1.msra.mxu0 0.0
        %1492 = vmatprep.subr.mxu0 0.0
        %1493 = vmatpush1.msra.mxu0 0.0
        %1494 = vmatprep.subr.mxu0 0.0
        %1495 = vmatpush1.msra.mxu0 0.0
        %1496 = vmatprep.subr.mxu0 0.0
        %1497 = vmatpush1.msra.mxu0 0.0
        %1498 = vmatprep.subr.mxu0 0.0
        %1499 = vmatpush1.msra.mxu0 0.0
        %1500 = vmatprep.subr.mxu0 0.0
        %1501 = vmatpush1.msra.mxu0 0.0
        %1502 = vmatprep.subr.mxu0 0.0
        %1503 = vmatpush1.msra.mxu0 0.0
        %1504 = vmatprep.subr.mxu0 0.0
        %1505 = vmatpush1.msra.mxu0 0.0
        %1506 = vmatprep.subr.mxu0 0.0
        %1507 = vmatpush1.msra.mxu0 0.0
        %1508 = vmatprep.subr.mxu0 0.0
        %1509 = vmatpush1.msra.mxu0 0.0
        %1510 = vmatprep.subr.mxu0 0.0
        %1511 = vmatpush1.msra.mxu0 0.0
        %1512 = vmatprep.subr.mxu0 0.0
        %1513 = vmatpush1.msra.mxu0 0.0
        %1514 = vmatprep.subr.mxu0 0.0
        %1515 = vmatpush1.msra.mxu0 0.0
        %1516 = vmatprep.subr.mxu0 0.0
        %1517 = vmatpush1.msra.mxu0 0.0
        %1518 = vmatprep.subr.mxu0 0.0
        %1519 = vmatpush1.msra.mxu0 0.0
        %1520 = vmatprep.subr.mxu0 0.0
        %1521 = vmatpush1.msra.mxu0 0.0
        %1522 = vmatprep.subr.mxu0 0.0
        %1523 = vmatpush1.msra.mxu0 0.0
        %1524 = vmatprep.subr.mxu0 0.0
        %1525 = vmatpush1.msra.mxu0 0.0
        %1526 = vmatprep.subr.mxu0 0.0
        %1527 = vmatpush1.msra.mxu0 0.0
        %1528 = vmatprep.subr.mxu0 0.0
        %1529 = vmatpush1.msra.mxu0 0.0
        %1530 = vmatprep.mubr.f32.mxu0 0.0
        %1531 = vmatmul.mubr.f32.gmra.mrb[0].mxu0 %v1464
        %v1532 = vpop.f32.mrb[0].mxu0
        %v1533 = vadd.f32 0.0, %v1532
        %v1534 = vpop.f32.mrb[0].mxu0
        %1535 = vdwg.mxu0
        %v1536 = vsel %vm1312, %v837, 0
        %1538 = vmatprep.subr.mxu0 0.0
        %1539 = vmatpush1.msra.mxu0 %v1463
        %1540 = vmatprep.subr.mxu0 0.0
        %1541 = vmatpush1.msra.mxu0 0.0
        %1542 = vmatprep.subr.mxu0 0.0
        %1543 = vmatpush1.msra.mxu0 0.0
        %1544 = vmatprep.subr.mxu0 0.0
        %1545 = vmatpush1.msra.mxu0 0.0
        %1546 = vmatprep.subr.mxu0 0.0
        %1547 = vmatpush1.msra.mxu0 0.0
        %1548 = vmatprep.subr.mxu0 0.0
        %1549 = vmatpush1.msra.mxu0 0.0
        %1550 = vmatprep.subr.mxu0 0.0
        %1551 = vmatpush1.msra.mxu0 0.0
        %1552 = vmatprep.subr.mxu0 0.0
        %1553 = vmatpush1.msra.mxu0 0.0
        %1554 = vmatprep.subr.mxu0 0.0
        %1555 = vmatpush1.msra.mxu0 0.0
        %1556 = vmatprep.subr.mxu0 0.0
        %1557 = vmatpush1.msra.mxu0 0.0
        %1558 = vmatprep.subr.mxu0 0.0
        %1559 = vmatpush1.msra.mxu0 0.0
        %1560 = vmatprep.subr.mxu0 0.0
        %1561 = vmatpush1.msra.mxu0 0.0
        %1562 = vmatprep.subr.mxu0 0.0
        %1563 = vmatpush1.msra.mxu0 0.0
        %1564 = vmatprep.subr.mxu0 0.0
        %1565 = vmatpush1.msra.mxu0 0.0
        %1566 = vmatprep.subr.mxu0 0.0
        %1567 = vmatpush1.msra.mxu0 0.0
        %1568 = vmatprep.subr.mxu0 0.0
        %1569 = vmatpush1.msra.mxu0 0.0
        %1570 = vmatprep.subr.mxu0 0.0
        %1571 = vmatpush1.msra.mxu0 0.0
        %1572 = vmatprep.subr.mxu0 0.0
        %1573 = vmatpush1.msra.mxu0 0.0
        %1574 = vmatprep.subr.mxu0 0.0
        %1575 = vmatpush1.msra.mxu0 0.0
        %1576 = vmatprep.subr.mxu0 0.0
        %1577 = vmatpush1.msra.mxu0 0.0
        %1578 = vmatprep.subr.mxu0 0.0
        %1579 = vmatpush1.msra.mxu0 0.0
        %1580 = vmatprep.subr.mxu0 0.0
        %1581 = vmatpush1.msra.mxu0 0.0
        %1582 = vmatprep.subr.mxu0 0.0
        %1583 = vmatpush1.msra.mxu0 0.0
        %1584 = vmatprep.subr.mxu0 0.0
        %1585 = vmatpush1.msra.mxu0 0.0
        %1586 = vmatprep.subr.mxu0 0.0
        %1587 = vmatpush1.msra.mxu0 0.0
        %1588 = vmatprep.subr.mxu0 0.0
        %1589 = vmatpush1.msra.mxu0 0.0
        %1590 = vmatprep.subr.mxu0 0.0
        %1591 = vmatpush1.msra.mxu0 0.0
        %1592 = vmatprep.subr.mxu0 0.0
        %1593 = vmatpush1.msra.mxu0 0.0
        %1594 = vmatprep.subr.mxu0 0.0
        %1595 = vmatpush1.msra.mxu0 0.0
        %1596 = vmatprep.subr.mxu0 0.0
        %1597 = vmatpush1.msra.mxu0 0.0
        %1598 = vmatprep.subr.mxu0 0.0
        %1599 = vmatpush1.msra.mxu0 0.0
        %1600 = vmatprep.subr.mxu0 0.0
        %1601 = vmatpush1.msra.mxu0 0.0
        %1602 = vmatprep.mubr.f32.mxu0 0.0
        %1603 = vmatmul.mubr.f32.gmra.mrb[0].mxu0 %v1536
        %v1604 = vpop.f32.mrb[0].mxu0
        %v1605 = vadd.f32 0.0, %v1604
        %v1606 = vpop.f32.mrb[0].mxu0
        %1607 = vdwg.mxu0
        %v1608 = vmax.f32 %v1533, %v1605
        %v1609 = vld [vmem:[%s4] sm:$0x1]
        %v1611 = vlaneseq
        %v1612 = vshrl.u32 %v1611, 7
        %v1613 = vsub.s32 0, %v1612
        %v1614 = vrot.slane %v1609, %v1613
        %v1616 = vadd.f32 %v1608, %v1614
        %v1617 = vmax.f32 %v1616, 0.0
        %v1618 = vld [vmem:[%s6] sm:$0x3]
        %v1619 = vld [vmem:[#allocation6] sm:$0xff]
        %v1620 = vld [vmem:[#allocation6 + $0x8] sm:$0xff]
        %v1621 = vld [vmem:[#allocation6 + $0x10] sm:$0xff]
        %v1622 = vld [vmem:[#allocation6 + $0x18] sm:$0xff]
        %v1623 = vld [vmem:[#allocation6 + $0x20] sm:$0xff]
        %v1624 = vld [vmem:[#allocation6 + $0x28] sm:$0xff]
        %v1625 = vld [vmem:[#allocation6 + $0x30] sm:$0xff]
        %v1626 = vld [vmem:[#allocation6 + $0x38] sm:$0xff]
        %v1627 = vld [vmem:[#allocation6 + $0x40] sm:$0xff]
        %v1628 = vld [vmem:[#allocation6 + $0x48] sm:$0xff]
        %v1629 = vld [vmem:[#allocation6 + $0x50] sm:$0xff]
        %v1630 = vld [vmem:[#allocation6 + $0x58] sm:$0xff]
        %v1631 = vld [vmem:[#allocation6 + $0x60] sm:$0xff]
        %v1632 = vld [vmem:[#allocation6 + $0x68] sm:$0xff]
        %v1633 = vld [vmem:[#allocation6 + $0x70] sm:$0xff]
        %v1634 = vld [vmem:[#allocation6 + $0x78] sm:$0xff]
        %v1635 = vld [vmem:[#allocation6 + $0x80] sm:$0xff]
        %v1636 = vld [vmem:[#allocation6 + $0x88] sm:$0xff]
        %v1637 = vld [vmem:[#allocation6 + $0x90] sm:$0xff]
        %v1638 = vld [vmem:[#allocation6 + $0x98] sm:$0xff]
        %v1639 = vld [vmem:[#allocation6 + $0xa0] sm:$0xff]
        %v1640 = vld [vmem:[#allocation6 + $0xa8] sm:$0xff]
        %v1641 = vld [vmem:[#allocation6 + $0xb0] sm:$0xff]
        %v1642 = vld [vmem:[#allocation6 + $0xb8] sm:$0xff]
        %v1643 = vld [vmem:[#allocation6 + $0xc0] sm:$0xff]
        %v1644 = vld [vmem:[#allocation6 + $0xc8] sm:$0xff]
        %v1645 = vld [vmem:[#allocation6 + $0xd0] sm:$0xff]
        %v1646 = vld [vmem:[#allocation6 + $0xd8] sm:$0xff]
        %v1647 = vld [vmem:[#allocation6 + $0xe0] sm:$0xff]
        %v1648 = vld [vmem:[#allocation6 + $0xe8] sm:$0xff]
        %v1649 = vld [vmem:[#allocation6 + $0xf0] sm:$0xff]
        %v1650 = vld [vmem:[#allocation6 + $0xf8] sm:$0xff]
        %1651 = vmatprep.subr.mxu0 %v1620
        %1652 = vmatpush1.msra.mxu0 %v1619
        %1653 = vmatprep.subr.mxu0 %v1622
        %1654 = vmatpush1.msra.mxu0 %v1621
        %1655 = vmatprep.subr.mxu0 %v1624
        %1656 = vmatpush1.msra.mxu0 %v1623
        %1657 = vmatprep.subr.mxu0 %v1626
        %1658 = vmatpush1.msra.mxu0 %v1625
        %1659 = vmatprep.subr.mxu0 %v1628
        %1660 = vmatpush1.msra.mxu0 %v1627
        %1661 = vmatprep.subr.mxu0 %v1630
        %1662 = vmatpush1.msra.mxu0 %v1629
        %1663 = vmatprep.subr.mxu0 %v1632
        %1664 = vmatpush1.msra.mxu0 %v1631
        %1665 = vmatprep.subr.mxu0 %v1634
        %1666 = vmatpush1.msra.mxu0 %v1633
        %1667 = vmatprep.subr.mxu0 %v1636
        %1668 = vmatpush1.msra.mxu0 %v1635
        %1669 = vmatprep.subr.mxu0 %v1638
        %1670 = vmatpush1.msra.mxu0 %v1637
        %1671 = vmatprep.subr.mxu0 %v1640
        %1672 = vmatpush1.msra.mxu0 %v1639
        %1673 = vmatprep.subr.mxu0 %v1642
        %1674 = vmatpush1.msra.mxu0 %v1641
        %1675 = vmatprep.subr.mxu0 %v1644
        %1676 = vmatpush1.msra.mxu0 %v1643
        %1677 = vmatprep.subr.mxu0 %v1646
        %1678 = vmatpush1.msra.mxu0 %v1645
        %1679 = vmatprep.subr.mxu0 %v1648
        %1680 = vmatpush1.msra.mxu0 %v1647
        %1681 = vmatprep.subr.mxu0 %v1650
        %1682 = vmatpush1.msra.mxu0 %v1649
        %1683 = vmatprep.subr.mxu0 0.0
        %1684 = vmatpush1.msra.mxu0 0.0
        %1685 = vmatprep.subr.mxu0 0.0
        %1686 = vmatpush1.msra.mxu0 0.0
        %1687 = vmatprep.subr.mxu0 0.0
        %1688 = vmatpush1.msra.mxu0 0.0
        %1689 = vmatprep.subr.mxu0 0.0
        %1690 = vmatpush1.msra.mxu0 0.0
        %1691 = vmatprep.subr.mxu0 0.0
        %1692 = vmatpush1.msra.mxu0 0.0
        %1693 = vmatprep.subr.mxu0 0.0
        %1694 = vmatpush1.msra.mxu0 0.0
        %1695 = vmatprep.subr.mxu0 0.0
        %1696 = vmatpush1.msra.mxu0 0.0
        %1697 = vmatprep.subr.mxu0 0.0
        %1698 = vmatpush1.msra.mxu0 0.0
        %1699 = vmatprep.subr.mxu0 0.0
        %1700 = vmatpush1.msra.mxu0 0.0
        %1701 = vmatprep.subr.mxu0 0.0
        %1702 = vmatpush1.msra.mxu0 0.0
        %1703 = vmatprep.subr.mxu0 0.0
        %1704 = vmatpush1.msra.mxu0 0.0
        %1705 = vmatprep.subr.mxu0 0.0
        %1706 = vmatpush1.msra.mxu0 0.0
        %1707 = vmatprep.subr.mxu0 0.0
        %1708 = vmatpush1.msra.mxu0 0.0
        %1709 = vmatprep.subr.mxu0 0.0
        %1710 = vmatpush1.msra.mxu0 0.0
        %1711 = vmatprep.subr.mxu0 0.0
        %1712 = vmatpush1.msra.mxu0 0.0
        %1713 = vmatprep.subr.mxu0 0.0
        %1714 = vmatpush1.msra.mxu0 0.0
        %1715 = vmatprep.mubr.f32.mxu0 0.0
        %1716 = vmatmul.mubr.f32.gmra.mrb[0].mxu0 %v1617
        %v1717 = vpop.f32.mrb[0].mxu0
        %v1718 = vadd.f32 0.0, %v1717
        %v1719 = vpop.f32.mrb[0].mxu0
        %v1720 = vadd.f32 0.0, %v1719
        %1721 = vdwg.mxu0
        %v1724 = vcombine.low %v1718, %v1720
        %v1726 = vunpack.c.l.s4 1966171168
        %v1727 = vunpack.c.0.s8 %v1726
        %v1728 = vlaneseq
        %v1729 = vshrl.u32 %v1728, 7
        %v1730 = vsub.s32 %v1727, %v1729
        %v1731 = vrot.slane %v1724, %v1730
        %v1733 = vunpack.c.l.s4 1966171168
        %v1734 = vunpack.c.0.s8 %v1733
        %v1735 = vlaneseq
        %v1736 = vshrl.u32 %v1735, 7
        %v1737 = vsub.s32 %v1734, %v1736
        %v1738 = vrot.slane %v1731, %v1737
        %v1740 = vadd.f32 %v1618, %v1738
        %v1741 = vld [vmem:[#allocation6 + $0x100] sm:$0xff]
        %v1742 = vld [vmem:[#allocation6 + $0x108] sm:$0xff]
        %v1743 = vld [vmem:[#allocation6 + $0x110] sm:$0xff]
        %v1744 = vld [vmem:[#allocation6 + $0x118] sm:$0xff]
        %v1745 = vld [vmem:[#allocation6 + $0x120] sm:$0xff]
        %v1746 = vld [vmem:[#allocation6 + $0x128] sm:$0xff]
        %v1747 = vld [vmem:[#allocation6 + $0x130] sm:$0xff]
        %v1748 = vld [vmem:[#allocation6 + $0x138] sm:$0xff]
        %v1749 = vld [vmem:[#allocation6 + $0x140] sm:$0xff]
        %v1750 = vld [vmem:[#allocation6 + $0x148] sm:$0xff]
        %v1751 = vld [vmem:[#allocation6 + $0x150] sm:$0xff]
        %v1752 = vld [vmem:[#allocation6 + $0x158] sm:$0xff]
        %v1753 = vld [vmem:[#allocation6 + $0x160] sm:$0xff]
        %v1754 = vld [vmem:[#allocation6 + $0x168] sm:$0xff]
        %v1755 = vld [vmem:[#allocation6 + $0x170] sm:$0xff]
        %v1756 = vld [vmem:[#allocation6 + $0x178] sm:$0xff]
        %v1757 = vld [vmem:[#allocation6 + $0x180] sm:$0xff]
        %v1758 = vld [vmem:[#allocation6 + $0x188] sm:$0xff]
        %v1759 = vld [vmem:[#allocation6 + $0x190] sm:$0xff]
        %v1760 = vld [vmem:[#allocation6 + $0x198] sm:$0xff]
        %v1761 = vld [vmem:[#allocation6 + $0x1a0] sm:$0xff]
        %v1762 = vld [vmem:[#allocation6 + $0x1a8] sm:$0xff]
        %v1763 = vld [vmem:[#allocation6 + $0x1b0] sm:$0xff]
        %v1764 = vld [vmem:[#allocation6 + $0x1b8] sm:$0xff]
        %v1765 = vld [vmem:[#allocation6 + $0x1c0] sm:$0xff]
        %v1766 = vld [vmem:[#allocation6 + $0x1c8] sm:$0xff]
        %v1767 = vld [vmem:[#allocation6 + $0x1d0] sm:$0xff]
        %v1768 = vld [vmem:[#allocation6 + $0x1d8] sm:$0xff]
        %v1769 = vld [vmem:[#allocation6 + $0x1e0] sm:$0xff]
        %v1770 = vld [vmem:[#allocation6 + $0x1e8] sm:$0xff]
        %v1771 = vld [vmem:[#allocation6 + $0x1f0] sm:$0xff]
        %v1772 = vld [vmem:[#allocation6 + $0x1f8] sm:$0xff]
        %v1774 = vrot.slane %v1617, 1
        %1776 = vmatprep.subr.mxu0 %v1742
        %1777 = vmatpush1.msra.mxu0 %v1741
        %1778 = vmatprep.subr.mxu0 %v1744
        %1779 = vmatpush1.msra.mxu0 %v1743
        %1780 = vmatprep.subr.mxu0 %v1746
        %1781 = vmatpush1.msra.mxu0 %v1745
        %1782 = vmatprep.subr.mxu0 %v1748
        %1783 = vmatpush1.msra.mxu0 %v1747
        %1784 = vmatprep.subr.mxu0 %v1750
        %1785 = vmatpush1.msra.mxu0 %v1749
        %1786 = vmatprep.subr.mxu0 %v1752
        %1787 = vmatpush1.msra.mxu0 %v1751
        %1788 = vmatprep.subr.mxu0 %v1754
        %1789 = vmatpush1.msra.mxu0 %v1753
        %1790 = vmatprep.subr.mxu0 %v1756
        %1791 = vmatpush1.msra.mxu0 %v1755
        %1792 = vmatprep.subr.mxu0 %v1758
        %1793 = vmatpush1.msra.mxu0 %v1757
        %1794 = vmatprep.subr.mxu0 %v1760
        %1795 = vmatpush1.msra.mxu0 %v1759
        %1796 = vmatprep.subr.mxu0 %v1762
        %1797 = vmatpush1.msra.mxu0 %v1761
        %1798 = vmatprep.subr.mxu0 %v1764
        %1799 = vmatpush1.msra.mxu0 %v1763
        %1800 = vmatprep.subr.mxu0 %v1766
        %1801 = vmatpush1.msra.mxu0 %v1765
        %1802 = vmatprep.subr.mxu0 %v1768
        %1803 = vmatpush1.msra.mxu0 %v1767
        %1804 = vmatprep.subr.mxu0 %v1770
        %1805 = vmatpush1.msra.mxu0 %v1769
        %1806 = vmatprep.subr.mxu0 %v1772
        %1807 = vmatpush1.msra.mxu0 %v1771
        %1808 = vmatprep.subr.mxu0 0.0
        %1809 = vmatpush1.msra.mxu0 0.0
        %1810 = vmatprep.subr.mxu0 0.0
        %1811 = vmatpush1.msra.mxu0 0.0
        %1812 = vmatprep.subr.mxu0 0.0
        %1813 = vmatpush1.msra.mxu0 0.0
        %1814 = vmatprep.subr.mxu0 0.0
        %1815 = vmatpush1.msra.mxu0 0.0
        %1816 = vmatprep.subr.mxu0 0.0
        %1817 = vmatpush1.msra.mxu0 0.0
        %1818 = vmatprep.subr.mxu0 0.0
        %1819 = vmatpush1.msra.mxu0 0.0
        %1820 = vmatprep.subr.mxu0 0.0
        %1821 = vmatpush1.msra.mxu0 0.0
        %1822 = vmatprep.subr.mxu0 0.0
        %1823 = vmatpush1.msra.mxu0 0.0
        %1824 = vmatprep.subr.mxu0 0.0
        %1825 = vmatpush1.msra.mxu0 0.0
        %1826 = vmatprep.subr.mxu0 0.0
        %1827 = vmatpush1.msra.mxu0 0.0
        %1828 = vmatprep.subr.mxu0 0.0
        %1829 = vmatpush1.msra.mxu0 0.0
        %1830 = vmatprep.subr.mxu0 0.0
        %1831 = vmatpush1.msra.mxu0 0.0
        %1832 = vmatprep.subr.mxu0 0.0
        %1833 = vmatpush1.msra.mxu0 0.0
        %1834 = vmatprep.subr.mxu0 0.0
        %1835 = vmatpush1.msra.mxu0 0.0
        %1836 = vmatprep.subr.mxu0 0.0
        %1837 = vmatpush1.msra.mxu0 0.0
        %1838 = vmatprep.subr.mxu0 0.0
        %1839 = vmatpush1.msra.mxu0 0.0
        %1840 = vmatprep.mubr.f32.mxu0 0.0
        %1841 = vmatmul.mubr.f32.gmra.mrb[0].mxu0 %v1774
        %v1842 = vpop.f32.mrb[0].mxu0
        %v1843 = vadd.f32 0.0, %v1842
        %v1844 = vpop.f32.mrb[0].mxu0
        %v1845 = vadd.f32 0.0, %v1844
        %1846 = vdwg.mxu0
        %v1849 = vcombine.low %v1843, %v1845
        %v1851 = vunpack.c.l.s4 1966171168
        %v1852 = vunpack.c.0.s8 %v1851
        %v1853 = vlaneseq
        %v1854 = vshrl.u32 %v1853, 7
        %v1855 = vsub.s32 %v1852, %v1854
        %v1856 = vrot.slane %v1849, %v1855
        %v1858 = vunpack.c.l.s4 1966171168
        %v1859 = vunpack.c.0.s8 %v1858
        %v1860 = vlaneseq
        %v1861 = vshrl.u32 %v1860, 7
        %v1862 = vsub.s32 %v1859, %v1861
        %v1863 = vrot.slane %v1856, %v1862
        %v1865 = vadd.f32 %v1740, %v1863
        %v1866 = vld [vmem:[#allocation6 + $0x200] sm:$0xff]
        %v1867 = vld [vmem:[#allocation6 + $0x208] sm:$0xff]
        %v1868 = vld [vmem:[#allocation6 + $0x210] sm:$0xff]
        %v1869 = vld [vmem:[#allocation6 + $0x218] sm:$0xff]
        %v1870 = vld [vmem:[#allocation6 + $0x220] sm:$0xff]
        %v1871 = vld [vmem:[#allocation6 + $0x228] sm:$0xff]
        %v1872 = vld [vmem:[#allocation6 + $0x230] sm:$0xff]
        %v1873 = vld [vmem:[#allocation6 + $0x238] sm:$0xff]
        %v1874 = vld [vmem:[#allocation6 + $0x240] sm:$0xff]
        %v1875 = vld [vmem:[#allocation6 + $0x248] sm:$0xff]
        %v1876 = vld [vmem:[#allocation6 + $0x250] sm:$0xff]
        %v1877 = vld [vmem:[#allocation6 + $0x258] sm:$0xff]
        %v1878 = vld [vmem:[#allocation6 + $0x260] sm:$0xff]
        %v1879 = vld [vmem:[#allocation6 + $0x268] sm:$0xff]
        %v1880 = vld [vmem:[#allocation6 + $0x270] sm:$0xff]
        %v1881 = vld [vmem:[#allocation6 + $0x278] sm:$0xff]
        %v1882 = vld [vmem:[#allocation6 + $0x280] sm:$0xff]
        %v1883 = vld [vmem:[#allocation6 + $0x288] sm:$0xff]
        %v1884 = vld [vmem:[#allocation6 + $0x290] sm:$0xff]
        %v1885 = vld [vmem:[#allocation6 + $0x298] sm:$0xff]
        %v1886 = vld [vmem:[#allocation6 + $0x2a0] sm:$0xff]
        %v1887 = vld [vmem:[#allocation6 + $0x2a8] sm:$0xff]
        %v1888 = vld [vmem:[#allocation6 + $0x2b0] sm:$0xff]
        %v1889 = vld [vmem:[#allocation6 + $0x2b8] sm:$0xff]
        %v1890 = vld [vmem:[#allocation6 + $0x2c0] sm:$0xff]
        %v1891 = vld [vmem:[#allocation6 + $0x2c8] sm:$0xff]
        %v1892 = vld [vmem:[#allocation6 + $0x2d0] sm:$0xff]
        %v1893 = vld [vmem:[#allocation6 + $0x2d8] sm:$0xff]
        %v1894 = vld [vmem:[#allocation6 + $0x2e0] sm:$0xff]
        %v1895 = vld [vmem:[#allocation6 + $0x2e8] sm:$0xff]
        %v1896 = vld [vmem:[#allocation6 + $0x2f0] sm:$0xff]
        %v1897 = vld [vmem:[#allocation6 + $0x2f8] sm:$0xff]
        %v1898 = vrot.slane %v1617, 2
        %1900 = vmatprep.subr.mxu0 %v1867
        %1901 = vmatpush1.msra.mxu0 %v1866
        %1902 = vmatprep.subr.mxu0 %v1869
        %1903 = vmatpush1.msra.mxu0 %v1868
        %1904 = vmatprep.subr.mxu0 %v1871
        %1905 = vmatpush1.msra.mxu0 %v1870
        %1906 = vmatprep.subr.mxu0 %v1873
        %1907 = vmatpush1.msra.mxu0 %v1872
        %1908 = vmatprep.subr.mxu0 %v1875
        %1909 = vmatpush1.msra.mxu0 %v1874
        %1910 = vmatprep.subr.mxu0 %v1877
        %1911 = vmatpush1.msra.mxu0 %v1876
        %1912 = vmatprep.subr.mxu0 %v1879
        %1913 = vmatpush1.msra.mxu0 %v1878
        %1914 = vmatprep.subr.mxu0 %v1881
        %1915 = vmatpush1.msra.mxu0 %v1880
        %1916 = vmatprep.subr.mxu0 %v1883
        %1917 = vmatpush1.msra.mxu0 %v1882
        %1918 = vmatprep.subr.mxu0 %v1885
        %1919 = vmatpush1.msra.mxu0 %v1884
        %1920 = vmatprep.subr.mxu0 %v1887
        %1921 = vmatpush1.msra.mxu0 %v1886
        %1922 = vmatprep.subr.mxu0 %v1889
        %1923 = vmatpush1.msra.mxu0 %v1888
        %1924 = vmatprep.subr.mxu0 %v1891
        %1925 = vmatpush1.msra.mxu0 %v1890
        %1926 = vmatprep.subr.mxu0 %v1893
        %1927 = vmatpush1.msra.mxu0 %v1892
        %1928 = vmatprep.subr.mxu0 %v1895
        %1929 = vmatpush1.msra.mxu0 %v1894
        %1930 = vmatprep.subr.mxu0 %v1897
        %1931 = vmatpush1.msra.mxu0 %v1896
        %1932 = vmatprep.subr.mxu0 0.0
        %1933 = vmatpush1.msra.mxu0 0.0
        %1934 = vmatprep.subr.mxu0 0.0
        %1935 = vmatpush1.msra.mxu0 0.0
        %1936 = vmatprep.subr.mxu0 0.0
        %1937 = vmatpush1.msra.mxu0 0.0
        %1938 = vmatprep.subr.mxu0 0.0
        %1939 = vmatpush1.msra.mxu0 0.0
        %1940 = vmatprep.subr.mxu0 0.0
        %1941 = vmatpush1.msra.mxu0 0.0
        %1942 = vmatprep.subr.mxu0 0.0
        %1943 = vmatpush1.msra.mxu0 0.0
        %1944 = vmatprep.subr.mxu0 0.0
        %1945 = vmatpush1.msra.mxu0 0.0
        %1946 = vmatprep.subr.mxu0 0.0
        %1947 = vmatpush1.msra.mxu0 0.0
        %1948 = vmatprep.subr.mxu0 0.0
        %1949 = vmatpush1.msra.mxu0 0.0
        %1950 = vmatprep.subr.mxu0 0.0
        %1951 = vmatpush1.msra.mxu0 0.0
        %1952 = vmatprep.subr.mxu0 0.0
        %1953 = vmatpush1.msra.mxu0 0.0
        %1954 = vmatprep.subr.mxu0 0.0
        %1955 = vmatpush1.msra.mxu0 0.0
        %1956 = vmatprep.subr.mxu0 0.0
        %1957 = vmatpush1.msra.mxu0 0.0
        %1958 = vmatprep.subr.mxu0 0.0
        %1959 = vmatpush1.msra.mxu0 0.0
        %1960 = vmatprep.subr.mxu0 0.0
        %1961 = vmatpush1.msra.mxu0 0.0
        %1962 = vmatprep.subr.mxu0 0.0
        %1963 = vmatpush1.msra.mxu0 0.0
        %1964 = vmatprep.mubr.f32.mxu0 0.0
        %1965 = vmatmul.mubr.f32.gmra.mrb[0].mxu0 %v1898
        %v1966 = vpop.f32.mrb[0].mxu0
        %v1967 = vadd.f32 0.0, %v1966
        %v1968 = vpop.f32.mrb[0].mxu0
        %v1969 = vadd.f32 0.0, %v1968
        %1970 = vdwg.mxu0
        %v1973 = vcombine.low %v1967, %v1969
        %v1975 = vunpack.c.l.s4 1966171168
        %v1976 = vunpack.c.0.s8 %v1975
        %v1977 = vlaneseq
        %v1978 = vshrl.u32 %v1977, 7
        %v1979 = vsub.s32 %v1976, %v1978
        %v1980 = vrot.slane %v1973, %v1979
        %v1982 = vunpack.c.l.s4 1966171168
        %v1983 = vunpack.c.0.s8 %v1982
        %v1984 = vlaneseq
        %v1985 = vshrl.u32 %v1984, 7
        %v1986 = vsub.s32 %v1983, %v1985
        %v1987 = vrot.slane %v1980, %v1986
        %v1989 = vadd.f32 %v1865, %v1987
        %v1990 = vld [vmem:[#allocation6 + $0x300] sm:$0xff]
        %v1991 = vld [vmem:[#allocation6 + $0x308] sm:$0xff]
        %v1992 = vld [vmem:[#allocation6 + $0x310] sm:$0xff]
        %v1993 = vld [vmem:[#allocation6 + $0x318] sm:$0xff]
        %v1994 = vld [vmem:[#allocation6 + $0x320] sm:$0xff]
        %v1995 = vld [vmem:[#allocation6 + $0x328] sm:$0xff]
        %v1996 = vld [vmem:[#allocation6 + $0x330] sm:$0xff]
        %v1997 = vld [vmem:[#allocation6 + $0x338] sm:$0xff]
        %v1998 = vld [vmem:[#allocation6 + $0x340] sm:$0xff]
        %v1999 = vld [vmem:[#allocation6 + $0x348] sm:$0xff]
        %v2000 = vld [vmem:[#allocation6 + $0x350] sm:$0xff]
        %v2001 = vld [vmem:[#allocation6 + $0x358] sm:$0xff]
        %v2002 = vld [vmem:[#allocation6 + $0x360] sm:$0xff]
        %v2003 = vld [vmem:[#allocation6 + $0x368] sm:$0xff]
        %v2004 = vld [vmem:[#allocation6 + $0x370] sm:$0xff]
        %v2005 = vld [vmem:[#allocation6 + $0x378] sm:$0xff]
        %v2006 = vld [vmem:[#allocation6 + $0x380] sm:$0xff]
        %v2007 = vld [vmem:[#allocation6 + $0x388] sm:$0xff]
        %v2008 = vld [vmem:[#allocation6 + $0x390] sm:$0xff]
        %v2009 = vld [vmem:[#allocation6 + $0x398] sm:$0xff]
        %v2010 = vld [vmem:[#allocation6 + $0x3a0] sm:$0xff]
        %v2011 = vld [vmem:[#allocation6 + $0x3a8] sm:$0xff]
        %v2012 = vld [vmem:[#allocation6 + $0x3b0] sm:$0xff]
        %v2013 = vld [vmem:[#allocation6 + $0x3b8] sm:$0xff]
        %v2014 = vld [vmem:[#allocation6 + $0x3c0] sm:$0xff]
        %v2015 = vld [vmem:[#allocation6 + $0x3c8] sm:$0xff]
        %v2016 = vld [vmem:[#allocation6 + $0x3d0] sm:$0xff]
        %v2017 = vld [vmem:[#allocation6 + $0x3d8] sm:$0xff]
        %v2018 = vld [vmem:[#allocation6 + $0x3e0] sm:$0xff]
        %v2019 = vld [vmem:[#allocation6 + $0x3e8] sm:$0xff]
        %v2020 = vld [vmem:[#allocation6 + $0x3f0] sm:$0xff]
        %v2021 = vld [vmem:[#allocation6 + $0x3f8] sm:$0xff]
        %v2022 = vrot.slane %v1617, 3
        %2024 = vmatprep.subr.mxu0 %v1991
        %2025 = vmatpush1.msra.mxu0 %v1990
        %2026 = vmatprep.subr.mxu0 %v1993
        %2027 = vmatpush1.msra.mxu0 %v1992
        %2028 = vmatprep.subr.mxu0 %v1995
        %2029 = vmatpush1.msra.mxu0 %v1994
        %2030 = vmatprep.subr.mxu0 %v1997
        %2031 = vmatpush1.msra.mxu0 %v1996
        %2032 = vmatprep.subr.mxu0 %v1999
        %2033 = vmatpush1.msra.mxu0 %v1998
        %2034 = vmatprep.subr.mxu0 %v2001
        %2035 = vmatpush1.msra.mxu0 %v2000
        %2036 = vmatprep.subr.mxu0 %v2003
        %2037 = vmatpush1.msra.mxu0 %v2002
        %2038 = vmatprep.subr.mxu0 %v2005
        %2039 = vmatpush1.msra.mxu0 %v2004
        %2040 = vmatprep.subr.mxu0 %v2007
        %2041 = vmatpush1.msra.mxu0 %v2006
        %2042 = vmatprep.subr.mxu0 %v2009
        %2043 = vmatpush1.msra.mxu0 %v2008
        %2044 = vmatprep.subr.mxu0 %v2011
        %2045 = vmatpush1.msra.mxu0 %v2010
        %2046 = vmatprep.subr.mxu0 %v2013
        %2047 = vmatpush1.msra.mxu0 %v2012
        %2048 = vmatprep.subr.mxu0 %v2015
        %2049 = vmatpush1.msra.mxu0 %v2014
        %2050 = vmatprep.subr.mxu0 %v2017
        %2051 = vmatpush1.msra.mxu0 %v2016
        %2052 = vmatprep.subr.mxu0 %v2019
        %2053 = vmatpush1.msra.mxu0 %v2018
        %2054 = vmatprep.subr.mxu0 %v2021
        %2055 = vmatpush1.msra.mxu0 %v2020
        %2056 = vmatprep.subr.mxu0 0.0
        %2057 = vmatpush1.msra.mxu0 0.0
        %2058 = vmatprep.subr.mxu0 0.0
        %2059 = vmatpush1.msra.mxu0 0.0
        %2060 = vmatprep.subr.mxu0 0.0
        %2061 = vmatpush1.msra.mxu0 0.0
        %2062 = vmatprep.subr.mxu0 0.0
        %2063 = vmatpush1.msra.mxu0 0.0
        %2064 = vmatprep.subr.mxu0 0.0
        %2065 = vmatpush1.msra.mxu0 0.0
        %2066 = vmatprep.subr.mxu0 0.0
        %2067 = vmatpush1.msra.mxu0 0.0
        %2068 = vmatprep.subr.mxu0 0.0
        %2069 = vmatpush1.msra.mxu0 0.0
        %2070 = vmatprep.subr.mxu0 0.0
        %2071 = vmatpush1.msra.mxu0 0.0
        %2072 = vmatprep.subr.mxu0 0.0
        %2073 = vmatpush1.msra.mxu0 0.0
        %2074 = vmatprep.subr.mxu0 0.0
        %2075 = vmatpush1.msra.mxu0 0.0
        %2076 = vmatprep.subr.mxu0 0.0
        %2077 = vmatpush1.msra.mxu0 0.0
        %2078 = vmatprep.subr.mxu0 0.0
        %2079 = vmatpush1.msra.mxu0 0.0
        %2080 = vmatprep.subr.mxu0 0.0
        %2081 = vmatpush1.msra.mxu0 0.0
        %2082 = vmatprep.subr.mxu0 0.0
        %2083 = vmatpush1.msra.mxu0 0.0
        %2084 = vmatprep.subr.mxu0 0.0
        %2085 = vmatpush1.msra.mxu0 0.0
        %2086 = vmatprep.subr.mxu0 0.0
        %2087 = vmatpush1.msra.mxu0 0.0
        %2088 = vmatprep.mubr.f32.mxu0 0.0
        %2089 = vmatmul.mubr.f32.gmra.mrb[0].mxu0 %v2022
        %v2090 = vpop.f32.mrb[0].mxu0
        %v2091 = vadd.f32 0.0, %v2090
        %v2092 = vpop.f32.mrb[0].mxu0
        %v2093 = vadd.f32 0.0, %v2092
        %2094 = vdwg.mxu0
        %v2097 = vcombine.low %v2091, %v2093
        %v2099 = vunpack.c.l.s4 1966171168
        %v2100 = vunpack.c.0.s8 %v2099
        %v2101 = vlaneseq
        %v2102 = vshrl.u32 %v2101, 7
        %v2103 = vsub.s32 %v2100, %v2102
        %v2104 = vrot.slane %v2097, %v2103
        %v2106 = vunpack.c.l.s4 1966171168
        %v2107 = vunpack.c.0.s8 %v2106
        %v2108 = vlaneseq
        %v2109 = vshrl.u32 %v2108, 7
        %v2110 = vsub.s32 %v2107, %v2109
        %v2111 = vrot.slane %v2104, %v2110
        %v2113 = vadd.f32 %v1989, %v2111
        %v2114 = vlaneseq
        %vm2115 = vcmp.ge.s32.totalorder %v2114, 0
        %vm2116 = vcmp.lt.s32.totalorder %v2114, 256
        %vm2117 = vmand %vm2115, %vm2116
        %2118 = vst.msk [vmem:[%s520] sm:$0x3] %vm2117, %v2113
        %v2119 = vld [vmem:[#allocation8] sm:$0xff]
        %v2120 = vld [vmem:[#allocation8 + $0x8] sm:$0xff]
        %v2121 = vld [vmem:[#allocation8 + $0x10] sm:$0xff]
        %v2122 = vld [vmem:[#allocation8 + $0x18] sm:$0xff]
        %v2123 = vld [vmem:[#allocation8 + $0x20] sm:$0xff]
        %v2124 = vld [vmem:[#allocation8 + $0x28] sm:$0xff]
        %v2125 = vld [vmem:[#allocation8 + $0x30] sm:$0xff]
        %v2126 = vld [vmem:[#allocation8 + $0x38] sm:$0xff]
        %v2127 = vld [vmem:[#allocation8 + $0x40] sm:$0xff]
        %v2128 = vld [vmem:[#allocation8 + $0x48] sm:$0xff]
        %v2129 = vld [vmem:[#allocation8 + $0x50] sm:$0xff]
        %v2130 = vld [vmem:[#allocation8 + $0x58] sm:$0xff]
        %v2131 = vld [vmem:[#allocation8 + $0x60] sm:$0xff]
        %v2132 = vld [vmem:[#allocation8 + $0x68] sm:$0xff]
        %v2133 = vld [vmem:[#allocation8 + $0x70] sm:$0xff]
        %v2134 = vld [vmem:[#allocation8 + $0x78] sm:$0xff]
        %v2135 = vld [vmem:[#allocation8 + $0x80] sm:$0xff]
        %v2136 = vld [vmem:[#allocation8 + $0x88] sm:$0xff]
        %v2137 = vld [vmem:[#allocation8 + $0x90] sm:$0xff]
        %v2138 = vld [vmem:[#allocation8 + $0x98] sm:$0xff]
        %v2139 = vld [vmem:[#allocation8 + $0xa0] sm:$0xff]
        %v2140 = vld [vmem:[#allocation8 + $0xa8] sm:$0xff]
        %v2141 = vld [vmem:[#allocation8 + $0xb0] sm:$0xff]
        %v2142 = vld [vmem:[#allocation8 + $0xb8] sm:$0xff]
        %v2143 = vld [vmem:[#allocation8 + $0xc0] sm:$0xff]
        %v2144 = vld [vmem:[#allocation8 + $0xc8] sm:$0xff]
        %v2145 = vld [vmem:[#allocation8 + $0xd0] sm:$0xff]
        %v2146 = vld [vmem:[#allocation8 + $0xd8] sm:$0xff]
        %v2147 = vld [vmem:[#allocation8 + $0xe0] sm:$0xff]
        %v2148 = vld [vmem:[#allocation8 + $0xe8] sm:$0xff]
        %v2149 = vld [vmem:[#allocation8 + $0xf0] sm:$0xff]
        %v2150 = vld [vmem:[#allocation8 + $0xf8] sm:$0xff]
        %v2151 = vld [vmem:[#allocation8 + $0x100] sm:$0xff]
        %v2152 = vld [vmem:[#allocation8 + $0x108] sm:$0xff]
        %v2153 = vld [vmem:[#allocation8 + $0x110] sm:$0xff]
        %v2154 = vld [vmem:[#allocation8 + $0x118] sm:$0xff]
        %v2155 = vld [vmem:[#allocation8 + $0x120] sm:$0xff]
        %v2156 = vld [vmem:[#allocation8 + $0x128] sm:$0xff]
        %v2157 = vld [vmem:[#allocation8 + $0x130] sm:$0xff]
        %v2158 = vld [vmem:[#allocation8 + $0x138] sm:$0xff]
        %v2159 = vld [vmem:[#allocation8 + $0x140] sm:$0xff]
        %v2160 = vld [vmem:[#allocation8 + $0x148] sm:$0xff]
        %v2161 = vld [vmem:[#allocation8 + $0x150] sm:$0xff]
        %v2162 = vld [vmem:[#allocation8 + $0x158] sm:$0xff]
        %v2163 = vld [vmem:[#allocation8 + $0x160] sm:$0xff]
        %v2164 = vld [vmem:[#allocation8 + $0x168] sm:$0xff]
        %v2165 = vld [vmem:[#allocation8 + $0x170] sm:$0xff]
        %v2166 = vld [vmem:[#allocation8 + $0x178] sm:$0xff]
        %v2167 = vld [vmem:[#allocation8 + $0x180] sm:$0xff]
        %v2168 = vld [vmem:[#allocation8 + $0x188] sm:$0xff]
        %v2169 = vld [vmem:[#allocation8 + $0x190] sm:$0xff]
        %v2170 = vld [vmem:[#allocation8 + $0x198] sm:$0xff]
        %v2171 = vld [vmem:[#allocation8 + $0x1a0] sm:$0xff]
        %v2172 = vld [vmem:[#allocation8 + $0x1a8] sm:$0xff]
        %v2173 = vld [vmem:[#allocation8 + $0x1b0] sm:$0xff]
        %v2174 = vld [vmem:[#allocation8 + $0x1b8] sm:$0xff]
        %v2175 = vld [vmem:[#allocation8 + $0x1c0] sm:$0xff]
        %v2176 = vld [vmem:[#allocation8 + $0x1c8] sm:$0xff]
        %v2177 = vld [vmem:[#allocation8 + $0x1d0] sm:$0xff]
        %v2178 = vld [vmem:[#allocation8 + $0x1d8] sm:$0xff]
        %v2179 = vld [vmem:[#allocation8 + $0x1e0] sm:$0xff]
        %v2180 = vld [vmem:[#allocation8 + $0x1e8] sm:$0xff]
        %v2181 = vld [vmem:[#allocation8 + $0x1f0] sm:$0xff]
        %v2182 = vld [vmem:[#allocation8 + $0x1f8] sm:$0xff]
        %v2183 = vld [vmem:[#allocation8 + $0x200] sm:$0xff]
        %v2184 = vld [vmem:[#allocation8 + $0x208] sm:$0xff]
        %v2185 = vld [vmem:[#allocation8 + $0x210] sm:$0xff]
        %v2186 = vld [vmem:[#allocation8 + $0x218] sm:$0xff]
        %v2187 = vld [vmem:[#allocation8 + $0x220] sm:$0xff]
        %v2188 = vld [vmem:[#allocation8 + $0x228] sm:$0xff]
        %v2189 = vld [vmem:[#allocation8 + $0x230] sm:$0xff]
        %v2190 = vld [vmem:[#allocation8 + $0x238] sm:$0xff]
        %v2191 = vld [vmem:[#allocation8 + $0x240] sm:$0xff]
        %v2192 = vld [vmem:[#allocation8 + $0x248] sm:$0xff]
        %v2193 = vld [vmem:[#allocation8 + $0x250] sm:$0xff]
        %v2194 = vld [vmem:[#allocation8 + $0x258] sm:$0xff]
        %v2195 = vld [vmem:[#allocation8 + $0x260] sm:$0xff]
        %v2196 = vld [vmem:[#allocation8 + $0x268] sm:$0xff]
        %v2197 = vld [vmem:[#allocation8 + $0x270] sm:$0xff]
        %v2198 = vld [vmem:[#allocation8 + $0x278] sm:$0xff]
        %v2199 = vld [vmem:[#allocation8 + $0x280] sm:$0xff]
        %v2200 = vld [vmem:[#allocation8 + $0x288] sm:$0xff]
        %v2201 = vld [vmem:[#allocation8 + $0x290] sm:$0xff]
        %v2202 = vld [vmem:[#allocation8 + $0x298] sm:$0xff]
        %v2203 = vld [vmem:[#allocation8 + $0x2a0] sm:$0xff]
        %v2204 = vld [vmem:[#allocation8 + $0x2a8] sm:$0xff]
        %v2205 = vld [vmem:[#allocation8 + $0x2b0] sm:$0xff]
        %v2206 = vld [vmem:[#allocation8 + $0x2b8] sm:$0xff]
        %v2207 = vld [vmem:[#allocation8 + $0x2c0] sm:$0xff]
        %v2208 = vld [vmem:[#allocation8 + $0x2c8] sm:$0xff]
        %v2209 = vld [vmem:[#allocation8 + $0x2d0] sm:$0xff]
        %v2210 = vld [vmem:[#allocation8 + $0x2d8] sm:$0xff]
        %v2211 = vld [vmem:[#allocation8 + $0x2e0] sm:$0xff]
        %v2212 = vld [vmem:[#allocation8 + $0x2e8] sm:$0xff]
        %v2213 = vld [vmem:[#allocation8 + $0x2f0] sm:$0xff]
        %v2214 = vld [vmem:[#allocation8 + $0x2f8] sm:$0xff]
        %v2215 = vld [vmem:[#allocation8 + $0x300] sm:$0xff]
        %v2216 = vld [vmem:[#allocation8 + $0x308] sm:$0xff]
        %v2217 = vld [vmem:[#allocation8 + $0x310] sm:$0xff]
        %v2218 = vld [vmem:[#allocation8 + $0x318] sm:$0xff]
        %v2219 = vld [vmem:[#allocation8 + $0x320] sm:$0xff]
        %v2220 = vld [vmem:[#allocation8 + $0x328] sm:$0xff]
        %v2221 = vld [vmem:[#allocation8 + $0x330] sm:$0xff]
        %v2222 = vld [vmem:[#allocation8 + $0x338] sm:$0xff]
        %v2223 = vld [vmem:[#allocation8 + $0x340] sm:$0xff]
        %v2224 = vld [vmem:[#allocation8 + $0x348] sm:$0xff]
        %v2225 = vld [vmem:[#allocation8 + $0x350] sm:$0xff]
        %v2226 = vld [vmem:[#allocation8 + $0x358] sm:$0xff]
        %v2227 = vld [vmem:[#allocation8 + $0x360] sm:$0xff]
        %v2228 = vld [vmem:[#allocation8 + $0x368] sm:$0xff]
        %v2229 = vld [vmem:[#allocation8 + $0x370] sm:$0xff]
        %v2230 = vld [vmem:[#allocation8 + $0x378] sm:$0xff]
        %v2231 = vld [vmem:[#allocation8 + $0x380] sm:$0xff]
        %v2232 = vld [vmem:[#allocation8 + $0x388] sm:$0xff]
        %v2233 = vld [vmem:[#allocation8 + $0x390] sm:$0xff]
        %v2234 = vld [vmem:[#allocation8 + $0x398] sm:$0xff]
        %v2235 = vld [vmem:[#allocation8 + $0x3a0] sm:$0xff]
        %v2236 = vld [vmem:[#allocation8 + $0x3a8] sm:$0xff]
        %v2237 = vld [vmem:[#allocation8 + $0x3b0] sm:$0xff]
        %v2238 = vld [vmem:[#allocation8 + $0x3b8] sm:$0xff]
        %v2239 = vld [vmem:[#allocation8 + $0x3c0] sm:$0xff]
        %v2240 = vld [vmem:[#allocation8 + $0x3c8] sm:$0xff]
        %v2241 = vld [vmem:[#allocation8 + $0x3d0] sm:$0xff]
        %v2242 = vld [vmem:[#allocation8 + $0x3d8] sm:$0xff]
        %v2243 = vld [vmem:[#allocation8 + $0x3e0] sm:$0xff]
        %v2244 = vld [vmem:[#allocation8 + $0x3e8] sm:$0xff]
        %v2245 = vld [vmem:[#allocation8 + $0x3f0] sm:$0xff]
        %v2246 = vld [vmem:[#allocation8 + $0x3f8] sm:$0xff]
        %v2247 = vld [vmem:[%s8] sm:$0xf]
        %v2249 = vlaneseq
        %v2250 = vshrl.u32 %v2249, 7
        %v2251 = vsub.s32 0, %v2250
        %v2252 = vrot.slane %v2113, %v2251
        %v2253 = vlaneseq
        %v2254 = vshrl.u32 %v2253, 7
        %v2255 = vsub.s32 1, %v2254
        %v2256 = vrot.slane %v2113, %v2255
        %v2260 = vlaneseq
        %v2261 = vshrl.u32 %v2260, 7
        %v2262 = vsub.s32 0, %v2261
        %v2263 = vrot.slane %v2247, %v2262
        %v2264 = vlaneseq
        %v2265 = vshrl.u32 %v2264, 7
        %v2266 = vsub.s32 1, %v2265
        %v2267 = vrot.slane %v2247, %v2266
        %v2268 = vlaneseq
        %v2269 = vshrl.u32 %v2268, 7
        %v2270 = vsub.s32 2, %v2269
        %v2271 = vrot.slane %v2247, %v2270
        %v2272 = vlaneseq
        %v2273 = vshrl.u32 %v2272, 7
        %v2274 = vsub.s32 3, %v2273
        %v2275 = vrot.slane %v2247, %v2274
        %2280 = vmatprep.subr.mxu0 %v2120
        %2281 = vmatpush1.msra.mxu0 %v2119
        %2282 = vmatprep.subr.mxu0 %v2124
        %2283 = vmatpush1.msra.mxu0 %v2123
        %2284 = vmatprep.subr.mxu0 %v2128
        %2285 = vmatpush1.msra.mxu0 %v2127
        %2286 = vmatprep.subr.mxu0 %v2132
        %2287 = vmatpush1.msra.mxu0 %v2131
        %2288 = vmatprep.subr.mxu0 %v2136
        %2289 = vmatpush1.msra.mxu0 %v2135
        %2290 = vmatprep.subr.mxu0 %v2140
        %2291 = vmatpush1.msra.mxu0 %v2139
        %2292 = vmatprep.subr.mxu0 %v2144
        %2293 = vmatpush1.msra.mxu0 %v2143
        %2294 = vmatprep.subr.mxu0 %v2148
        %2295 = vmatpush1.msra.mxu0 %v2147
        %2296 = vmatprep.subr.mxu0 %v2152
        %2297 = vmatpush1.msra.mxu0 %v2151
        %2298 = vmatprep.subr.mxu0 %v2156
        %2299 = vmatpush1.msra.mxu0 %v2155
        %2300 = vmatprep.subr.mxu0 %v2160
        %2301 = vmatpush1.msra.mxu0 %v2159
        %2302 = vmatprep.subr.mxu0 %v2164
        %2303 = vmatpush1.msra.mxu0 %v2163
        %2304 = vmatprep.subr.mxu0 %v2168
        %2305 = vmatpush1.msra.mxu0 %v2167
        %2306 = vmatprep.subr.mxu0 %v2172
        %2307 = vmatpush1.msra.mxu0 %v2171
        %2308 = vmatprep.subr.mxu0 %v2176
        %2309 = vmatpush1.msra.mxu0 %v2175
        %2310 = vmatprep.subr.mxu0 %v2180
        %2311 = vmatpush1.msra.mxu0 %v2179
        %2312 = vmatprep.subr.mxu0 %v2184
        %2313 = vmatpush1.msra.mxu0 %v2183
        %2314 = vmatprep.subr.mxu0 %v2188
        %2315 = vmatpush1.msra.mxu0 %v2187
        %2316 = vmatprep.subr.mxu0 %v2192
        %2317 = vmatpush1.msra.mxu0 %v2191
        %2318 = vmatprep.subr.mxu0 %v2196
        %2319 = vmatpush1.msra.mxu0 %v2195
        %2320 = vmatprep.subr.mxu0 %v2200
        %2321 = vmatpush1.msra.mxu0 %v2199
        %2322 = vmatprep.subr.mxu0 %v2204
        %2323 = vmatpush1.msra.mxu0 %v2203
        %2324 = vmatprep.subr.mxu0 %v2208
        %2325 = vmatpush1.msra.mxu0 %v2207
        %2326 = vmatprep.subr.mxu0 %v2212
        %2327 = vmatpush1.msra.mxu0 %v2211
        %2328 = vmatprep.subr.mxu0 %v2216
        %2329 = vmatpush1.msra.mxu0 %v2215
        %2330 = vmatprep.subr.mxu0 %v2220
        %2331 = vmatpush1.msra.mxu0 %v2219
        %2332 = vmatprep.subr.mxu0 %v2224
        %2333 = vmatpush1.msra.mxu0 %v2223
        %2334 = vmatprep.subr.mxu0 %v2228
        %2335 = vmatpush1.msra.mxu0 %v2227
        %2336 = vmatprep.subr.mxu0 %v2232
        %2337 = vmatpush1.msra.mxu0 %v2231
        %2338 = vmatprep.subr.mxu0 %v2236
        %2339 = vmatpush1.msra.mxu0 %v2235
        %2340 = vmatprep.subr.mxu0 %v2240
        %2341 = vmatpush1.msra.mxu0 %v2239
        %2342 = vmatprep.subr.mxu0 %v2244
        %2343 = vmatpush1.msra.mxu0 %v2243
        %2344 = vmatprep.mubr.f32.mxu0 %v2256
        %2345 = vmatmul.mubr.f32.gmra.mrb[0].mxu0 %v2252
        %v2346 = vpop.f32.mrb[0].mxu0
        %v2347 = vadd.f32 %v2263, %v2346
        %v2348 = vpop.f32.mrb[0].mxu0
        %v2349 = vadd.f32 %v2267, %v2348
        %2350 = vdwg.mxu0
        %2351 = vmatprep.subr.mxu0 %v2122
        %2352 = vmatpush1.msra.mxu0 %v2121
        %2353 = vmatprep.subr.mxu0 %v2126
        %2354 = vmatpush1.msra.mxu0 %v2125
        %2355 = vmatprep.subr.mxu0 %v2130
        %2356 = vmatpush1.msra.mxu0 %v2129
        %2357 = vmatprep.subr.mxu0 %v2134
        %2358 = vmatpush1.msra.mxu0 %v2133
        %2359 = vmatprep.subr.mxu0 %v2138
        %2360 = vmatpush1.msra.mxu0 %v2137
        %2361 = vmatprep.subr.mxu0 %v2142
        %2362 = vmatpush1.msra.mxu0 %v2141
        %2363 = vmatprep.subr.mxu0 %v2146
        %2364 = vmatpush1.msra.mxu0 %v2145
        %2365 = vmatprep.subr.mxu0 %v2150
        %2366 = vmatpush1.msra.mxu0 %v2149
        %2367 = vmatprep.subr.mxu0 %v2154
        %2368 = vmatpush1.msra.mxu0 %v2153
        %2369 = vmatprep.subr.mxu0 %v2158
        %2370 = vmatpush1.msra.mxu0 %v2157
        %2371 = vmatprep.subr.mxu0 %v2162
        %2372 = vmatpush1.msra.mxu0 %v2161
        %2373 = vmatprep.subr.mxu0 %v2166
        %2374 = vmatpush1.msra.mxu0 %v2165
        %2375 = vmatprep.subr.mxu0 %v2170
        %2376 = vmatpush1.msra.mxu0 %v2169
        %2377 = vmatprep.subr.mxu0 %v2174
        %2378 = vmatpush1.msra.mxu0 %v2173
        %2379 = vmatprep.subr.mxu0 %v2178
        %2380 = vmatpush1.msra.mxu0 %v2177
        %2381 = vmatprep.subr.mxu0 %v2182
        %2382 = vmatpush1.msra.mxu0 %v2181
        %2383 = vmatprep.subr.mxu0 %v2186
        %2384 = vmatpush1.msra.mxu0 %v2185
        %2385 = vmatprep.subr.mxu0 %v2190
        %2386 = vmatpush1.msra.mxu0 %v2189
        %2387 = vmatprep.subr.mxu0 %v2194
        %2388 = vmatpush1.msra.mxu0 %v2193
        %2389 = vmatprep.subr.mxu0 %v2198
        %2390 = vmatpush1.msra.mxu0 %v2197
        %2391 = vmatprep.subr.mxu0 %v2202
        %2392 = vmatpush1.msra.mxu0 %v2201
        %2393 = vmatprep.subr.mxu0 %v2206
        %2394 = vmatpush1.msra.mxu0 %v2205
        %2395 = vmatprep.subr.mxu0 %v2210
        %2396 = vmatpush1.msra.mxu0 %v2209
        %2397 = vmatprep.subr.mxu0 %v2214
        %2398 = vmatpush1.msra.mxu0 %v2213
        %2399 = vmatprep.subr.mxu0 %v2218
        %2400 = vmatpush1.msra.mxu0 %v2217
        %2401 = vmatprep.subr.mxu0 %v2222
        %2402 = vmatpush1.msra.mxu0 %v2221
        %2403 = vmatprep.subr.mxu0 %v2226
        %2404 = vmatpush1.msra.mxu0 %v2225
        %2405 = vmatprep.subr.mxu0 %v2230
        %2406 = vmatpush1.msra.mxu0 %v2229
        %2407 = vmatprep.subr.mxu0 %v2234
        %2408 = vmatpush1.msra.mxu0 %v2233
        %2409 = vmatprep.subr.mxu0 %v2238
        %2410 = vmatpush1.msra.mxu0 %v2237
        %2411 = vmatprep.subr.mxu0 %v2242
        %2412 = vmatpush1.msra.mxu0 %v2241
        %2413 = vmatprep.subr.mxu0 %v2246
        %2414 = vmatpush1.msra.mxu0 %v2245
        %2415 = vmatprep.mubr.f32.mxu0 %v2256
        %2416 = vmatmul.mubr.f32.gmra.mrb[0].mxu0 %v2252
        %v2417 = vpop.f32.mrb[0].mxu0
        %v2418 = vadd.f32 %v2271, %v2417
        %v2419 = vpop.f32.mrb[0].mxu0
        %v2420 = vadd.f32 %v2275, %v2419
        %2421 = vdwg.mxu0
        %2422 = vst [vmem:[#allocation2 + $0x4] sm:$0x1] 0.0
        %2423 = vst [vmem:[#allocation2] sm:$0x1] %v2347
        %2424 = vst [vmem:[#allocation2 + $0x1] sm:$0x1] %v2349
        %2425 = vst [vmem:[#allocation2 + $0x2] sm:$0x1] %v2418
        %2426 = vst [vmem:[#allocation2 + $0x3] sm:$0x1] %v2420
        %v2427 = vld [vmem:[#allocation2] sm:$0xf]
        %v2428 = vld [vmem:[#allocation2 + $0x1] sm:$0xf]
        %v2429 = vld [vmem:[%s9] sm:$0xff]
        %v2430 = vld [vmem:[%s9 + $0x8] sm:$0xff]
        %v2431 = vld [vmem:[%s9 + $0x10] sm:$0xff]
        %v2432 = vld [vmem:[%s9 + $0x18] sm:$0xff]
        %v2433 = vld [vmem:[%s9 + $0x20] sm:$0xff]
        %v2434 = vld [vmem:[%s9 + $0x28] sm:$0xff]
        %v2435 = vld [vmem:[%s9 + $0x30] sm:$0xff]
        %v2436 = vld [vmem:[%s9 + $0x38] sm:$0xff]
        %v2437 = vld [vmem:[%s9 + $0x40] sm:$0xff]
        %v2438 = vld [vmem:[%s9 + $0x48] sm:$0xff]
        %v2439 = vld [vmem:[%s9 + $0x50] sm:$0xff]
        %v2440 = vld [vmem:[%s9 + $0x58] sm:$0xff]
        %v2441 = vld [vmem:[%s9 + $0x60] sm:$0xff]
        %v2442 = vld [vmem:[%s9 + $0x68] sm:$0xff]
        %v2443 = vld [vmem:[%s9 + $0x70] sm:$0xff]
        %v2444 = vld [vmem:[%s9 + $0x78] sm:$0xff]
        %v2445 = vld [vmem:[%s10] sm:$0x1]
        %v2447 = vlaneseq
        %v2448 = vshrl.u32 %v2447, 7
        %v2449 = vsub.s32 0, %v2448
        %v2450 = vrot.slane %v2445, %v2449
        %2452 = vmatprep.subr.mxu0 0.0
        %2453 = vmatpush1.msra.mxu0 %v2429
        %2454 = vmatprep.subr.mxu0 0.0
        %2455 = vmatpush1.msra.mxu0 %v2430
        %2456 = vmatprep.subr.mxu0 0.0
        %2457 = vmatpush1.msra.mxu0 %v2431
        %2458 = vmatprep.subr.mxu0 0.0
        %2459 = vmatpush1.msra.mxu0 %v2432
        %2460 = vmatprep.subr.mxu0 0.0
        %2461 = vmatpush1.msra.mxu0 %v2433
        %2462 = vmatprep.subr.mxu0 0.0
        %2463 = vmatpush1.msra.mxu0 %v2434
        %2464 = vmatprep.subr.mxu0 0.0
        %2465 = vmatpush1.msra.mxu0 %v2435
        %2466 = vmatprep.subr.mxu0 0.0
        %2467 = vmatpush1.msra.mxu0 %v2436
        %2468 = vmatprep.subr.mxu0 0.0
        %2469 = vmatpush1.msra.mxu0 %v2437
        %2470 = vmatprep.subr.mxu0 0.0
        %2471 = vmatpush1.msra.mxu0 %v2438
        %2472 = vmatprep.subr.mxu0 0.0
        %2473 = vmatpush1.msra.mxu0 %v2439
        %2474 = vmatprep.subr.mxu0 0.0
        %2475 = vmatpush1.msra.mxu0 %v2440
        %2476 = vmatprep.subr.mxu0 0.0
        %2477 = vmatpush1.msra.mxu0 %v2441
        %2478 = vmatprep.subr.mxu0 0.0
        %2479 = vmatpush1.msra.mxu0 %v2442
        %2480 = vmatprep.subr.mxu0 0.0
        %2481 = vmatpush1.msra.mxu0 %v2443
        %2482 = vmatprep.subr.mxu0 0.0
        %2483 = vmatpush1.msra.mxu0 %v2444
        %2484 = vmatprep.subr.mxu0 0.0
        %2485 = vmatpush1.msra.mxu0 0.0
        %2486 = vmatprep.subr.mxu0 0.0
        %2487 = vmatpush1.msra.mxu0 0.0
        %2488 = vmatprep.subr.mxu0 0.0
        %2489 = vmatpush1.msra.mxu0 0.0
        %2490 = vmatprep.subr.mxu0 0.0
        %2491 = vmatpush1.msra.mxu0 0.0
        %2492 = vmatprep.subr.mxu0 0.0
        %2493 = vmatpush1.msra.mxu0 0.0
        %2494 = vmatprep.subr.mxu0 0.0
        %2495 = vmatpush1.msra.mxu0 0.0
        %2496 = vmatprep.subr.mxu0 0.0
        %2497 = vmatpush1.msra.mxu0 0.0
        %2498 = vmatprep.subr.mxu0 0.0
        %2499 = vmatpush1.msra.mxu0 0.0
        %2500 = vmatprep.subr.mxu0 0.0
        %2501 = vmatpush1.msra.mxu0 0.0
        %2502 = vmatprep.subr.mxu0 0.0
        %2503 = vmatpush1.msra.mxu0 0.0
        %2504 = vmatprep.subr.mxu0 0.0
        %2505 = vmatpush1.msra.mxu0 0.0
        %2506 = vmatprep.subr.mxu0 0.0
        %2507 = vmatpush1.msra.mxu0 0.0
        %2508 = vmatprep.subr.mxu0 0.0
        %2509 = vmatpush1.msra.mxu0 0.0
        %2510 = vmatprep.subr.mxu0 0.0
        %2511 = vmatpush1.msra.mxu0 0.0
        %2512 = vmatprep.subr.mxu0 0.0
        %2513 = vmatpush1.msra.mxu0 0.0
        %2514 = vmatprep.subr.mxu0 0.0
        %2515 = vmatpush1.msra.mxu0 0.0
        %2516 = vmatprep.mubr.f32.mxu0 0.0
        %2517 = vmatmul.mubr.f32.gmra.mrb[0].mxu0 %v2427
        %v2518 = vpop.f32.mrb[0].mxu0
        %v2519 = vadd.f32 %v2450, %v2518
        %v2520 = vpop.f32.mrb[0].mxu0
        %2521 = vdwg.mxu0
        %v2522 = vmax.f32 %v2519, 0.0
        %s2523 = scalar_lea.vmem %s9, 128
        %v2524 = vld [vmem:[%s2523] sm:$0xff]
        %v2525 = vld [vmem:[%s2523 + $0x8] sm:$0xff]
        %v2526 = vld [vmem:[%s2523 + $0x10] sm:$0xff]
        %v2527 = vld [vmem:[%s2523 + $0x18] sm:$0xff]
        %v2528 = vld [vmem:[%s2523 + $0x20] sm:$0xff]
        %v2529 = vld [vmem:[%s2523 + $0x28] sm:$0xff]
        %v2530 = vld [vmem:[%s2523 + $0x30] sm:$0xff]
        %v2531 = vld [vmem:[%s2523 + $0x38] sm:$0xff]
        %v2532 = vld [vmem:[%s2523 + $0x40] sm:$0xff]
        %v2533 = vld [vmem:[%s2523 + $0x48] sm:$0xff]
        %v2534 = vld [vmem:[%s2523 + $0x50] sm:$0xff]
        %v2535 = vld [vmem:[%s2523 + $0x58] sm:$0xff]
        %v2536 = vld [vmem:[%s2523 + $0x60] sm:$0xff]
        %v2537 = vld [vmem:[%s2523 + $0x68] sm:$0xff]
        %v2538 = vld [vmem:[%s2523 + $0x70] sm:$0xff]
        %v2539 = vld [vmem:[%s2523 + $0x78] sm:$0xff]
        %s2540 = scalar_lea.vmem %s9, 256
        %v2541 = vld [vmem:[%s2540] sm:$0xff]
        %v2542 = vld [vmem:[%s2540 + $0x8] sm:$0xff]
        %v2543 = vld [vmem:[%s2540 + $0x10] sm:$0xff]
        %v2544 = vld [vmem:[%s2540 + $0x18] sm:$0xff]
        %v2545 = vld [vmem:[%s2540 + $0x20] sm:$0xff]
        %v2546 = vld [vmem:[%s2540 + $0x28] sm:$0xff]
        %v2547 = vld [vmem:[%s2540 + $0x30] sm:$0xff]
        %v2548 = vld [vmem:[%s2540 + $0x38] sm:$0xff]
        %v2549 = vld [vmem:[%s2540 + $0x40] sm:$0xff]
        %v2550 = vld [vmem:[%s2540 + $0x48] sm:$0xff]
        %v2551 = vld [vmem:[%s2540 + $0x50] sm:$0xff]
        %v2552 = vld [vmem:[%s2540 + $0x58] sm:$0xff]
        %v2553 = vld [vmem:[%s2540 + $0x60] sm:$0xff]
        %v2554 = vld [vmem:[%s2540 + $0x68] sm:$0xff]
        %v2555 = vld [vmem:[%s2540 + $0x70] sm:$0xff]
        %v2556 = vld [vmem:[%s2540 + $0x78] sm:$0xff]
        %2557 = vmatprep.subr.mxu0 0.0
        %2558 = vmatpush1.msra.mxu0 %v2541
        %2559 = vmatprep.subr.mxu0 0.0
        %2560 = vmatpush1.msra.mxu0 %v2542
        %2561 = vmatprep.subr.mxu0 0.0
        %2562 = vmatpush1.msra.mxu0 %v2543
        %2563 = vmatprep.subr.mxu0 0.0
        %2564 = vmatpush1.msra.mxu0 %v2544
        %2565 = vmatprep.subr.mxu0 0.0
        %2566 = vmatpush1.msra.mxu0 %v2545
        %2567 = vmatprep.subr.mxu0 0.0
        %2568 = vmatpush1.msra.mxu0 %v2546
        %2569 = vmatprep.subr.mxu0 0.0
        %2570 = vmatpush1.msra.mxu0 %v2547
        %2571 = vmatprep.subr.mxu0 0.0
        %2572 = vmatpush1.msra.mxu0 %v2548
        %2573 = vmatprep.subr.mxu0 0.0
        %2574 = vmatpush1.msra.mxu0 %v2549
        %2575 = vmatprep.subr.mxu0 0.0
        %2576 = vmatpush1.msra.mxu0 %v2550
        %2577 = vmatprep.subr.mxu0 0.0
        %2578 = vmatpush1.msra.mxu0 %v2551
        %2579 = vmatprep.subr.mxu0 0.0
        %2580 = vmatpush1.msra.mxu0 %v2552
        %2581 = vmatprep.subr.mxu0 0.0
        %2582 = vmatpush1.msra.mxu0 %v2553
        %2583 = vmatprep.subr.mxu0 0.0
        %2584 = vmatpush1.msra.mxu0 %v2554
        %2585 = vmatprep.subr.mxu0 0.0
        %2586 = vmatpush1.msra.mxu0 %v2555
        %2587 = vmatprep.subr.mxu0 0.0
        %2588 = vmatpush1.msra.mxu0 %v2556
        %2589 = vmatprep.subr.mxu0 0.0
        %2590 = vmatpush1.msra.mxu0 0.0
        %2591 = vmatprep.subr.mxu0 0.0
        %2592 = vmatpush1.msra.mxu0 0.0
        %2593 = vmatprep.subr.mxu0 0.0
        %2594 = vmatpush1.msra.mxu0 0.0
        %2595 = vmatprep.subr.mxu0 0.0
        %2596 = vmatpush1.msra.mxu0 0.0
        %2597 = vmatprep.subr.mxu0 0.0
        %2598 = vmatpush1.msra.mxu0 0.0
        %2599 = vmatprep.subr.mxu0 0.0
        %2600 = vmatpush1.msra.mxu0 0.0
        %2601 = vmatprep.subr.mxu0 0.0
        %2602 = vmatpush1.msra.mxu0 0.0
        %2603 = vmatprep.subr.mxu0 0.0
        %2604 = vmatpush1.msra.mxu0 0.0
        %2605 = vmatprep.subr.mxu0 0.0
        %2606 = vmatpush1.msra.mxu0 0.0
        %2607 = vmatprep.subr.mxu0 0.0
        %2608 = vmatpush1.msra.mxu0 0.0
        %2609 = vmatprep.subr.mxu0 0.0
        %2610 = vmatpush1.msra.mxu0 0.0
        %2611 = vmatprep.subr.mxu0 0.0
        %2612 = vmatpush1.msra.mxu0 0.0
        %2613 = vmatprep.subr.mxu0 0.0
        %2614 = vmatpush1.msra.mxu0 0.0
        %2615 = vmatprep.subr.mxu0 0.0
        %2616 = vmatpush1.msra.mxu0 0.0
        %2617 = vmatprep.subr.mxu0 0.0
        %2618 = vmatpush1.msra.mxu0 0.0
        %2619 = vmatprep.subr.mxu0 0.0
        %2620 = vmatpush1.msra.mxu0 0.0
        %2621 = vmatprep.mubr.f32.mxu0 0.0
        %2622 = vmatmul.mubr.f32.gmra.mrb[0].mxu0 %v2427
        %v2623 = vpop.f32.mrb[0].mxu0
        %v2624 = vadd.f32 0.0, %v2623
        %v2625 = vpop.f32.mrb[0].mxu0
        %2626 = vdwg.mxu0
        %2627 = vmatprep.subr.mxu0 0.0
        %2628 = vmatpush1.msra.mxu0 %v2524
        %2629 = vmatprep.subr.mxu0 0.0
        %2630 = vmatpush1.msra.mxu0 %v2525
        %2631 = vmatprep.subr.mxu0 0.0
        %2632 = vmatpush1.msra.mxu0 %v2526
        %2633 = vmatprep.subr.mxu0 0.0
        %2634 = vmatpush1.msra.mxu0 %v2527
        %2635 = vmatprep.subr.mxu0 0.0
        %2636 = vmatpush1.msra.mxu0 %v2528
        %2637 = vmatprep.subr.mxu0 0.0
        %2638 = vmatpush1.msra.mxu0 %v2529
        %2639 = vmatprep.subr.mxu0 0.0
        %2640 = vmatpush1.msra.mxu0 %v2530
        %2641 = vmatprep.subr.mxu0 0.0
        %2642 = vmatpush1.msra.mxu0 %v2531
        %2643 = vmatprep.subr.mxu0 0.0
        %2644 = vmatpush1.msra.mxu0 %v2532
        %2645 = vmatprep.subr.mxu0 0.0
        %2646 = vmatpush1.msra.mxu0 %v2533
        %2647 = vmatprep.subr.mxu0 0.0
        %2648 = vmatpush1.msra.mxu0 %v2534
        %2649 = vmatprep.subr.mxu0 0.0
        %2650 = vmatpush1.msra.mxu0 %v2535
        %2651 = vmatprep.subr.mxu0 0.0
        %2652 = vmatpush1.msra.mxu0 %v2536
        %2653 = vmatprep.subr.mxu0 0.0
        %2654 = vmatpush1.msra.mxu0 %v2537
        %2655 = vmatprep.subr.mxu0 0.0
        %2656 = vmatpush1.msra.mxu0 %v2538
        %2657 = vmatprep.subr.mxu0 0.0
        %2658 = vmatpush1.msra.mxu0 %v2539
        %2659 = vmatprep.subr.mxu0 0.0
        %2660 = vmatpush1.msra.mxu0 0.0
        %2661 = vmatprep.subr.mxu0 0.0
        %2662 = vmatpush1.msra.mxu0 0.0
        %2663 = vmatprep.subr.mxu0 0.0
        %2664 = vmatpush1.msra.mxu0 0.0
        %2665 = vmatprep.subr.mxu0 0.0
        %2666 = vmatpush1.msra.mxu0 0.0
        %2667 = vmatprep.subr.mxu0 0.0
        %2668 = vmatpush1.msra.mxu0 0.0
        %2669 = vmatprep.subr.mxu0 0.0
        %2670 = vmatpush1.msra.mxu0 0.0
        %2671 = vmatprep.subr.mxu0 0.0
        %2672 = vmatpush1.msra.mxu0 0.0
        %2673 = vmatprep.subr.mxu0 0.0
        %2674 = vmatpush1.msra.mxu0 0.0
        %2675 = vmatprep.subr.mxu0 0.0
        %2676 = vmatpush1.msra.mxu0 0.0
        %2677 = vmatprep.subr.mxu0 0.0
        %2678 = vmatpush1.msra.mxu0 0.0
        %2679 = vmatprep.subr.mxu0 0.0
        %2680 = vmatpush1.msra.mxu0 0.0
        %2681 = vmatprep.subr.mxu0 0.0
        %2682 = vmatpush1.msra.mxu0 0.0
        %2683 = vmatprep.subr.mxu0 0.0
        %2684 = vmatpush1.msra.mxu0 0.0
        %2685 = vmatprep.subr.mxu0 0.0
        %2686 = vmatpush1.msra.mxu0 0.0
        %2687 = vmatprep.subr.mxu0 0.0
        %2688 = vmatpush1.msra.mxu0 0.0
        %2689 = vmatprep.subr.mxu0 0.0
        %2690 = vmatpush1.msra.mxu0 0.0
        %2691 = vmatprep.mubr.f32.mxu0 0.0
        %2692 = vmatmul.mubr.f32.gmra.mrb[0].mxu0 %v2428
        %v2693 = vpop.f32.mrb[0].mxu0
        %v2694 = vadd.f32 %v2624, %v2693
        %v2695 = vpop.f32.mrb[0].mxu0
        %2696 = vdwg.mxu0
        %v2697 = vadd.f32 %v2694, %v2450
        %v2698 = vmax.f32 %v2697, 0.0
        %v2699 = vmul.u32 %v831, 2
        %vm2700 = vcmp.eq.s32.totalorder %v829, %v2699
        %v2701 = vsel %vm2700, 1.0, 0.0
        %v2702 = vadd.s32 %v2699, 1
        %vm2703 = vcmp.eq.s32.totalorder %v829, %v2702
        %v2704 = vsel %vm2703, 1.0, 0.0
        %vm2705 = vcmask 31744
        %v2707 = vsel %vm2705, %v2704, 0
        %vm2709 = vcmask 1043456
        %v2711 = vsel %vm2709, %v2698, 0
        %2713 = vmatprep.subr.mxu0 0.0
        %2714 = vmatpush1.msra.mxu0 %v2711
        %2715 = vmatprep.subr.mxu0 0.0
        %2716 = vmatpush1.msra.mxu0 0.0
        %2717 = vmatprep.subr.mxu0 0.0
        %2718 = vmatpush1.msra.mxu0 0.0
        %2719 = vmatprep.subr.mxu0 0.0
        %2720 = vmatpush1.msra.mxu0 0.0
        %2721 = vmatprep.subr.mxu0 0.0
        %2722 = vmatpush1.msra.mxu0 0.0
        %2723 = vmatprep.subr.mxu0 0.0
        %2724 = vmatpush1.msra.mxu0 0.0
        %2725 = vmatprep.subr.mxu0 0.0
        %2726 = vmatpush1.msra.mxu0 0.0
        %2727 = vmatprep.subr.mxu0 0.0
        %2728 = vmatpush1.msra.mxu0 0.0
        %2729 = vmatprep.subr.mxu0 0.0
        %2730 = vmatpush1.msra.mxu0 0.0
        %2731 = vmatprep.subr.mxu0 0.0
        %2732 = vmatpush1.msra.mxu0 0.0
        %2733 = vmatprep.subr.mxu0 0.0
        %2734 = vmatpush1.msra.mxu0 0.0
        %2735 = vmatprep.subr.mxu0 0.0
        %2736 = vmatpush1.msra.mxu0 0.0
        %2737 = vmatprep.subr.mxu0 0.0
        %2738 = vmatpush1.msra.mxu0 0.0
        %2739 = vmatprep.subr.mxu0 0.0
        %2740 = vmatpush1.msra.mxu0 0.0
        %2741 = vmatprep.subr.mxu0 0.0
        %2742 = vmatpush1.msra.mxu0 0.0
        %2743 = vmatprep.subr.mxu0 0.0
        %2744 = vmatpush1.msra.mxu0 0.0
        %2745 = vmatprep.subr.mxu0 0.0
        %2746 = vmatpush1.msra.mxu0 0.0
        %2747 = vmatprep.subr.mxu0 0.0
        %2748 = vmatpush1.msra.mxu0 0.0
        %2749 = vmatprep.subr.mxu0 0.0
        %2750 = vmatpush1.msra.mxu0 0.0
        %2751 = vmatprep.subr.mxu0 0.0
        %2752 = vmatpush1.msra.mxu0 0.0
        %2753 = vmatprep.subr.mxu0 0.0
        %2754 = vmatpush1.msra.mxu0 0.0
        %2755 = vmatprep.subr.mxu0 0.0
        %2756 = vmatpush1.msra.mxu0 0.0
        %2757 = vmatprep.subr.mxu0 0.0
        %2758 = vmatpush1.msra.mxu0 0.0
        %2759 = vmatprep.subr.mxu0 0.0
        %2760 = vmatpush1.msra.mxu0 0.0
        %2761 = vmatprep.subr.mxu0 0.0
        %2762 = vmatpush1.msra.mxu0 0.0
        %2763 = vmatprep.subr.mxu0 0.0
        %2764 = vmatpush1.msra.mxu0 0.0
        %2765 = vmatprep.subr.mxu0 0.0
        %2766 = vmatpush1.msra.mxu0 0.0
        %2767 = vmatprep.subr.mxu0 0.0
        %2768 = vmatpush1.msra.mxu0 0.0
        %2769 = vmatprep.subr.mxu0 0.0
        %2770 = vmatpush1.msra.mxu0 0.0
        %2771 = vmatprep.subr.mxu0 0.0
        %2772 = vmatpush1.msra.mxu0 0.0
        %2773 = vmatprep.subr.mxu0 0.0
        %2774 = vmatpush1.msra.mxu0 0.0
        %2775 = vmatprep.subr.mxu0 0.0
        %2776 = vmatpush1.msra.mxu0 0.0
        %2777 = vmatprep.mubr.f32.mxu0 0.0
        %2778 = vmatmul.mubr.f32.gmra.mrb[0].mxu0 %v2707
        %v2779 = vpop.f32.mrb[0].mxu0
        %v2780 = vadd.f32 0.0, %v2779
        %v2781 = vpop.f32.mrb[0].mxu0
        %2782 = vdwg.mxu0
        %v2784 = vsel %vm2705, %v2701, 0
        %v2787 = vsel %vm2709, %v2522, 0
        %2789 = vmatprep.subr.mxu0 0.0
        %2790 = vmatpush1.msra.mxu0 %v2787
        %2791 = vmatprep.subr.mxu0 0.0
        %2792 = vmatpush1.msra.mxu0 0.0
        %2793 = vmatprep.subr.mxu0 0.0
        %2794 = vmatpush1.msra.mxu0 0.0
        %2795 = vmatprep.subr.mxu0 0.0
        %2796 = vmatpush1.msra.mxu0 0.0
        %2797 = vmatprep.subr.mxu0 0.0
        %2798 = vmatpush1.msra.mxu0 0.0
        %2799 = vmatprep.subr.mxu0 0.0
        %2800 = vmatpush1.msra.mxu0 0.0
        %2801 = vmatprep.subr.mxu0 0.0
        %2802 = vmatpush1.msra.mxu0 0.0
        %2803 = vmatprep.subr.mxu0 0.0
        %2804 = vmatpush1.msra.mxu0 0.0
        %2805 = vmatprep.subr.mxu0 0.0
        %2806 = vmatpush1.msra.mxu0 0.0
        %2807 = vmatprep.subr.mxu0 0.0
        %2808 = vmatpush1.msra.mxu0 0.0
        %2809 = vmatprep.subr.mxu0 0.0
        %2810 = vmatpush1.msra.mxu0 0.0
        %2811 = vmatprep.subr.mxu0 0.0
        %2812 = vmatpush1.msra.mxu0 0.0
        %2813 = vmatprep.subr.mxu0 0.0
        %2814 = vmatpush1.msra.mxu0 0.0
        %2815 = vmatprep.subr.mxu0 0.0
        %2816 = vmatpush1.msra.mxu0 0.0
        %2817 = vmatprep.subr.mxu0 0.0
        %2818 = vmatpush1.msra.mxu0 0.0
        %2819 = vmatprep.subr.mxu0 0.0
        %2820 = vmatpush1.msra.mxu0 0.0
        %2821 = vmatprep.subr.mxu0 0.0
        %2822 = vmatpush1.msra.mxu0 0.0
        %2823 = vmatprep.subr.mxu0 0.0
        %2824 = vmatpush1.msra.mxu0 0.0
        %2825 = vmatprep.subr.mxu0 0.0
        %2826 = vmatpush1.msra.mxu0 0.0
        %2827 = vmatprep.subr.mxu0 0.0
        %2828 = vmatpush1.msra.mxu0 0.0
        %2829 = vmatprep.subr.mxu0 0.0
        %2830 = vmatpush1.msra.mxu0 0.0
        %2831 = vmatprep.subr.mxu0 0.0
        %2832 = vmatpush1.msra.mxu0 0.0
        %2833 = vmatprep.subr.mxu0 0.0
        %2834 = vmatpush1.msra.mxu0 0.0
        %2835 = vmatprep.subr.mxu0 0.0
        %2836 = vmatpush1.msra.mxu0 0.0
        %2837 = vmatprep.subr.mxu0 0.0
        %2838 = vmatpush1.msra.mxu0 0.0
        %2839 = vmatprep.subr.mxu0 0.0
        %2840 = vmatpush1.msra.mxu0 0.0
        %2841 = vmatprep.subr.mxu0 0.0
        %2842 = vmatpush1.msra.mxu0 0.0
        %2843 = vmatprep.subr.mxu0 0.0
        %2844 = vmatpush1.msra.mxu0 0.0
        %2845 = vmatprep.subr.mxu0 0.0
        %2846 = vmatpush1.msra.mxu0 0.0
        %2847 = vmatprep.subr.mxu0 0.0
        %2848 = vmatpush1.msra.mxu0 0.0
        %2849 = vmatprep.subr.mxu0 0.0
        %2850 = vmatpush1.msra.mxu0 0.0
        %2851 = vmatprep.subr.mxu0 0.0
        %2852 = vmatpush1.msra.mxu0 0.0
        %2853 = vmatprep.mubr.f32.mxu0 0.0
        %2854 = vmatmul.mubr.f32.gmra.mrb[0].mxu0 %v2784
        %v2855 = vpop.f32.mrb[0].mxu0
        %v2856 = vadd.f32 %v2780, %v2855
        %v2857 = vpop.f32.mrb[0].mxu0
        %2858 = vdwg.mxu0
        %2859 = vmatprep.subr.mxu0 0.0
        %2860 = vmatpush1.msra.mxu0 %v2856
        %2861 = vmatprep.subr.mxu0 0.0
        %2862 = vmatpush1.msra.mxu0 0.0
        %2863 = vmatprep.subr.mxu0 0.0
        %2864 = vmatpush1.msra.mxu0 0.0
        %2865 = vmatprep.subr.mxu0 0.0
        %2866 = vmatpush1.msra.mxu0 0.0
        %2867 = vmatprep.subr.mxu0 0.0
        %2868 = vmatpush1.msra.mxu0 0.0
        %2869 = vmatprep.subr.mxu0 0.0
        %2870 = vmatpush1.msra.mxu0 0.0
        %2871 = vmatprep.subr.mxu0 0.0
        %2872 = vmatpush1.msra.mxu0 0.0
        %2873 = vmatprep.subr.mxu0 0.0
        %2874 = vmatpush1.msra.mxu0 0.0
        %2875 = vmatprep.subr.mxu0 0.0
        %2876 = vmatpush1.msra.mxu0 0.0
        %2877 = vmatprep.subr.mxu0 0.0
        %2878 = vmatpush1.msra.mxu0 0.0
        %2879 = vmatprep.subr.mxu0 0.0
        %2880 = vmatpush1.msra.mxu0 0.0
        %2881 = vmatprep.subr.mxu0 0.0
        %2882 = vmatpush1.msra.mxu0 0.0
        %2883 = vmatprep.subr.mxu0 0.0
        %2884 = vmatpush1.msra.mxu0 0.0
        %2885 = vmatprep.subr.mxu0 0.0
        %2886 = vmatpush1.msra.mxu0 0.0
        %2887 = vmatprep.subr.mxu0 0.0
        %2888 = vmatpush1.msra.mxu0 0.0
        %2889 = vmatprep.subr.mxu0 0.0
        %2890 = vmatpush1.msra.mxu0 0.0
        %2891 = vmatprep.subr.mxu0 0.0
        %2892 = vmatpush1.msra.mxu0 0.0
        %2893 = vmatprep.subr.mxu0 0.0
        %2894 = vmatpush1.msra.mxu0 0.0
        %2895 = vmatprep.subr.mxu0 0.0
        %2896 = vmatpush1.msra.mxu0 0.0
        %2897 = vmatprep.subr.mxu0 0.0
        %2898 = vmatpush1.msra.mxu0 0.0
        %2899 = vmatprep.subr.mxu0 0.0
        %2900 = vmatpush1.msra.mxu0 0.0
        %2901 = vmatprep.subr.mxu0 0.0
        %2902 = vmatpush1.msra.mxu0 0.0
        %2903 = vmatprep.subr.mxu0 0.0
        %2904 = vmatpush1.msra.mxu0 0.0
        %2905 = vmatprep.subr.mxu0 0.0
        %2906 = vmatpush1.msra.mxu0 0.0
        %2907 = vmatprep.subr.mxu0 0.0
        %2908 = vmatpush1.msra.mxu0 0.0
        %2909 = vmatprep.subr.mxu0 0.0
        %2910 = vmatpush1.msra.mxu0 0.0
        %2911 = vmatprep.subr.mxu0 0.0
        %2912 = vmatpush1.msra.mxu0 0.0
        %2913 = vmatprep.subr.mxu0 0.0
        %2914 = vmatpush1.msra.mxu0 0.0
        %2915 = vmatprep.subr.mxu0 0.0
        %2916 = vmatpush1.msra.mxu0 0.0
        %2917 = vmatprep.subr.mxu0 0.0
        %2918 = vmatpush1.msra.mxu0 0.0
        %2919 = vmatprep.subr.mxu0 0.0
        %2920 = vmatpush1.msra.mxu0 0.0
        %2921 = vmatprep.subr.mxu0 0.0
        %2922 = vmatpush1.msra.mxu0 0.0
        %2923 = vmatprep.mubr.f32.mxu0 0.0
        %2924 = vmatmul.mubr.f32.gmra.mrb[0].mxu0 %v1388
        %v2925 = vpop.f32.mrb[0].mxu0
        %v2926 = vadd.f32 0.0, %v2925
        %v2927 = vpop.f32.mrb[0].mxu0
        %2928 = vdwg.mxu0
        %v2929 = vld [vmem:[%s11] sm:$0xff]
        %v2930 = vld [vmem:[%s11 + $0x8] sm:$0xff]
        %v2931 = vld [vmem:[%s11 + $0x10] sm:$0xff]
        %v2932 = vld [vmem:[%s11 + $0x18] sm:$0xff]
        %v2933 = vld [vmem:[%s11 + $0x20] sm:$0xff]
        %v2934 = vld [vmem:[%s11 + $0x28] sm:$0xff]
        %v2935 = vld [vmem:[%s11 + $0x30] sm:$0xff]
        %v2936 = vld [vmem:[%s11 + $0x38] sm:$0xff]
        %v2937 = vld [vmem:[%s11 + $0x40] sm:$0xff]
        %v2938 = vld [vmem:[%s11 + $0x48] sm:$0xff]
        %v2939 = vld [vmem:[%s11 + $0x50] sm:$0xff]
        %v2940 = vld [vmem:[%s11 + $0x58] sm:$0xff]
        %v2941 = vld [vmem:[%s11 + $0x60] sm:$0xff]
        %v2942 = vld [vmem:[%s11 + $0x68] sm:$0xff]
        %v2943 = vld [vmem:[%s11 + $0x70] sm:$0xff]
        %v2944 = vld [vmem:[%s11 + $0x78] sm:$0xff]
        %v2945 = vld [vmem:[%s12] sm:$0x1]
        %v2947 = vlaneseq
        %v2948 = vshrl.u32 %v2947, 7
        %v2949 = vsub.s32 0, %v2948
        %v2950 = vrot.slane %v2945, %v2949
        %2952 = vmatprep.subr.mxu0 0.0
        %2953 = vmatpush1.msra.mxu0 %v2929
        %2954 = vmatprep.subr.mxu0 0.0
        %2955 = vmatpush1.msra.mxu0 %v2930
        %2956 = vmatprep.subr.mxu0 0.0
        %2957 = vmatpush1.msra.mxu0 %v2931
        %2958 = vmatprep.subr.mxu0 0.0
        %2959 = vmatpush1.msra.mxu0 %v2932
        %2960 = vmatprep.subr.mxu0 0.0
        %2961 = vmatpush1.msra.mxu0 %v2933
        %2962 = vmatprep.subr.mxu0 0.0
        %2963 = vmatpush1.msra.mxu0 %v2934
        %2964 = vmatprep.subr.mxu0 0.0
        %2965 = vmatpush1.msra.mxu0 %v2935
        %2966 = vmatprep.subr.mxu0 0.0
        %2967 = vmatpush1.msra.mxu0 %v2936
        %2968 = vmatprep.subr.mxu0 0.0
        %2969 = vmatpush1.msra.mxu0 %v2937
        %2970 = vmatprep.subr.mxu0 0.0
        %2971 = vmatpush1.msra.mxu0 %v2938
        %2972 = vmatprep.subr.mxu0 0.0
        %2973 = vmatpush1.msra.mxu0 %v2939
        %2974 = vmatprep.subr.mxu0 0.0
        %2975 = vmatpush1.msra.mxu0 %v2940
        %2976 = vmatprep.subr.mxu0 0.0
        %2977 = vmatpush1.msra.mxu0 %v2941
        %2978 = vmatprep.subr.mxu0 0.0
        %2979 = vmatpush1.msra.mxu0 %v2942
        %2980 = vmatprep.subr.mxu0 0.0
        %2981 = vmatpush1.msra.mxu0 %v2943
        %2982 = vmatprep.subr.mxu0 0.0
        %2983 = vmatpush1.msra.mxu0 %v2944
        %2984 = vmatprep.subr.mxu0 0.0
        %2985 = vmatpush1.msra.mxu0 0.0
        %2986 = vmatprep.subr.mxu0 0.0
        %2987 = vmatpush1.msra.mxu0 0.0
        %2988 = vmatprep.subr.mxu0 0.0
        %2989 = vmatpush1.msra.mxu0 0.0
        %2990 = vmatprep.subr.mxu0 0.0
        %2991 = vmatpush1.msra.mxu0 0.0
        %2992 = vmatprep.subr.mxu0 0.0
        %2993 = vmatpush1.msra.mxu0 0.0
        %2994 = vmatprep.subr.mxu0 0.0
        %2995 = vmatpush1.msra.mxu0 0.0
        %2996 = vmatprep.subr.mxu0 0.0
        %2997 = vmatpush1.msra.mxu0 0.0
        %2998 = vmatprep.subr.mxu0 0.0
        %2999 = vmatpush1.msra.mxu0 0.0
        %3000 = vmatprep.subr.mxu0 0.0
        %3001 = vmatpush1.msra.mxu0 0.0
        %3002 = vmatprep.subr.mxu0 0.0
        %3003 = vmatpush1.msra.mxu0 0.0
        %3004 = vmatprep.subr.mxu0 0.0
        %3005 = vmatpush1.msra.mxu0 0.0
        %3006 = vmatprep.subr.mxu0 0.0
        %3007 = vmatpush1.msra.mxu0 0.0
        %3008 = vmatprep.subr.mxu0 0.0
        %3009 = vmatpush1.msra.mxu0 0.0
        %3010 = vmatprep.subr.mxu0 0.0
        %3011 = vmatpush1.msra.mxu0 0.0
        %3012 = vmatprep.subr.mxu0 0.0
        %3013 = vmatpush1.msra.mxu0 0.0
        %3014 = vmatprep.subr.mxu0 0.0
        %3015 = vmatpush1.msra.mxu0 0.0
        %3016 = vmatprep.mubr.f32.mxu0 0.0
        %3017 = vmatmul.mubr.f32.gmra.mrb[0].mxu0 %v2856
        %v3018 = vpop.f32.mrb[0].mxu0
        %v3019 = vadd.f32 %v2950, %v3018
        %v3020 = vpop.f32.mrb[0].mxu0
        %3021 = vdwg.mxu0
        %s3022 = scalar_lea.vmem %s11, 128
        %v3023 = vld [vmem:[%s3022] sm:$0xff]
        %v3024 = vld [vmem:[%s3022 + $0x8] sm:$0xff]
        %v3025 = vld [vmem:[%s3022 + $0x10] sm:$0xff]
        %v3026 = vld [vmem:[%s3022 + $0x18] sm:$0xff]
        %v3027 = vld [vmem:[%s3022 + $0x20] sm:$0xff]
        %v3028 = vld [vmem:[%s3022 + $0x28] sm:$0xff]
        %v3029 = vld [vmem:[%s3022 + $0x30] sm:$0xff]
        %v3030 = vld [vmem:[%s3022 + $0x38] sm:$0xff]
        %v3031 = vld [vmem:[%s3022 + $0x40] sm:$0xff]
        %v3032 = vld [vmem:[%s3022 + $0x48] sm:$0xff]
        %v3033 = vld [vmem:[%s3022 + $0x50] sm:$0xff]
        %v3034 = vld [vmem:[%s3022 + $0x58] sm:$0xff]
        %v3035 = vld [vmem:[%s3022 + $0x60] sm:$0xff]
        %v3036 = vld [vmem:[%s3022 + $0x68] sm:$0xff]
        %v3037 = vld [vmem:[%s3022 + $0x70] sm:$0xff]
        %v3038 = vld [vmem:[%s3022 + $0x78] sm:$0xff]
        %s3039 = scalar_lea.vmem %s11, 256
        %v3040 = vld [vmem:[%s3039] sm:$0xff]
        %v3041 = vld [vmem:[%s3039 + $0x8] sm:$0xff]
        %v3042 = vld [vmem:[%s3039 + $0x10] sm:$0xff]
        %v3043 = vld [vmem:[%s3039 + $0x18] sm:$0xff]
        %v3044 = vld [vmem:[%s3039 + $0x20] sm:$0xff]
        %v3045 = vld [vmem:[%s3039 + $0x28] sm:$0xff]
        %v3046 = vld [vmem:[%s3039 + $0x30] sm:$0xff]
        %v3047 = vld [vmem:[%s3039 + $0x38] sm:$0xff]
        %v3048 = vld [vmem:[%s3039 + $0x40] sm:$0xff]
        %v3049 = vld [vmem:[%s3039 + $0x48] sm:$0xff]
        %v3050 = vld [vmem:[%s3039 + $0x50] sm:$0xff]
        %v3051 = vld [vmem:[%s3039 + $0x58] sm:$0xff]
        %v3052 = vld [vmem:[%s3039 + $0x60] sm:$0xff]
        %v3053 = vld [vmem:[%s3039 + $0x68] sm:$0xff]
        %v3054 = vld [vmem:[%s3039 + $0x70] sm:$0xff]
        %v3055 = vld [vmem:[%s3039 + $0x78] sm:$0xff]
        %3056 = vmatprep.subr.mxu0 0.0
        %3057 = vmatpush1.msra.mxu0 %v3040
        %3058 = vmatprep.subr.mxu0 0.0
        %3059 = vmatpush1.msra.mxu0 %v3041
        %3060 = vmatprep.subr.mxu0 0.0
        %3061 = vmatpush1.msra.mxu0 %v3042
        %3062 = vmatprep.subr.mxu0 0.0
        %3063 = vmatpush1.msra.mxu0 %v3043
        %3064 = vmatprep.subr.mxu0 0.0
        %3065 = vmatpush1.msra.mxu0 %v3044
        %3066 = vmatprep.subr.mxu0 0.0
        %3067 = vmatpush1.msra.mxu0 %v3045
        %3068 = vmatprep.subr.mxu0 0.0
        %3069 = vmatpush1.msra.mxu0 %v3046
        %3070 = vmatprep.subr.mxu0 0.0
        %3071 = vmatpush1.msra.mxu0 %v3047
        %3072 = vmatprep.subr.mxu0 0.0
        %3073 = vmatpush1.msra.mxu0 %v3048
        %3074 = vmatprep.subr.mxu0 0.0
        %3075 = vmatpush1.msra.mxu0 %v3049
        %3076 = vmatprep.subr.mxu0 0.0
        %3077 = vmatpush1.msra.mxu0 %v3050
        %3078 = vmatprep.subr.mxu0 0.0
        %3079 = vmatpush1.msra.mxu0 %v3051
        %3080 = vmatprep.subr.mxu0 0.0
        %3081 = vmatpush1.msra.mxu0 %v3052
        %3082 = vmatprep.subr.mxu0 0.0
        %3083 = vmatpush1.msra.mxu0 %v3053
        %3084 = vmatprep.subr.mxu0 0.0
        %3085 = vmatpush1.msra.mxu0 %v3054
        %3086 = vmatprep.subr.mxu0 0.0
        %3087 = vmatpush1.msra.mxu0 %v3055
        %3088 = vmatprep.subr.mxu0 0.0
        %3089 = vmatpush1.msra.mxu0 0.0
        %3090 = vmatprep.subr.mxu0 0.0
        %3091 = vmatpush1.msra.mxu0 0.0
        %3092 = vmatprep.subr.mxu0 0.0
        %3093 = vmatpush1.msra.mxu0 0.0
        %3094 = vmatprep.subr.mxu0 0.0
        %3095 = vmatpush1.msra.mxu0 0.0
        %3096 = vmatprep.subr.mxu0 0.0
        %3097 = vmatpush1.msra.mxu0 0.0
        %3098 = vmatprep.subr.mxu0 0.0
        %3099 = vmatpush1.msra.mxu0 0.0
        %3100 = vmatprep.subr.mxu0 0.0
        %3101 = vmatpush1.msra.mxu0 0.0
        %3102 = vmatprep.subr.mxu0 0.0
        %3103 = vmatpush1.msra.mxu0 0.0
        %3104 = vmatprep.subr.mxu0 0.0
        %3105 = vmatpush1.msra.mxu0 0.0
        %3106 = vmatprep.subr.mxu0 0.0
        %3107 = vmatpush1.msra.mxu0 0.0
        %3108 = vmatprep.subr.mxu0 0.0
        %3109 = vmatpush1.msra.mxu0 0.0
        %3110 = vmatprep.subr.mxu0 0.0
        %3111 = vmatpush1.msra.mxu0 0.0
        %3112 = vmatprep.subr.mxu0 0.0
        %3113 = vmatpush1.msra.mxu0 0.0
        %3114 = vmatprep.subr.mxu0 0.0
        %3115 = vmatpush1.msra.mxu0 0.0
        %3116 = vmatprep.subr.mxu0 0.0
        %3117 = vmatpush1.msra.mxu0 0.0
        %3118 = vmatprep.subr.mxu0 0.0
        %3119 = vmatpush1.msra.mxu0 0.0
        %3120 = vmatprep.mubr.f32.mxu0 0.0
        %3121 = vmatmul.mubr.f32.gmra.mrb[0].mxu0 %v2856
        %v3122 = vpop.f32.mrb[0].mxu0
        %v3123 = vadd.f32 0.0, %v3122
        %v3124 = vpop.f32.mrb[0].mxu0
        %3125 = vdwg.mxu0
        %3126 = vmatprep.subr.mxu0 0.0
        %3127 = vmatpush1.msra.mxu0 %v3023
        %3128 = vmatprep.subr.mxu0 0.0
        %3129 = vmatpush1.msra.mxu0 %v3024
        %3130 = vmatprep.subr.mxu0 0.0
        %3131 = vmatpush1.msra.mxu0 %v3025
        %3132 = vmatprep.subr.mxu0 0.0
        %3133 = vmatpush1.msra.mxu0 %v3026
        %3134 = vmatprep.subr.mxu0 0.0
        %3135 = vmatpush1.msra.mxu0 %v3027
        %3136 = vmatprep.subr.mxu0 0.0
        %3137 = vmatpush1.msra.mxu0 %v3028
        %3138 = vmatprep.subr.mxu0 0.0
        %3139 = vmatpush1.msra.mxu0 %v3029
        %3140 = vmatprep.subr.mxu0 0.0
        %3141 = vmatpush1.msra.mxu0 %v3030
        %3142 = vmatprep.subr.mxu0 0.0
        %3143 = vmatpush1.msra.mxu0 %v3031
        %3144 = vmatprep.subr.mxu0 0.0
        %3145 = vmatpush1.msra.mxu0 %v3032
        %3146 = vmatprep.subr.mxu0 0.0
        %3147 = vmatpush1.msra.mxu0 %v3033
        %3148 = vmatprep.subr.mxu0 0.0
        %3149 = vmatpush1.msra.mxu0 %v3034
        %3150 = vmatprep.subr.mxu0 0.0
        %3151 = vmatpush1.msra.mxu0 %v3035
        %3152 = vmatprep.subr.mxu0 0.0
        %3153 = vmatpush1.msra.mxu0 %v3036
        %3154 = vmatprep.subr.mxu0 0.0
        %3155 = vmatpush1.msra.mxu0 %v3037
        %3156 = vmatprep.subr.mxu0 0.0
        %3157 = vmatpush1.msra.mxu0 %v3038
        %3158 = vmatprep.subr.mxu0 0.0
        %3159 = vmatpush1.msra.mxu0 0.0
        %3160 = vmatprep.subr.mxu0 0.0
        %3161 = vmatpush1.msra.mxu0 0.0
        %3162 = vmatprep.subr.mxu0 0.0
        %3163 = vmatpush1.msra.mxu0 0.0
        %3164 = vmatprep.subr.mxu0 0.0
        %3165 = vmatpush1.msra.mxu0 0.0
        %3166 = vmatprep.subr.mxu0 0.0
        %3167 = vmatpush1.msra.mxu0 0.0
        %3168 = vmatprep.subr.mxu0 0.0
        %3169 = vmatpush1.msra.mxu0 0.0
        %3170 = vmatprep.subr.mxu0 0.0
        %3171 = vmatpush1.msra.mxu0 0.0
        %3172 = vmatprep.subr.mxu0 0.0
        %3173 = vmatpush1.msra.mxu0 0.0
        %3174 = vmatprep.subr.mxu0 0.0
        %3175 = vmatpush1.msra.mxu0 0.0
        %3176 = vmatprep.subr.mxu0 0.0
        %3177 = vmatpush1.msra.mxu0 0.0
        %3178 = vmatprep.subr.mxu0 0.0
        %3179 = vmatpush1.msra.mxu0 0.0
        %3180 = vmatprep.subr.mxu0 0.0
        %3181 = vmatpush1.msra.mxu0 0.0
        %3182 = vmatprep.subr.mxu0 0.0
        %3183 = vmatpush1.msra.mxu0 0.0
        %3184 = vmatprep.subr.mxu0 0.0
        %3185 = vmatpush1.msra.mxu0 0.0
        %3186 = vmatprep.subr.mxu0 0.0
        %3187 = vmatpush1.msra.mxu0 0.0
        %3188 = vmatprep.subr.mxu0 0.0
        %3189 = vmatpush1.msra.mxu0 0.0
        %3190 = vmatprep.mubr.f32.mxu0 0.0
        %3191 = vmatmul.mubr.f32.gmra.mrb[0].mxu0 %v2926
        %v3192 = vpop.f32.mrb[0].mxu0
        %v3193 = vadd.f32 %v3123, %v3192
        %v3194 = vpop.f32.mrb[0].mxu0
        %3195 = vdwg.mxu0
        %v3196 = vadd.f32 %v3193, %v2950
        %v3197 = vadd.s32 %v829, 8
        %vm3198 = vcmp.eq.s32.totalorder %v3197, %v2699
        %v3199 = vsel %vm3198, 1.0, 0.0
        %vm3200 = vcmp.eq.s32.totalorder %v3197, %v2702
        %v3201 = vsel %vm3200, 1.0, 0.0
        %v3202 = vsel %vm1312, %v2704, 0
        %v3205 = vsel %vm1312, %v3201, 0
        %3207 = vmatprep.subr.mxu0 0.0
        %3208 = vmatpush1.msra.mxu0 %v3196
        %3209 = vmatprep.subr.mxu0 0.0
        %3210 = vmatpush1.msra.mxu0 0.0
        %3211 = vmatprep.subr.mxu0 0.0
        %3212 = vmatpush1.msra.mxu0 0.0
        %3213 = vmatprep.subr.mxu0 0.0
        %3214 = vmatpush1.msra.mxu0 0.0
        %3215 = vmatprep.subr.mxu0 0.0
        %3216 = vmatpush1.msra.mxu0 0.0
        %3217 = vmatprep.subr.mxu0 0.0
        %3218 = vmatpush1.msra.mxu0 0.0
        %3219 = vmatprep.subr.mxu0 0.0
        %3220 = vmatpush1.msra.mxu0 0.0
        %3221 = vmatprep.subr.mxu0 0.0
        %3222 = vmatpush1.msra.mxu0 0.0
        %3223 = vmatprep.subr.mxu0 0.0
        %3224 = vmatpush1.msra.mxu0 0.0
        %3225 = vmatprep.subr.mxu0 0.0
        %3226 = vmatpush1.msra.mxu0 0.0
        %3227 = vmatprep.subr.mxu0 0.0
        %3228 = vmatpush1.msra.mxu0 0.0
        %3229 = vmatprep.subr.mxu0 0.0
        %3230 = vmatpush1.msra.mxu0 0.0
        %3231 = vmatprep.subr.mxu0 0.0
        %3232 = vmatpush1.msra.mxu0 0.0
        %3233 = vmatprep.subr.mxu0 0.0
        %3234 = vmatpush1.msra.mxu0 0.0
        %3235 = vmatprep.subr.mxu0 0.0
        %3236 = vmatpush1.msra.mxu0 0.0
        %3237 = vmatprep.subr.mxu0 0.0
        %3238 = vmatpush1.msra.mxu0 0.0
        %3239 = vmatprep.subr.mxu0 0.0
        %3240 = vmatpush1.msra.mxu0 0.0
        %3241 = vmatprep.subr.mxu0 0.0
        %3242 = vmatpush1.msra.mxu0 0.0
        %3243 = vmatprep.subr.mxu0 0.0
        %3244 = vmatpush1.msra.mxu0 0.0
        %3245 = vmatprep.subr.mxu0 0.0
        %3246 = vmatpush1.msra.mxu0 0.0
        %3247 = vmatprep.subr.mxu0 0.0
        %3248 = vmatpush1.msra.mxu0 0.0
        %3249 = vmatprep.subr.mxu0 0.0
        %3250 = vmatpush1.msra.mxu0 0.0
        %3251 = vmatprep.subr.mxu0 0.0
        %3252 = vmatpush1.msra.mxu0 0.0
        %3253 = vmatprep.subr.mxu0 0.0
        %3254 = vmatpush1.msra.mxu0 0.0
        %3255 = vmatprep.subr.mxu0 0.0
        %3256 = vmatpush1.msra.mxu0 0.0
        %3257 = vmatprep.subr.mxu0 0.0
        %3258 = vmatpush1.msra.mxu0 0.0
        %3259 = vmatprep.subr.mxu0 0.0
        %3260 = vmatpush1.msra.mxu0 0.0
        %3261 = vmatprep.subr.mxu0 0.0
        %3262 = vmatpush1.msra.mxu0 0.0
        %3263 = vmatprep.subr.mxu0 0.0
        %3264 = vmatpush1.msra.mxu0 0.0
        %3265 = vmatprep.subr.mxu0 0.0
        %3266 = vmatpush1.msra.mxu0 0.0
        %3267 = vmatprep.subr.mxu0 0.0
        %3268 = vmatpush1.msra.mxu0 0.0
        %3269 = vmatprep.subr.mxu0 0.0
        %3270 = vmatpush1.msra.mxu0 0.0
        %3271 = vmatprep.mubr.f32.mxu0 0.0
        %3272 = vmatmul.mubr.f32.gmra.mrb[0].mxu0 %v3202
        %v3273 = vpop.f32.mrb[0].mxu0
        %v3274 = vadd.f32 0.0, %v3273
        %v3275 = vpop.f32.mrb[0].mxu0
        %3276 = vmatprep.mubr.f32.mxu0 0.0
        %3277 = vmatmul.mubr.f32.gmra.mrb[0].mxu0 %v3205
        %v3278 = vpop.f32.mrb[0].mxu0
        %v3279 = vadd.f32 0.0, %v3278
        %v3280 = vpop.f32.mrb[0].mxu0
        %3281 = vdwg.mxu0
        %v3282 = vsel %vm1312, %v2701, 0
        %v3285 = vsel %vm1312, %v3199, 0
        %3287 = vmatprep.subr.mxu0 0.0
        %3288 = vmatpush1.msra.mxu0 %v3019
        %3289 = vmatprep.subr.mxu0 0.0
        %3290 = vmatpush1.msra.mxu0 0.0
        %3291 = vmatprep.subr.mxu0 0.0
        %3292 = vmatpush1.msra.mxu0 0.0
        %3293 = vmatprep.subr.mxu0 0.0
        %3294 = vmatpush1.msra.mxu0 0.0
        %3295 = vmatprep.subr.mxu0 0.0
        %3296 = vmatpush1.msra.mxu0 0.0
        %3297 = vmatprep.subr.mxu0 0.0
        %3298 = vmatpush1.msra.mxu0 0.0
        %3299 = vmatprep.subr.mxu0 0.0
        %3300 = vmatpush1.msra.mxu0 0.0
        %3301 = vmatprep.subr.mxu0 0.0
        %3302 = vmatpush1.msra.mxu0 0.0
        %3303 = vmatprep.subr.mxu0 0.0
        %3304 = vmatpush1.msra.mxu0 0.0
        %3305 = vmatprep.subr.mxu0 0.0
        %3306 = vmatpush1.msra.mxu0 0.0
        %3307 = vmatprep.subr.mxu0 0.0
        %3308 = vmatpush1.msra.mxu0 0.0
        %3309 = vmatprep.subr.mxu0 0.0
        %3310 = vmatpush1.msra.mxu0 0.0
        %3311 = vmatprep.subr.mxu0 0.0
        %3312 = vmatpush1.msra.mxu0 0.0
        %3313 = vmatprep.subr.mxu0 0.0
        %3314 = vmatpush1.msra.mxu0 0.0
        %3315 = vmatprep.subr.mxu0 0.0
        %3316 = vmatpush1.msra.mxu0 0.0
        %3317 = vmatprep.subr.mxu0 0.0
        %3318 = vmatpush1.msra.mxu0 0.0
        %3319 = vmatprep.subr.mxu0 0.0
        %3320 = vmatpush1.msra.mxu0 0.0
        %3321 = vmatprep.subr.mxu0 0.0
        %3322 = vmatpush1.msra.mxu0 0.0
        %3323 = vmatprep.subr.mxu0 0.0
        %3324 = vmatpush1.msra.mxu0 0.0
        %3325 = vmatprep.subr.mxu0 0.0
        %3326 = vmatpush1.msra.mxu0 0.0
        %3327 = vmatprep.subr.mxu0 0.0
        %3328 = vmatpush1.msra.mxu0 0.0
        %3329 = vmatprep.subr.mxu0 0.0
        %3330 = vmatpush1.msra.mxu0 0.0
        %3331 = vmatprep.subr.mxu0 0.0
        %3332 = vmatpush1.msra.mxu0 0.0
        %3333 = vmatprep.subr.mxu0 0.0
        %3334 = vmatpush1.msra.mxu0 0.0
        %3335 = vmatprep.subr.mxu0 0.0
        %3336 = vmatpush1.msra.mxu0 0.0
        %3337 = vmatprep.subr.mxu0 0.0
        %3338 = vmatpush1.msra.mxu0 0.0
        %3339 = vmatprep.subr.mxu0 0.0
        %3340 = vmatpush1.msra.mxu0 0.0
        %3341 = vmatprep.subr.mxu0 0.0
        %3342 = vmatpush1.msra.mxu0 0.0
        %3343 = vmatprep.subr.mxu0 0.0
        %3344 = vmatpush1.msra.mxu0 0.0
        %3345 = vmatprep.subr.mxu0 0.0
        %3346 = vmatpush1.msra.mxu0 0.0
        %3347 = vmatprep.subr.mxu0 0.0
        %3348 = vmatpush1.msra.mxu0 0.0
        %3349 = vmatprep.subr.mxu0 0.0
        %3350 = vmatpush1.msra.mxu0 0.0
        %3351 = vmatprep.mubr.f32.mxu0 0.0
        %3352 = vmatmul.mubr.f32.gmra.mrb[0].mxu0 %v3282
        %v3353 = vpop.f32.mrb[0].mxu0
        %v3354 = vadd.f32 %v3274, %v3353
        %v3355 = vpop.f32.mrb[0].mxu0
        %3356 = vmatprep.mubr.f32.mxu0 0.0
        %3357 = vmatmul.mubr.f32.gmra.mrb[0].mxu0 %v3285
        %v3358 = vpop.f32.mrb[0].mxu0
        %v3359 = vadd.f32 %v3279, %v3358
        %v3360 = vpop.f32.mrb[0].mxu0
        %3361 = vdwg.mxu0
        %3362 = vst.msk [vmem:[%s505] sm:$0xff] %vm838, %v3354
        %3363 = vst.msk [vmem:[%s505 + $0x8] sm:$0xff] %vm838, %v3359
        %s3364 = sand.u32 %s317, 1
        %s3365 = scalar_lea.sflag [#allocation5], %s3364
        %s3366 = sand.u32 %s317, 1
        %s3367 = smul.addr %s3366, 16
        %s3368 = scalar_lea.vmem [#allocation9], %s3367
        %p3369 = scmp.lt.s32.totalorder %s31, 1
        %s3370 = scalar_select %p3369, %s31, 1
        %s3371 = smul.addr %s3370, 2
        %s3372 = scalar_lea.vmem %s14, %s3371
        // Predicated region
        $region85: #{fwd.1} parent=71 // pred_check
          %p3373 = pneg %p327
        $region86: #{fwd.1} parent=71 // pred_check_branch
          %3375 = sbr.rel (%p3373) target = $region88
        $region87: #{fwd.1} parent=71 // pred_region
          %s3377 = ssub.s32 256, 256
          %3378 = vsyncadd %s3365, %s3377
          %s3379 = smul.addr %s31, 2
          %s3380 = smul.addr %s3379, 128
          %s3381 = scalar_lea.hbm %s13, %s3380
          %s3382 = sshll.u32 %s3368, 4
          %s3383 = int_to_ptr.vmem [resolvable:$true] %s3382
          %3388 = dma.vmem_to_hbm [thread:$0]  %s3383, 256, %s3381, %s3365, 128, 128, 8
        $region88: #{fwd.1} parent=71 // pred_fallthru
          _
        // Predicated region
        $region89: #{fwd.1} parent=71 // pred_check
          %p3389 = pneg %p353
        $region90: #{fwd.1} parent=71 // pred_check_branch
          %3391 = sbr.rel (%p3389) target = $region92
        $region91: #{fwd.1} parent=71 // pred_region
          _
        $region92: #{fwd.1} parent=71 // pred_fallthru
          _
      $region72: #{fwd.1} parent=5 // pred_fallthru
        _
      %p3392 = scmp.le.s32.totalorder 2, %s26
      // Predicated region
      $region93: #{fwd.1} parent=5 // pred_check
        %p3393 = pneg %p3392
      $region94: #{fwd.1} parent=5 // pred_check_branch
        %3395 = sbr.rel (%p3393) target = $region96
      $region95: #{fwd.1} parent=5 // pred_region
        %s3396 = ssub.s32 %s26, 2
        // Predicated region
        $region97: #{fwd.1} parent=95 // pred_check
          %p3397 = pneg %p333
        $region98: #{fwd.1} parent=95 // pred_check_branch
          %3399 = sbr.rel (%p3397) target = $region100
        $region99: #{fwd.1} parent=95 // pred_region
          %s3400 = sand.u32 %s318, 1
          %s3401 = scalar_lea.sflag [#allocation5], %s3400
          %s3402 = sand.u32 %s318, 1
          %s3403 = smul.addr %s3402, 16
          %s3404 = scalar_lea.vmem [#allocation9], %s3403
          %3405 = dma.done %s3401, 256
        $region100: #{fwd.1} parent=95 // pred_fallthru
          _
        // Predicated region
        $region101: #{fwd.1} parent=95 // pred_check
          %p3406 = pneg %p359
        $region102: #{fwd.1} parent=95 // pred_check_branch
          %3408 = sbr.rel (%p3406) target = $region104
        $region103: #{fwd.1} parent=95 // pred_region
          %p3409 = scmp.lt.s32.totalorder %s32, 1
          %s3410 = scalar_select %p3409, %s32, 1
          %s3411 = smul.addr %s3410, 2
          %s3412 = scalar_lea.vmem %s14, %s3411
        $region104: #{fwd.1} parent=95 // pred_fallthru
          _
      $region96: #{fwd.1} parent=5 // pred_fallthru
        _
    $region6: #{fwd.1} parent=1 // loop_footer
      %s30 = sadd.s32 1, %s26
    $region7: #{fwd.1} parent=1 // loop_footer_branch
      %25 = sbr.rel target = $region3
    $region8: #{fwd.1} parent=1 // loop_exit
      _
    %3413 = vsyncpa [#allocation4], 1
    %s3414 = scalar_lea.sflag [#allocation4], 1
    %3415 = vsyncpa %s3414, 1
    %3416 = vsyncpa [#allocation7], 1
    %3417 = vsyncpa [#allocation5], 1
    %s3418 = scalar_lea.sflag [#allocation5], 1
    %3419 = vsyncpa %s3418, 1

</llo_original>
